<compile_context>
chip_gen: v7x
topology: tpu7x:2x2x1
jax: 0.10.0
libtpu: 0.0.40
codegen_flags: <defaults>
</compile_context>

<pallas_src>
import functools

import jax
import jax.numpy as jnp
from jax.experimental import pallas as pl
from jax.experimental.pallas import tpu as pltpu


# -----------------------------------------------------------------------------
# Fused kernel: embedding -> conv -> maxpool -> bi-LSTM -> fc   (grid over batch blocks)
# -----------------------------------------------------------------------------
def _fused_encoder_kernel(lens_ref,      # SMEM (B,) int32   pooled valid lengths (scalar prefetch)
                          seq_ref,       # (bb, L, 1) int32  token ids of this batch block
                          table_ref,     # (V, H)  f32       embedding table
                          wconv_ref,     # (K*H, H) f32      im2col conv weight
                          bconv_ref,     # (1, H)  f32       conv bias
                          wihf_ref,      # (H, 8E) f32       fwd input->gate (spread to combined slots)
                          wihr_ref,      # (H, 8E) f32       rev input->gate (spread to combined slots)
                          whh_ref,       # (2E, 8E) f32      combined hidden->gate (block diagonal)
                          bcomb_ref,     # (1, 8E) f32       combined gate bias
                          wfc_ref,       # (2E, E) f32       final linear weight
                          bfc_ref,       # (1, E)  f32       final linear bias
                          out_ref,       # (bb, 1, E) f32
                          *, ksize, pool, lp, edim):
    bb, L, _ = seq_ref.shape
    V, H = table_ref.shape
    E = edim
    L_out = L - ksize + 1

    table = table_ref[...]
    wconv = wconv_ref[...]
    bconv = bconv_ref[...]
    wihf = wihf_ref[...]
    wihr = wihr_ref[...]
    bcomb = bcomb_ref[...]

    iota_v = jax.lax.broadcasted_iota(jnp.int32, (L, V), 1)          # (L, V)

    # ---- Stage 1 (per batch row): embedding -> im2col conv -> maxpool -> input projections
    pf_rows, pr_rows = [], []
    for r in range(bb):                                              # static unroll (bb small)
        ids = seq_ref[r]                                             # (L, 1) int32
        onehot = (iota_v == ids).astype(jnp.float32)                 # (L, V)
        emb = jnp.dot(onehot, table,
                      preferred_element_type=jnp.float32)            # (L, H)
        # im2col: one 416-deep MXU contraction instead of 13 shallow matmuls + adds
        cols = jnp.concatenate([emb[k:k + L_out, :] for k in range(ksize)], axis=1)  # (L_out, K*H)
        conv = jnp.dot(cols, wconv,
                       preferred_element_type=jnp.float32) + bconv   # (L_out, H)
        # MaxPool1d(kernel=pool, stride=pool)
        wins = [jnp.max(conv[p * pool:(p + 1) * pool, :], axis=0, keepdims=True)
                for p in range(lp)]
        pooled = jnp.concatenate(wins, axis=0)                       # (Lp, H)
        # Input->gate projections hoisted off the recurrence critical path.
        pf_rows.append(jnp.dot(pooled, wihf,
                               preferred_element_type=jnp.float32) + bcomb)   # (Lp, 8E)
        pr_rows.append(jnp.dot(pooled, wihr,
                               preferred_element_type=jnp.float32))           # (Lp, 8E)

    # Per-timestep combined input pre-activations: fwd slot gets x[t], rev slot gets x[Lp-1-t].
    gx = []
    for t in range(lp):
        tr = lp - 1 - t
        pf_t = jnp.concatenate([pf_rows[r][t:t + 1, :] for r in range(bb)], axis=0)    # (bb, 8E)
        pr_t = jnp.concatenate([pr_rows[r][tr:tr + 1, :] for r in range(bb)], axis=0)  # (bb, 8E)
        gx.append(pf_t + pr_t)

    # ---- Valid-length vector (bb, 1) built from SMEM scalars
    base = pl.program_id(0) * bb
    row_iota = jax.lax.broadcasted_iota(jnp.int32, (bb, 1), 0)
    lens = jnp.zeros((bb, 1), jnp.int32)
    for r in range(bb):
        lens = jnp.where(row_iota == r, lens_ref[base + r], lens)

    lane2 = jax.lax.broadcasted_iota(jnp.int32, (1, 2 * E), 1)       # state lanes: [fwd | rev]
    lane8 = jax.lax.broadcasted_iota(jnp.int32, (1, 8 * E), 1)
    tanh_lane = (lane8 >= 4 * E) & (lane8 < 6 * E)                   # cell-candidate (g) lanes
    # sigmoid(z) == 0.5 * tanh(0.5 z) + 0.5  -> one tanh pass over the full 8E gate vector
    g_scale = jnp.where(tanh_lane, 1.0, 0.5).astype(jnp.float32)
    g_shift = jnp.where(tanh_lane, 0.0, 0.5).astype(jnp.float32)

    whh = whh_ref[...]

    # ---- Combined forward + reverse recurrence (gate layout [i_f i_r f_f f_r g_f g_r o_f o_r])
    h = jnp.zeros((bb, 2 * E), jnp.float32)                          # [h_fwd | h_rev]
    c = jnp.zeros((bb, 2 * E), jnp.float32)
    for t in range(lp):                                              # static unroll (Lp small)
        tr = lp - 1 - t
        gates = gx[t] + jnp.dot(h, whh, preferred_element_type=jnp.float32)   # (bb, 8E)
        act = jnp.tanh(gates * g_scale) * g_scale + g_shift          # sigmoid/tanh in one pass
        i_g = act[:, 0 * E:2 * E]                                    # [i_f | i_r]
        f_g = act[:, 2 * E:4 * E]
        c_g = act[:, 4 * E:6 * E]
        o_g = act[:, 6 * E:8 * E]
        c_new = f_g * c + i_g * c_g
        h_new = o_g * jnp.tanh(c_new)
        # Packed-sequence mask: fwd lanes valid while t < len, rev lanes while (Lp-1-t) < len.
        thr = jnp.where(lane2 < E, t, tr)                            # (1, 2E) constant per step
        valid = lens > thr                                           # (bb, 2E)
        h = jnp.where(valid, h_new, h)
        c = jnp.where(valid, c_new, c)

    # ---- fc(concat(out_forward, out_reverse)); h is already [h_fwd | h_rev]. Dropout == identity.
    out = jnp.dot(h, wfc_ref[...], preferred_element_type=jnp.float32) + bfc_ref[...]  # (bb, E)
    for r in range(bb):
        out_ref[r] = out[r:r + 1, :].astype(out_ref.dtype)


def lstm_sequence_encoder_forward(seqs, lens_pooled, params, *, ksize, pool, batch_block=None):
    """seqs: [B, L] int32 token ids; lens_pooled: [B] int32 pooled valid lengths -> [B, E]."""
    B, L = seqs.shape
    table = params["embedding"]
    V, H = table.shape
    E = params["w_fc"].shape[1]
    L_out = L - ksize + 1
    Lp = (L_out - pool) // pool + 1

    if batch_block is None:
        # Two batch blocks -> both v7x TensorCores get work; harmless short loop on v5e/v6e.
        batch_block = B // 2 if (B % 2 == 0 and B >= 2) else B
    bb = batch_block
    assert B % bb == 0
    nb = B // bb

    seqs3 = seqs.astype(jnp.int32)[:, :, None]                       # (B, L, 1)
    lens1 = lens_pooled.astype(jnp.int32).reshape(B)                 # scalar-prefetch operand

    kernel = functools.partial(_fused_encoder_kernel, ksize=ksize, pool=pool, lp=Lp, edim=E)

    flops = B * (2 * L * V * H + 2 * L_out * ksize * H * H
                 + 2 * 2 * Lp * H * 8 * E + Lp * 2 * 2 * E * 8 * E + 2 * 2 * E * E)
    transc = B * Lp * (8 * E + 2 * E)
    bytes_accessed = 4 * (B * L + B + V * H + ksize * H * H + H
                          + 2 * H * 8 * E + 2 * E * 8 * E + 8 * E + 2 * E * E + E + B * E)

    grid_spec = pltpu.PrefetchScalarGridSpec(
        num_scalar_prefetch=1,
        grid=(nb,),
        in_specs=[
            pl.BlockSpec((bb, L, 1), lambda b, lens: (b, 0, 0)),
            pl.BlockSpec((V, H), lambda b, lens: (0, 0)),
            pl.BlockSpec((ksize * H, H), lambda b, lens: (0, 0)),
            pl.BlockSpec((1, H), lambda b, lens: (0, 0)),
            pl.BlockSpec((H, 8 * E), lambda b, lens: (0, 0)),
            pl.BlockSpec((H, 8 * E), lambda b, lens: (0, 0)),
            pl.BlockSpec((2 * E, 8 * E), lambda b, lens: (0, 0)),
            pl.BlockSpec((1, 8 * E), lambda b, lens: (0, 0)),
            pl.BlockSpec((2 * E, E), lambda b, lens: (0, 0)),
            pl.BlockSpec((1, E), lambda b, lens: (0, 0)),
        ],
        out_specs=pl.BlockSpec((bb, 1, E), lambda b, lens: (b, 0, 0)),
    )

    out3 = pl.pallas_call(
        kernel,
        out_shape=jax.ShapeDtypeStruct((B, 1, E), jnp.float32),
        grid_spec=grid_spec,
        compiler_params=pltpu.CompilerParams(dimension_semantics=("parallel",)),
        cost_estimate=pl.CostEstimate(flops=int(flops), transcendentals=int(transc),
                                      bytes_accessed=int(bytes_accessed)),
    )(lens1, seqs3, table, params["conv_w2"], params["conv_b2"],
      params["wih_f_sp"], params["wih_r_sp"], params["whh_comb"], params["b_comb"],
      params["w_fc"], params["b_fc"])
    return out3.reshape(B, E)


# -----------------------------------------------------------------------------
# Parameter container / module-equivalent wrapper
# -----------------------------------------------------------------------------
def _spread_gates(w4, edim, rev):
    """Map per-direction gate columns [i|f|g|o] into combined layout [i_f i_r f_f f_r g_f g_r o_f o_r]."""
    rows = w4.shape[0]
    out = jnp.zeros((rows, 8 * edim), w4.dtype)
    for k in range(4):
        dst = 2 * k * edim + (edim if rev else 0)
        out = out.at[:, dst:dst + edim].set(w4[:, k * edim:(k + 1) * edim])
    return out


class LSTMSequenceEncoderPallas:
    def __init__(self, vocab_size, embedding_dim, hidden_dim=32, kernel_size=13,
                 num_layers=1, dropout=0.3, key=None):
        assert num_layers == 1  # TODO(synk): stacked LSTM layers not implemented (module default is 1)
        H, E, K = hidden_dim, embedding_dim, kernel_size
        self.vocab_size, self.embedding_dim, self.hidden_dim = vocab_size, E, H
        self.kernel_size = K
        self.pool = K // 2

        ks = jax.random.split(key, 12)
        embedding = jax.random.normal(ks[0], (vocab_size, H), jnp.float32) / (H ** 0.5)
        # conv weight stored as (K, c_in, c_out)  == torch weight.transpose(2, 1, 0)
        conv_w = jax.random.normal(ks[1], (K, H, H), jnp.float32) * (2.0 / (2 * H * K)) ** 0.5
        conv_b = 0.1 * jax.random.normal(ks[2], (H,), jnp.float32)

        s = 1.0 / (E ** 0.5)

        def u(kk, shape):
            return jax.random.uniform(kk, shape, jnp.float32, -s, s)

        # LSTM weights stored transposed vs torch: wih (H, 4E), whh (E, 4E); b = b_ih + b_hh
        wih_f, whh_f, b_f = u(ks[3], (H, 4 * E)), u(ks[4], (E, 4 * E)), u(ks[5], (1, 4 * E))
        wih_r, whh_r, b_r = u(ks[6], (H, 4 * E)), u(ks[7], (E, 4 * E)), u(ks[8], (1, 4 * E))
        # fc stored as (2E, E) == torch weight.T
        w_fc = jax.random.normal(ks[9], (2 * E, E), jnp.float32) * (2.0 / (3 * E)) ** 0.5
        b_fc = 0.05 * jax.random.normal(ks[10], (1, E), jnp.float32)

        self.params = dict(
            embedding=embedding,
            conv_w=conv_w, conv_b=conv_b,
            conv_w2=conv_w.reshape(K * H, H), conv_b2=conv_b.reshape(1, H),
            wih_f=wih_f, whh_f=whh_f, b_f=b_f,
            wih_r=wih_r, whh_r=whh_r, b_r=b_r,
            wih_f_sp=_spread_gates(wih_f, E, rev=False),
            wih_r_sp=_spread_gates(wih_r, E, rev=True),
            whh_comb=jnp.concatenate([_spread_gates(whh_f, E, rev=False),
                                      _spread_gates(whh_r, E, rev=True)], axis=0),
            b_comb=_spread_gates(b_f, E, rev=False) + _spread_gates(b_r, E, rev=True),
            w_fc=w_fc, b_fc=b_fc,
        )

    def __call__(self, seqs, lengths):
        B, L = seqs.shape
        K, P = self.kernel_size, self.pool
        L_out = L - K + 1
        Lp = (L_out - P) // P + 1
        # torch: lengths = max(((lengths - K) / (K // 2)).to(int), 1). Floor vs trunc division
        # only differs for lengths < K, where the max(...,1) hides it anyway.
        lens_p = jnp.clip((lengths.astype(jnp.int32) - K) // P, 1, Lp)
        return lstm_sequence_encoder_forward(seqs, lens_p, self.params, ksize=K, pool=P)


# -----------------------------------------------------------------------------
# Pure-JAX reference (same math via XLA ops) for the correctness check
# -----------------------------------------------------------------------------
def _reference_forward(enc, seqs, lengths):
    K, P, E = enc.kernel_size, enc.pool, enc.embedding_dim
    p = enc.params
    emb = p["embedding"][seqs]                                        # (B, L, H)
    B, L, H = emb.shape
    L_out = L - K + 1
    conv = jnp.zeros((B, L_out, H), jnp.float32)
    for k in range(K):
        conv = conv + jnp.einsum("blh,ho->blo", emb[:, k:k + L_out, :], p["conv_w"][k])
    conv = conv + p["conv_b"]
    Lp = (L_out - P) // P + 1
    pooled = conv[:, :Lp * P, :].reshape(B, Lp, P, H).max(axis=2)
    lens_p = jnp.clip((lengths.astype(jnp.int32) - K) // P, 1, Lp)

    def sig(z):
        return 1.0 / (1.0 + jnp.exp(-z))

    def run(ts, wih, whh, b):
        h = jnp.zeros((B, E), jnp.float32)
        c = jnp.zeros((B, E), jnp.float32)
        for t in ts:
            g = pooled[:, t, :] @ wih + h @ whh + b
            i, f = sig(g[:, :E]), sig(g[:, E:2 * E])
            gg, o = jnp.tanh(g[:, 2 * E:3 * E]), sig(g[:, 3 * E:])
            c_new = f * c + i * gg
            h_new = o * jnp.tanh(c_new)
            m = (lens_p > t)[:, None]
            h = jnp.where(m, h_new, h)
            c = jnp.where(m, c_new, c)
        return h

    h_f = run(range(Lp), p["wih_f"], p["whh_f"], p["b_f"])
    h_r = run(range(Lp - 1, -1, -1), p["wih_r"], p["whh_r"], p["b_r"])
    return jnp.concatenate([h_f, h_r], axis=1) @ p["w_fc"] + p["b_fc"]


# -----------------------------------------------------------------------------
# Demo / smoke test
# -----------------------------------------------------------------------------
if __name__ == "__main__":
    key = jax.random.PRNGKey(0)
    vocab, E, H, K = 24, 32, 32, 13
    B, L = 4, 64

    key, k_enc, k_seq = jax.random.split(key, 3)
    enc = LSTMSequenceEncoderPallas(vocab, E, H, K, key=k_enc)

    seqs = jax.random.randint(k_seq, (B, L), 0, vocab, dtype=jnp.int32)
    lengths = jnp.array([64, 50, 33, 20], dtype=jnp.int32)

    out = enc(seqs, lengths)
    jax.block_until_ready(out)

    ref = _reference_forward(enc, seqs, lengths)
    assert out.shape == (B, E)
    assert bool(jnp.allclose(out, ref, atol=2e-3, rtol=2e-3)), \
        float(jnp.max(jnp.abs(out - ref)))

    print("KERNEL_OK")
</pallas_src>

<mosaic_0001>
module attributes {stable_mosaic.version = 11 : i64} {
  func.func @_fused_encoder_kernel(%arg0: i32, %arg1: memref<4xi32, #tpu.memory_space<smem>>, %arg2: memref<2x64x1xi32, #tpu.memory_space<vmem>>, %arg3: memref<24x32xf32, #tpu.memory_space<vmem>>, %arg4: memref<416x32xf32, #tpu.memory_space<vmem>>, %arg5: memref<1x32xf32, #tpu.memory_space<vmem>>, %arg6: memref<32x256xf32, #tpu.memory_space<vmem>>, %arg7: memref<32x256xf32, #tpu.memory_space<vmem>>, %arg8: memref<64x256xf32, #tpu.memory_space<vmem>>, %arg9: memref<1x256xf32, #tpu.memory_space<vmem>>, %arg10: memref<64x32xf32, #tpu.memory_space<vmem>>, %arg11: memref<1x32xf32, #tpu.memory_space<vmem>>, %arg12: memref<2x1x32xf32, #tpu.memory_space<vmem>>) attributes {dimension_semantics = [#tpu.dimension_semantics<parallel>], iteration_bounds = array<i64: 2>, scalar_prefetch = 1 : i64, scratch_operands = 0 : i64, tpu.core_type = #tpu.core_type<tc>, window_params = [{transform_indices = @transform_0, window_bounds = array<i64: 2, 64, 1>}, {pipeline_mode = #tpu.pipeline_mode<synchronous>, transform_indices = @transform_1, window_bounds = array<i64: 24, 32>}, {pipeline_mode = #tpu.pipeline_mode<synchronous>, transform_indices = @transform_2, window_bounds = array<i64: 416, 32>}, {pipeline_mode = #tpu.pipeline_mode<synchronous>, transform_indices = @transform_3, window_bounds = array<i64: 1, 32>}, {pipeline_mode = #tpu.pipeline_mode<synchronous>, transform_indices = @transform_4, window_bounds = array<i64: 32, 256>}, {pipeline_mode = #tpu.pipeline_mode<synchronous>, transform_indices = @transform_5, window_bounds = array<i64: 32, 256>}, {pipeline_mode = #tpu.pipeline_mode<synchronous>, transform_indices = @transform_6, window_bounds = array<i64: 64, 256>}, {pipeline_mode = #tpu.pipeline_mode<synchronous>, transform_indices = @transform_7, window_bounds = array<i64: 1, 256>}, {pipeline_mode = #tpu.pipeline_mode<synchronous>, transform_indices = @transform_8, window_bounds = array<i64: 64, 32>}, {pipeline_mode = #tpu.pipeline_mode<synchronous>, transform_indices = @transform_9, window_bounds = array<i64: 1, 32>}, {transform_indices = @transform_10, window_bounds = array<i64: 2, 1, 32>}]} {
    %c0 = arith.constant 0 : index
    %c0_0 = arith.constant 0 : index
    %0 = vector.load %arg3[%c0, %c0_0] : memref<24x32xf32, #tpu.memory_space<vmem>>, vector<24x32xf32>
    %c0_1 = arith.constant 0 : index
    %c0_2 = arith.constant 0 : index
    %1 = vector.load %arg4[%c0_1, %c0_2] : memref<416x32xf32, #tpu.memory_space<vmem>>, vector<416x32xf32>
    %c0_3 = arith.constant 0 : index
    %c0_4 = arith.constant 0 : index
    %2 = vector.load %arg5[%c0_3, %c0_4] : memref<1x32xf32, #tpu.memory_space<vmem>>, vector<1x32xf32>
    %c0_5 = arith.constant 0 : index
    %c0_6 = arith.constant 0 : index
    %3 = vector.load %arg6[%c0_5, %c0_6] : memref<32x256xf32, #tpu.memory_space<vmem>>, vector<32x256xf32>
    %c0_7 = arith.constant 0 : index
    %c0_8 = arith.constant 0 : index
    %4 = vector.load %arg7[%c0_7, %c0_8] : memref<32x256xf32, #tpu.memory_space<vmem>>, vector<32x256xf32>
    %c0_9 = arith.constant 0 : index
    %c0_10 = arith.constant 0 : index
    %5 = vector.load %arg9[%c0_9, %c0_10] : memref<1x256xf32, #tpu.memory_space<vmem>>, vector<1x256xf32>
    %6 = tpu.iota {dimensions = array<i32: 1>} : vector<64x24xi32>
    %c0_11 = arith.constant 0 : index
    %c0_12 = arith.constant 0 : index
    %c0_13 = arith.constant 0 : index
    %7 = vector.load %arg2[%c0_11, %c0_12, %c0_13] : memref<2x64x1xi32, #tpu.memory_space<vmem>>, vector<1x64x1xi32>
    %8 = vector.shape_cast %7 : vector<1x64x1xi32> to vector<64x1xi32>
    %9 = vector.broadcast %8 : vector<64x1xi32> to vector<64x24xi32>
    %10 = arith.cmpi eq, %6, %9 : vector<64x24xi32>
    %11 = arith.extui %10 : vector<64x24xi1> to vector<64x24xi32>
    %12 = arith.sitofp %11 : vector<64x24xi32> to vector<64x24xf32>
    %cst = arith.constant dense<0.000000e+00> : vector<64x32xf32>
    %13 = tpu.matmul %12, %0, %cst {dimension_numbers = #tpu.dot_dimension_numbers<[1], [0], [0], [1], [0, 0, 1, 1], [], []>} : vector<64x24xf32>, vector<24x32xf32>, vector<64x32xf32> -> vector<64x32xf32>
    %14 = vector.extract_strided_slice %13 {offsets = [0, 0], sizes = [52, 32], strides = [1, 1]} : vector<64x32xf32> to vector<52x32xf32>
    %15 = vector.extract_strided_slice %13 {offsets = [1, 0], sizes = [52, 32], strides = [1, 1]} : vector<64x32xf32> to vector<52x32xf32>
    %16 = vector.extract_strided_slice %13 {offsets = [2, 0], sizes = [52, 32], strides = [1, 1]} : vector<64x32xf32> to vector<52x32xf32>
    %17 = vector.extract_strided_slice %13 {offsets = [3, 0], sizes = [52, 32], strides = [1, 1]} : vector<64x32xf32> to vector<52x32xf32>
    %18 = vector.extract_strided_slice %13 {offsets = [4, 0], sizes = [52, 32], strides = [1, 1]} : vector<64x32xf32> to vector<52x32xf32>
    %19 = vector.extract_strided_slice %13 {offsets = [5, 0], sizes = [52, 32], strides = [1, 1]} : vector<64x32xf32> to vector<52x32xf32>
    %20 = vector.extract_strided_slice %13 {offsets = [6, 0], sizes = [52, 32], strides = [1, 1]} : vector<64x32xf32> to vector<52x32xf32>
    %21 = vector.extract_strided_slice %13 {offsets = [7, 0], sizes = [52, 32], strides = [1, 1]} : vector<64x32xf32> to vector<52x32xf32>
    %22 = vector.extract_strided_slice %13 {offsets = [8, 0], sizes = [52, 32], strides = [1, 1]} : vector<64x32xf32> to vector<52x32xf32>
    %23 = vector.extract_strided_slice %13 {offsets = [9, 0], sizes = [52, 32], strides = [1, 1]} : vector<64x32xf32> to vector<52x32xf32>
    %24 = vector.extract_strided_slice %13 {offsets = [10, 0], sizes = [52, 32], strides = [1, 1]} : vector<64x32xf32> to vector<52x32xf32>
    %25 = vector.extract_strided_slice %13 {offsets = [11, 0], sizes = [52, 32], strides = [1, 1]} : vector<64x32xf32> to vector<52x32xf32>
    %26 = vector.extract_strided_slice %13 {offsets = [12, 0], sizes = [52, 32], strides = [1, 1]} : vector<64x32xf32> to vector<52x32xf32>
    %27 = tpu.concatenate %14, %15, %16, %17, %18, %19, %20, %21, %22, %23, %24, %25, %26 in 1 : vector<52x32xf32>, vector<52x32xf32>, vector<52x32xf32>, vector<52x32xf32>, vector<52x32xf32>, vector<52x32xf32>, vector<52x32xf32>, vector<52x32xf32>, vector<52x32xf32>, vector<52x32xf32>, vector<52x32xf32>, vector<52x32xf32>, vector<52x32xf32> -> vector<52x416xf32>
    %cst_14 = arith.constant dense<0.000000e+00> : vector<52x32xf32>
    %28 = tpu.matmul %27, %1, %cst_14 {dimension_numbers = #tpu.dot_dimension_numbers<[1], [0], [0], [1], [0, 0, 1, 1], [], []>} : vector<52x416xf32>, vector<416x32xf32>, vector<52x32xf32> -> vector<52x32xf32>
    %29 = vector.broadcast %2 : vector<1x32xf32> to vector<52x32xf32>
    %30 = arith.addf %28, %29 : vector<52x32xf32>
    %31 = vector.extract_strided_slice %30 {offsets = [0, 0], sizes = [6, 32], strides = [1, 1]} : vector<52x32xf32> to vector<6x32xf32>
    %cst_15 = arith.constant dense<0xFF800000> : vector<32xf32>
    %32 = vector.multi_reduction <maximumf>, %31, %cst_15 [0] : vector<6x32xf32> to vector<32xf32>
    %33 = vector.shape_cast %32 : vector<32xf32> to vector<1x32xf32>
    %34 = vector.extract_strided_slice %30 {offsets = [6, 0], sizes = [6, 32], strides = [1, 1]} : vector<52x32xf32> to vector<6x32xf32>
    %cst_16 = arith.constant dense<0xFF800000> : vector<32xf32>
    %35 = vector.multi_reduction <maximumf>, %34, %cst_16 [0] : vector<6x32xf32> to vector<32xf32>
    %36 = vector.shape_cast %35 : vector<32xf32> to vector<1x32xf32>
    %37 = vector.extract_strided_slice %30 {offsets = [12, 0], sizes = [6, 32], strides = [1, 1]} : vector<52x32xf32> to vector<6x32xf32>
    %cst_17 = arith.constant dense<0xFF800000> : vector<32xf32>
    %38 = vector.multi_reduction <maximumf>, %37, %cst_17 [0] : vector<6x32xf32> to vector<32xf32>
    %39 = vector.shape_cast %38 : vector<32xf32> to vector<1x32xf32>
    %40 = vector.extract_strided_slice %30 {offsets = [18, 0], sizes = [6, 32], strides = [1, 1]} : vector<52x32xf32> to vector<6x32xf32>
    %cst_18 = arith.constant dense<0xFF800000> : vector<32xf32>
    %41 = vector.multi_reduction <maximumf>, %40, %cst_18 [0] : vector<6x32xf32> to vector<32xf32>
    %42 = vector.shape_cast %41 : vector<32xf32> to vector<1x32xf32>
    %43 = vector.extract_strided_slice %30 {offsets = [24, 0], sizes = [6, 32], strides = [1, 1]} : vector<52x32xf32> to vector<6x32xf32>
    %cst_19 = arith.constant dense<0xFF800000> : vector<32xf32>
    %44 = vector.multi_reduction <maximumf>, %43, %cst_19 [0] : vector<6x32xf32> to vector<32xf32>
    %45 = vector.shape_cast %44 : vector<32xf32> to vector<1x32xf32>
    %46 = vector.extract_strided_slice %30 {offsets = [30, 0], sizes = [6, 32], strides = [1, 1]} : vector<52x32xf32> to vector<6x32xf32>
    %cst_20 = arith.constant dense<0xFF800000> : vector<32xf32>
    %47 = vector.multi_reduction <maximumf>, %46, %cst_20 [0] : vector<6x32xf32> to vector<32xf32>
    %48 = vector.shape_cast %47 : vector<32xf32> to vector<1x32xf32>
    %49 = vector.extract_strided_slice %30 {offsets = [36, 0], sizes = [6, 32], strides = [1, 1]} : vector<52x32xf32> to vector<6x32xf32>
    %cst_21 = arith.constant dense<0xFF800000> : vector<32xf32>
    %50 = vector.multi_reduction <maximumf>, %49, %cst_21 [0] : vector<6x32xf32> to vector<32xf32>
    %51 = vector.shape_cast %50 : vector<32xf32> to vector<1x32xf32>
    %52 = vector.extract_strided_slice %30 {offsets = [42, 0], sizes = [6, 32], strides = [1, 1]} : vector<52x32xf32> to vector<6x32xf32>
    %cst_22 = arith.constant dense<0xFF800000> : vector<32xf32>
    %53 = vector.multi_reduction <maximumf>, %52, %cst_22 [0] : vector<6x32xf32> to vector<32xf32>
    %54 = vector.shape_cast %53 : vector<32xf32> to vector<1x32xf32>
    %55 = tpu.concatenate %33, %36, %39, %42, %45, %48, %51, %54 in 0 : vector<1x32xf32>, vector<1x32xf32>, vector<1x32xf32>, vector<1x32xf32>, vector<1x32xf32>, vector<1x32xf32>, vector<1x32xf32>, vector<1x32xf32> -> vector<8x32xf32>
    %cst_23 = arith.constant dense<0.000000e+00> : vector<8x256xf32>
    %56 = tpu.matmul %55, %3, %cst_23 {dimension_numbers = #tpu.dot_dimension_numbers<[1], [0], [0], [1], [0, 0, 1, 1], [], []>} : vector<8x32xf32>, vector<32x256xf32>, vector<8x256xf32> -> vector<8x256xf32>
    %57 = vector.broadcast %5 : vector<1x256xf32> to vector<8x256xf32>
    %58 = arith.addf %56, %57 : vector<8x256xf32>
    %cst_24 = arith.constant dense<0.000000e+00> : vector<8x256xf32>
    %59 = tpu.matmul %55, %4, %cst_24 {dimension_numbers = #tpu.dot_dimension_numbers<[1], [0], [0], [1], [0, 0, 1, 1], [], []>} : vector<8x32xf32>, vector<32x256xf32>, vector<8x256xf32> -> vector<8x256xf32>
    %c1 = arith.constant 1 : index
    %c0_25 = arith.constant 0 : index
    %c0_26 = arith.constant 0 : index
    %60 = vector.load %arg2[%c1, %c0_25, %c0_26] : memref<2x64x1xi32, #tpu.memory_space<vmem>>, vector<1x64x1xi32>
    %61 = vector.shape_cast %60 : vector<1x64x1xi32> to vector<64x1xi32>
    %62 = vector.broadcast %61 : vector<64x1xi32> to vector<64x24xi32>
    %63 = arith.cmpi eq, %6, %62 : vector<64x24xi32>
    %64 = arith.extui %63 : vector<64x24xi1> to vector<64x24xi32>
    %65 = arith.sitofp %64 : vector<64x24xi32> to vector<64x24xf32>
    %cst_27 = arith.constant dense<0.000000e+00> : vector<64x32xf32>
    %66 = tpu.matmul %65, %0, %cst_27 {dimension_numbers = #tpu.dot_dimension_numbers<[1], [0], [0], [1], [0, 0, 1, 1], [], []>} : vector<64x24xf32>, vector<24x32xf32>, vector<64x32xf32> -> vector<64x32xf32>
    %67 = vector.extract_strided_slice %66 {offsets = [0, 0], sizes = [52, 32], strides = [1, 1]} : vector<64x32xf32> to vector<52x32xf32>
    %68 = vector.extract_strided_slice %66 {offsets = [1, 0], sizes = [52, 32], strides = [1, 1]} : vector<64x32xf32> to vector<52x32xf32>
    %69 = vector.extract_strided_slice %66 {offsets = [2, 0], sizes = [52, 32], strides = [1, 1]} : vector<64x32xf32> to vector<52x32xf32>
    %70 = vector.extract_strided_slice %66 {offsets = [3, 0], sizes = [52, 32], strides = [1, 1]} : vector<64x32xf32> to vector<52x32xf32>
    %71 = vector.extract_strided_slice %66 {offsets = [4, 0], sizes = [52, 32], strides = [1, 1]} : vector<64x32xf32> to vector<52x32xf32>
    %72 = vector.extract_strided_slice %66 {offsets = [5, 0], sizes = [52, 32], strides = [1, 1]} : vector<64x32xf32> to vector<52x32xf32>
    %73 = vector.extract_strided_slice %66 {offsets = [6, 0], sizes = [52, 32], strides = [1, 1]} : vector<64x32xf32> to vector<52x32xf32>
    %74 = vector.extract_strided_slice %66 {offsets = [7, 0], sizes = [52, 32], strides = [1, 1]} : vector<64x32xf32> to vector<52x32xf32>
    %75 = vector.extract_strided_slice %66 {offsets = [8, 0], sizes = [52, 32], strides = [1, 1]} : vector<64x32xf32> to vector<52x32xf32>
    %76 = vector.extract_strided_slice %66 {offsets = [9, 0], sizes = [52, 32], strides = [1, 1]} : vector<64x32xf32> to vector<52x32xf32>
    %77 = vector.extract_strided_slice %66 {offsets = [10, 0], sizes = [52, 32], strides = [1, 1]} : vector<64x32xf32> to vector<52x32xf32>
    %78 = vector.extract_strided_slice %66 {offsets = [11, 0], sizes = [52, 32], strides = [1, 1]} : vector<64x32xf32> to vector<52x32xf32>
    %79 = vector.extract_strided_slice %66 {offsets = [12, 0], sizes = [52, 32], strides = [1, 1]} : vector<64x32xf32> to vector<52x32xf32>
    %80 = tpu.concatenate %67, %68, %69, %70, %71, %72, %73, %74, %75, %76, %77, %78, %79 in 1 : vector<52x32xf32>, vector<52x32xf32>, vector<52x32xf32>, vector<52x32xf32>, vector<52x32xf32>, vector<52x32xf32>, vector<52x32xf32>, vector<52x32xf32>, vector<52x32xf32>, vector<52x32xf32>, vector<52x32xf32>, vector<52x32xf32>, vector<52x32xf32> -> vector<52x416xf32>
    %cst_28 = arith.constant dense<0.000000e+00> : vector<52x32xf32>
    %81 = tpu.matmul %80, %1, %cst_28 {dimension_numbers = #tpu.dot_dimension_numbers<[1], [0], [0], [1], [0, 0, 1, 1], [], []>} : vector<52x416xf32>, vector<416x32xf32>, vector<52x32xf32> -> vector<52x32xf32>
    %82 = vector.broadcast %2 : vector<1x32xf32> to vector<52x32xf32>
    %83 = arith.addf %81, %82 : vector<52x32xf32>
    %84 = vector.extract_strided_slice %83 {offsets = [0, 0], sizes = [6, 32], strides = [1, 1]} : vector<52x32xf32> to vector<6x32xf32>
    %cst_29 = arith.constant dense<0xFF800000> : vector<32xf32>
    %85 = vector.multi_reduction <maximumf>, %84, %cst_29 [0] : vector<6x32xf32> to vector<32xf32>
    %86 = vector.shape_cast %85 : vector<32xf32> to vector<1x32xf32>
    %87 = vector.extract_strided_slice %83 {offsets = [6, 0], sizes = [6, 32], strides = [1, 1]} : vector<52x32xf32> to vector<6x32xf32>
    %cst_30 = arith.constant dense<0xFF800000> : vector<32xf32>
    %88 = vector.multi_reduction <maximumf>, %87, %cst_30 [0] : vector<6x32xf32> to vector<32xf32>
    %89 = vector.shape_cast %88 : vector<32xf32> to vector<1x32xf32>
    %90 = vector.extract_strided_slice %83 {offsets = [12, 0], sizes = [6, 32], strides = [1, 1]} : vector<52x32xf32> to vector<6x32xf32>
    %cst_31 = arith.constant dense<0xFF800000> : vector<32xf32>
    %91 = vector.multi_reduction <maximumf>, %90, %cst_31 [0] : vector<6x32xf32> to vector<32xf32>
    %92 = vector.shape_cast %91 : vector<32xf32> to vector<1x32xf32>
    %93 = vector.extract_strided_slice %83 {offsets = [18, 0], sizes = [6, 32], strides = [1, 1]} : vector<52x32xf32> to vector<6x32xf32>
    %cst_32 = arith.constant dense<0xFF800000> : vector<32xf32>
    %94 = vector.multi_reduction <maximumf>, %93, %cst_32 [0] : vector<6x32xf32> to vector<32xf32>
    %95 = vector.shape_cast %94 : vector<32xf32> to vector<1x32xf32>
    %96 = vector.extract_strided_slice %83 {offsets = [24, 0], sizes = [6, 32], strides = [1, 1]} : vector<52x32xf32> to vector<6x32xf32>
    %cst_33 = arith.constant dense<0xFF800000> : vector<32xf32>
    %97 = vector.multi_reduction <maximumf>, %96, %cst_33 [0] : vector<6x32xf32> to vector<32xf32>
    %98 = vector.shape_cast %97 : vector<32xf32> to vector<1x32xf32>
    %99 = vector.extract_strided_slice %83 {offsets = [30, 0], sizes = [6, 32], strides = [1, 1]} : vector<52x32xf32> to vector<6x32xf32>
    %cst_34 = arith.constant dense<0xFF800000> : vector<32xf32>
    %100 = vector.multi_reduction <maximumf>, %99, %cst_34 [0] : vector<6x32xf32> to vector<32xf32>
    %101 = vector.shape_cast %100 : vector<32xf32> to vector<1x32xf32>
    %102 = vector.extract_strided_slice %83 {offsets = [36, 0], sizes = [6, 32], strides = [1, 1]} : vector<52x32xf32> to vector<6x32xf32>
    %cst_35 = arith.constant dense<0xFF800000> : vector<32xf32>
    %103 = vector.multi_reduction <maximumf>, %102, %cst_35 [0] : vector<6x32xf32> to vector<32xf32>
    %104 = vector.shape_cast %103 : vector<32xf32> to vector<1x32xf32>
    %105 = vector.extract_strided_slice %83 {offsets = [42, 0], sizes = [6, 32], strides = [1, 1]} : vector<52x32xf32> to vector<6x32xf32>
    %cst_36 = arith.constant dense<0xFF800000> : vector<32xf32>
    %106 = vector.multi_reduction <maximumf>, %105, %cst_36 [0] : vector<6x32xf32> to vector<32xf32>
    %107 = vector.shape_cast %106 : vector<32xf32> to vector<1x32xf32>
    %108 = tpu.concatenate %86, %89, %92, %95, %98, %101, %104, %107 in 0 : vector<1x32xf32>, vector<1x32xf32>, vector<1x32xf32>, vector<1x32xf32>, vector<1x32xf32>, vector<1x32xf32>, vector<1x32xf32>, vector<1x32xf32> -> vector<8x32xf32>
    %cst_37 = arith.constant dense<0.000000e+00> : vector<8x256xf32>
    %109 = tpu.matmul %108, %3, %cst_37 {dimension_numbers = #tpu.dot_dimension_numbers<[1], [0], [0], [1], [0, 0, 1, 1], [], []>} : vector<8x32xf32>, vector<32x256xf32>, vector<8x256xf32> -> vector<8x256xf32>
    %110 = vector.broadcast %5 : vector<1x256xf32> to vector<8x256xf32>
    %111 = arith.addf %109, %110 : vector<8x256xf32>
    %cst_38 = arith.constant dense<0.000000e+00> : vector<8x256xf32>
    %112 = tpu.matmul %108, %4, %cst_38 {dimension_numbers = #tpu.dot_dimension_numbers<[1], [0], [0], [1], [0, 0, 1, 1], [], []>} : vector<8x32xf32>, vector<32x256xf32>, vector<8x256xf32> -> vector<8x256xf32>
    %113 = vector.extract_strided_slice %58 {offsets = [0, 0], sizes = [1, 256], strides = [1, 1]} : vector<8x256xf32> to vector<1x256xf32>
    %114 = vector.extract_strided_slice %111 {offsets = [0, 0], sizes = [1, 256], strides = [1, 1]} : vector<8x256xf32> to vector<1x256xf32>
    %115 = tpu.concatenate %113, %114 in 0 : vector<1x256xf32>, vector<1x256xf32> -> vector<2x256xf32>
    %116 = vector.extract_strided_slice %59 {offsets = [7, 0], sizes = [1, 256], strides = [1, 1]} : vector<8x256xf32> to vector<1x256xf32>
    %117 = vector.extract_strided_slice %112 {offsets = [7, 0], sizes = [1, 256], strides = [1, 1]} : vector<8x256xf32> to vector<1x256xf32>
    %118 = tpu.concatenate %116, %117 in 0 : vector<1x256xf32>, vector<1x256xf32> -> vector<2x256xf32>
    %119 = arith.addf %115, %118 : vector<2x256xf32>
    %120 = vector.extract_strided_slice %58 {offsets = [1, 0], sizes = [1, 256], strides = [1, 1]} : vector<8x256xf32> to vector<1x256xf32>
    %121 = vector.extract_strided_slice %111 {offsets = [1, 0], sizes = [1, 256], strides = [1, 1]} : vector<8x256xf32> to vector<1x256xf32>
    %122 = tpu.concatenate %120, %121 in 0 : vector<1x256xf32>, vector<1x256xf32> -> vector<2x256xf32>
    %123 = vector.extract_strided_slice %59 {offsets = [6, 0], sizes = [1, 256], strides = [1, 1]} : vector<8x256xf32> to vector<1x256xf32>
    %124 = vector.extract_strided_slice %112 {offsets = [6, 0], sizes = [1, 256], strides = [1, 1]} : vector<8x256xf32> to vector<1x256xf32>
    %125 = tpu.concatenate %123, %124 in 0 : vector<1x256xf32>, vector<1x256xf32> -> vector<2x256xf32>
    %126 = arith.addf %122, %125 : vector<2x256xf32>
    %127 = vector.extract_strided_slice %58 {offsets = [2, 0], sizes = [1, 256], strides = [1, 1]} : vector<8x256xf32> to vector<1x256xf32>
    %128 = vector.extract_strided_slice %111 {offsets = [2, 0], sizes = [1, 256], strides = [1, 1]} : vector<8x256xf32> to vector<1x256xf32>
    %129 = tpu.concatenate %127, %128 in 0 : vector<1x256xf32>, vector<1x256xf32> -> vector<2x256xf32>
    %130 = vector.extract_strided_slice %59 {offsets = [5, 0], sizes = [1, 256], strides = [1, 1]} : vector<8x256xf32> to vector<1x256xf32>
    %131 = vector.extract_strided_slice %112 {offsets = [5, 0], sizes = [1, 256], strides = [1, 1]} : vector<8x256xf32> to vector<1x256xf32>
    %132 = tpu.concatenate %130, %131 in 0 : vector<1x256xf32>, vector<1x256xf32> -> vector<2x256xf32>
    %133 = arith.addf %129, %132 : vector<2x256xf32>
    %134 = vector.extract_strided_slice %58 {offsets = [3, 0], sizes = [1, 256], strides = [1, 1]} : vector<8x256xf32> to vector<1x256xf32>
    %135 = vector.extract_strided_slice %111 {offsets = [3, 0], sizes = [1, 256], strides = [1, 1]} : vector<8x256xf32> to vector<1x256xf32>
    %136 = tpu.concatenate %134, %135 in 0 : vector<1x256xf32>, vector<1x256xf32> -> vector<2x256xf32>
    %137 = vector.extract_strided_slice %59 {offsets = [4, 0], sizes = [1, 256], strides = [1, 1]} : vector<8x256xf32> to vector<1x256xf32>
    %138 = vector.extract_strided_slice %112 {offsets = [4, 0], sizes = [1, 256], strides = [1, 1]} : vector<8x256xf32> to vector<1x256xf32>
    %139 = tpu.concatenate %137, %138 in 0 : vector<1x256xf32>, vector<1x256xf32> -> vector<2x256xf32>
    %140 = arith.addf %136, %139 : vector<2x256xf32>
    %141 = vector.extract_strided_slice %58 {offsets = [4, 0], sizes = [1, 256], strides = [1, 1]} : vector<8x256xf32> to vector<1x256xf32>
    %142 = vector.extract_strided_slice %111 {offsets = [4, 0], sizes = [1, 256], strides = [1, 1]} : vector<8x256xf32> to vector<1x256xf32>
    %143 = tpu.concatenate %141, %142 in 0 : vector<1x256xf32>, vector<1x256xf32> -> vector<2x256xf32>
    %144 = vector.extract_strided_slice %59 {offsets = [3, 0], sizes = [1, 256], strides = [1, 1]} : vector<8x256xf32> to vector<1x256xf32>
    %145 = vector.extract_strided_slice %112 {offsets = [3, 0], sizes = [1, 256], strides = [1, 1]} : vector<8x256xf32> to vector<1x256xf32>
    %146 = tpu.concatenate %144, %145 in 0 : vector<1x256xf32>, vector<1x256xf32> -> vector<2x256xf32>
    %147 = arith.addf %143, %146 : vector<2x256xf32>
    %148 = vector.extract_strided_slice %58 {offsets = [5, 0], sizes = [1, 256], strides = [1, 1]} : vector<8x256xf32> to vector<1x256xf32>
    %149 = vector.extract_strided_slice %111 {offsets = [5, 0], sizes = [1, 256], strides = [1, 1]} : vector<8x256xf32> to vector<1x256xf32>
    %150 = tpu.concatenate %148, %149 in 0 : vector<1x256xf32>, vector<1x256xf32> -> vector<2x256xf32>
    %151 = vector.extract_strided_slice %59 {offsets = [2, 0], sizes = [1, 256], strides = [1, 1]} : vector<8x256xf32> to vector<1x256xf32>
    %152 = vector.extract_strided_slice %112 {offsets = [2, 0], sizes = [1, 256], strides = [1, 1]} : vector<8x256xf32> to vector<1x256xf32>
    %153 = tpu.concatenate %151, %152 in 0 : vector<1x256xf32>, vector<1x256xf32> -> vector<2x256xf32>
    %154 = arith.addf %150, %153 : vector<2x256xf32>
    %155 = vector.extract_strided_slice %58 {offsets = [6, 0], sizes = [1, 256], strides = [1, 1]} : vector<8x256xf32> to vector<1x256xf32>
    %156 = vector.extract_strided_slice %111 {offsets = [6, 0], sizes = [1, 256], strides = [1, 1]} : vector<8x256xf32> to vector<1x256xf32>
    %157 = tpu.concatenate %155, %156 in 0 : vector<1x256xf32>, vector<1x256xf32> -> vector<2x256xf32>
    %158 = vector.extract_strided_slice %59 {offsets = [1, 0], sizes = [1, 256], strides = [1, 1]} : vector<8x256xf32> to vector<1x256xf32>
    %159 = vector.extract_strided_slice %112 {offsets = [1, 0], sizes = [1, 256], strides = [1, 1]} : vector<8x256xf32> to vector<1x256xf32>
    %160 = tpu.concatenate %158, %159 in 0 : vector<1x256xf32>, vector<1x256xf32> -> vector<2x256xf32>
    %161 = arith.addf %157, %160 : vector<2x256xf32>
    %162 = vector.extract_strided_slice %58 {offsets = [7, 0], sizes = [1, 256], strides = [1, 1]} : vector<8x256xf32> to vector<1x256xf32>
    %163 = vector.extract_strided_slice %111 {offsets = [7, 0], sizes = [1, 256], strides = [1, 1]} : vector<8x256xf32> to vector<1x256xf32>
    %164 = tpu.concatenate %162, %163 in 0 : vector<1x256xf32>, vector<1x256xf32> -> vector<2x256xf32>
    %165 = vector.extract_strided_slice %59 {offsets = [0, 0], sizes = [1, 256], strides = [1, 1]} : vector<8x256xf32> to vector<1x256xf32>
    %166 = vector.extract_strided_slice %112 {offsets = [0, 0], sizes = [1, 256], strides = [1, 1]} : vector<8x256xf32> to vector<1x256xf32>
    %167 = tpu.concatenate %165, %166 in 0 : vector<1x256xf32>, vector<1x256xf32> -> vector<2x256xf32>
    %168 = arith.addf %164, %167 : vector<2x256xf32>
    %c2_i32 = arith.constant 2 : i32
    %169 = arith.muli %arg0, %c2_i32 : i32
    %170 = tpu.iota {dimensions = array<i32: 0>} : vector<2x1xi32>
    %c0_i32 = arith.constant 0 : i32
    %171 = vector.broadcast %c0_i32 : i32 to vector<2x1xi32>
    %c0_i32_39 = arith.constant 0 : i32
    %172 = vector.broadcast %c0_i32_39 : i32 to vector<2x1xi32>
    %173 = arith.cmpi eq, %170, %172 : vector<2x1xi32>
    %c0_i32_40 = arith.constant 0 : i32
    %174 = arith.addi %169, %c0_i32_40 : i32
    %175 = arith.index_cast %174 : i32 to index
    %176 = memref.load %arg1[%175] : memref<4xi32, #tpu.memory_space<smem>>
    %177 = vector.broadcast %176 : i32 to vector<2x1xi32>
    %178 = arith.select %173, %177, %171 : vector<2x1xi1>, vector<2x1xi32>
    %c1_i32 = arith.constant 1 : i32
    %179 = vector.broadcast %c1_i32 : i32 to vector<2x1xi32>
    %180 = arith.cmpi eq, %170, %179 : vector<2x1xi32>
    %c1_i32_41 = arith.constant 1 : i32
    %181 = arith.addi %169, %c1_i32_41 : i32
    %182 = arith.index_cast %181 : i32 to index
    %183 = memref.load %arg1[%182] : memref<4xi32, #tpu.memory_space<smem>>
    %184 = vector.broadcast %183 : i32 to vector<2x1xi32>
    %185 = arith.select %180, %184, %178 : vector<2x1xi1>, vector<2x1xi32>
    %186 = tpu.iota {dimensions = array<i32: 1>} : vector<1x64xi32>
    %187 = tpu.iota {dimensions = array<i32: 1>} : vector<1x256xi32>
    %c128_i32 = arith.constant 128 : i32
    %188 = vector.broadcast %c128_i32 : i32 to vector<1x256xi32>
    %189 = arith.cmpi sge, %187, %188 : vector<1x256xi32>
    %c192_i32 = arith.constant 192 : i32
    %190 = vector.broadcast %c192_i32 : i32 to vector<1x256xi32>
    %191 = arith.cmpi slt, %187, %190 : vector<1x256xi32>
    %192 = arith.andi %189, %191 : vector<1x256xi1>
    %cst_42 = arith.constant 1.000000e+00 : f32
    %cst_43 = arith.constant 5.000000e-01 : f32
    %193 = vector.broadcast %cst_42 : f32 to vector<1x256xf32>
    %194 = vector.broadcast %cst_43 : f32 to vector<1x256xf32>
    %195 = arith.select %192, %193, %194 : vector<1x256xi1>, vector<1x256xf32>
    %cst_44 = arith.constant 0.000000e+00 : f32
    %cst_45 = arith.constant 5.000000e-01 : f32
    %196 = vector.broadcast %cst_44 : f32 to vector<1x256xf32>
    %197 = vector.broadcast %cst_45 : f32 to vector<1x256xf32>
    %198 = arith.select %192, %196, %197 : vector<1x256xi1>, vector<1x256xf32>
    %c0_46 = arith.constant 0 : index
    %c0_47 = arith.constant 0 : index
    %199 = vector.load %arg8[%c0_46, %c0_47] : memref<64x256xf32, #tpu.memory_space<vmem>>, vector<64x256xf32>
    %cst_48 = arith.constant 0.000000e+00 : f32
    %200 = vector.broadcast %cst_48 : f32 to vector<2x64xf32>
    %cst_49 = arith.constant 0.000000e+00 : f32
    %201 = vector.broadcast %cst_49 : f32 to vector<2x64xf32>
    %cst_50 = arith.constant dense<0.000000e+00> : vector<2x256xf32>
    %202 = tpu.matmul %200, %199, %cst_50 {dimension_numbers = #tpu.dot_dimension_numbers<[1], [0], [0], [1], [0, 0, 1, 1], [], []>} : vector<2x64xf32>, vector<64x256xf32>, vector<2x256xf32> -> vector<2x256xf32>
    %203 = arith.addf %119, %202 : vector<2x256xf32>
    %204 = vector.broadcast %195 : vector<1x256xf32> to vector<2x256xf32>
    %205 = arith.mulf %203, %204 : vector<2x256xf32>
    %206 = math.tanh %205 : vector<2x256xf32>
    %207 = vector.broadcast %195 : vector<1x256xf32> to vector<2x256xf32>
    %208 = arith.mulf %206, %207 : vector<2x256xf32>
    %209 = vector.broadcast %198 : vector<1x256xf32> to vector<2x256xf32>
    %210 = arith.addf %208, %209 : vector<2x256xf32>
    %211 = vector.extract_strided_slice %210 {offsets = [0, 0], sizes = [2, 64], strides = [1, 1]} : vector<2x256xf32> to vector<2x64xf32>
    %212 = vector.extract_strided_slice %210 {offsets = [0, 64], sizes = [2, 64], strides = [1, 1]} : vector<2x256xf32> to vector<2x64xf32>
    %213 = vector.extract_strided_slice %210 {offsets = [0, 128], sizes = [2, 64], strides = [1, 1]} : vector<2x256xf32> to vector<2x64xf32>
    %214 = vector.extract_strided_slice %210 {offsets = [0, 192], sizes = [2, 64], strides = [1, 1]} : vector<2x256xf32> to vector<2x64xf32>
    %215 = arith.mulf %212, %201 : vector<2x64xf32>
    %216 = arith.mulf %211, %213 : vector<2x64xf32>
    %217 = arith.addf %215, %216 : vector<2x64xf32>
    %218 = math.tanh %217 : vector<2x64xf32>
    %219 = arith.mulf %214, %218 : vector<2x64xf32>
    %c32_i32 = arith.constant 32 : i32
    %220 = vector.broadcast %c32_i32 : i32 to vector<1x64xi32>
    %221 = arith.cmpi slt, %186, %220 : vector<1x64xi32>
    %c0_i32_51 = arith.constant 0 : i32
    %c7_i32 = arith.constant 7 : i32
    %222 = vector.broadcast %c0_i32_51 : i32 to vector<1x64xi32>
    %223 = vector.broadcast %c7_i32 : i32 to vector<1x64xi32>
    %224 = arith.select %221, %222, %223 : vector<1x64xi1>, vector<1x64xi32>
    %225 = vector.broadcast %185 : vector<2x1xi32> to vector<2x64xi32>
    %226 = vector.broadcast %224 : vector<1x64xi32> to vector<2x64xi32>
    %227 = arith.cmpi sgt, %225, %226 : vector<2x64xi32>
    %228 = arith.select %227, %219, %200 : vector<2x64xi1>, vector<2x64xf32>
    %229 = arith.select %227, %217, %201 : vector<2x64xi1>, vector<2x64xf32>
    %cst_52 = arith.constant dense<0.000000e+00> : vector<2x256xf32>
    %230 = tpu.matmul %228, %199, %cst_52 {dimension_numbers = #tpu.dot_dimension_numbers<[1], [0], [0], [1], [0, 0, 1, 1], [], []>} : vector<2x64xf32>, vector<64x256xf32>, vector<2x256xf32> -> vector<2x256xf32>
    %231 = arith.addf %126, %230 : vector<2x256xf32>
    %232 = vector.broadcast %195 : vector<1x256xf32> to vector<2x256xf32>
    %233 = arith.mulf %231, %232 : vector<2x256xf32>
    %234 = math.tanh %233 : vector<2x256xf32>
    %235 = vector.broadcast %195 : vector<1x256xf32> to vector<2x256xf32>
    %236 = arith.mulf %234, %235 : vector<2x256xf32>
    %237 = vector.broadcast %198 : vector<1x256xf32> to vector<2x256xf32>
    %238 = arith.addf %236, %237 : vector<2x256xf32>
    %239 = vector.extract_strided_slice %238 {offsets = [0, 0], sizes = [2, 64], strides = [1, 1]} : vector<2x256xf32> to vector<2x64xf32>
    %240 = vector.extract_strided_slice %238 {offsets = [0, 64], sizes = [2, 64], strides = [1, 1]} : vector<2x256xf32> to vector<2x64xf32>
    %241 = vector.extract_strided_slice %238 {offsets = [0, 128], sizes = [2, 64], strides = [1, 1]} : vector<2x256xf32> to vector<2x64xf32>
    %242 = vector.extract_strided_slice %238 {offsets = [0, 192], sizes = [2, 64], strides = [1, 1]} : vector<2x256xf32> to vector<2x64xf32>
    %243 = arith.mulf %240, %229 : vector<2x64xf32>
    %244 = arith.mulf %239, %241 : vector<2x64xf32>
    %245 = arith.addf %243, %244 : vector<2x64xf32>
    %246 = math.tanh %245 : vector<2x64xf32>
    %247 = arith.mulf %242, %246 : vector<2x64xf32>
    %c32_i32_53 = arith.constant 32 : i32
    %248 = vector.broadcast %c32_i32_53 : i32 to vector<1x64xi32>
    %249 = arith.cmpi slt, %186, %248 : vector<1x64xi32>
    %c1_i32_54 = arith.constant 1 : i32
    %c6_i32 = arith.constant 6 : i32
    %250 = vector.broadcast %c1_i32_54 : i32 to vector<1x64xi32>
    %251 = vector.broadcast %c6_i32 : i32 to vector<1x64xi32>
    %252 = arith.select %249, %250, %251 : vector<1x64xi1>, vector<1x64xi32>
    %253 = vector.broadcast %185 : vector<2x1xi32> to vector<2x64xi32>
    %254 = vector.broadcast %252 : vector<1x64xi32> to vector<2x64xi32>
    %255 = arith.cmpi sgt, %253, %254 : vector<2x64xi32>
    %256 = arith.select %255, %247, %228 : vector<2x64xi1>, vector<2x64xf32>
    %257 = arith.select %255, %245, %229 : vector<2x64xi1>, vector<2x64xf32>
    %cst_55 = arith.constant dense<0.000000e+00> : vector<2x256xf32>
    %258 = tpu.matmul %256, %199, %cst_55 {dimension_numbers = #tpu.dot_dimension_numbers<[1], [0], [0], [1], [0, 0, 1, 1], [], []>} : vector<2x64xf32>, vector<64x256xf32>, vector<2x256xf32> -> vector<2x256xf32>
    %259 = arith.addf %133, %258 : vector<2x256xf32>
    %260 = vector.broadcast %195 : vector<1x256xf32> to vector<2x256xf32>
    %261 = arith.mulf %259, %260 : vector<2x256xf32>
    %262 = math.tanh %261 : vector<2x256xf32>
    %263 = vector.broadcast %195 : vector<1x256xf32> to vector<2x256xf32>
    %264 = arith.mulf %262, %263 : vector<2x256xf32>
    %265 = vector.broadcast %198 : vector<1x256xf32> to vector<2x256xf32>
    %266 = arith.addf %264, %265 : vector<2x256xf32>
    %267 = vector.extract_strided_slice %266 {offsets = [0, 0], sizes = [2, 64], strides = [1, 1]} : vector<2x256xf32> to vector<2x64xf32>
    %268 = vector.extract_strided_slice %266 {offsets = [0, 64], sizes = [2, 64], strides = [1, 1]} : vector<2x256xf32> to vector<2x64xf32>
    %269 = vector.extract_strided_slice %266 {offsets = [0, 128], sizes = [2, 64], strides = [1, 1]} : vector<2x256xf32> to vector<2x64xf32>
    %270 = vector.extract_strided_slice %266 {offsets = [0, 192], sizes = [2, 64], strides = [1, 1]} : vector<2x256xf32> to vector<2x64xf32>
    %271 = arith.mulf %268, %257 : vector<2x64xf32>
    %272 = arith.mulf %267, %269 : vector<2x64xf32>
    %273 = arith.addf %271, %272 : vector<2x64xf32>
    %274 = math.tanh %273 : vector<2x64xf32>
    %275 = arith.mulf %270, %274 : vector<2x64xf32>
    %c32_i32_56 = arith.constant 32 : i32
    %276 = vector.broadcast %c32_i32_56 : i32 to vector<1x64xi32>
    %277 = arith.cmpi slt, %186, %276 : vector<1x64xi32>
    %c2_i32_57 = arith.constant 2 : i32
    %c5_i32 = arith.constant 5 : i32
    %278 = vector.broadcast %c2_i32_57 : i32 to vector<1x64xi32>
    %279 = vector.broadcast %c5_i32 : i32 to vector<1x64xi32>
    %280 = arith.select %277, %278, %279 : vector<1x64xi1>, vector<1x64xi32>
    %281 = vector.broadcast %185 : vector<2x1xi32> to vector<2x64xi32>
    %282 = vector.broadcast %280 : vector<1x64xi32> to vector<2x64xi32>
    %283 = arith.cmpi sgt, %281, %282 : vector<2x64xi32>
    %284 = arith.select %283, %275, %256 : vector<2x64xi1>, vector<2x64xf32>
    %285 = arith.select %283, %273, %257 : vector<2x64xi1>, vector<2x64xf32>
    %cst_58 = arith.constant dense<0.000000e+00> : vector<2x256xf32>
    %286 = tpu.matmul %284, %199, %cst_58 {dimension_numbers = #tpu.dot_dimension_numbers<[1], [0], [0], [1], [0, 0, 1, 1], [], []>} : vector<2x64xf32>, vector<64x256xf32>, vector<2x256xf32> -> vector<2x256xf32>
    %287 = arith.addf %140, %286 : vector<2x256xf32>
    %288 = vector.broadcast %195 : vector<1x256xf32> to vector<2x256xf32>
    %289 = arith.mulf %287, %288 : vector<2x256xf32>
    %290 = math.tanh %289 : vector<2x256xf32>
    %291 = vector.broadcast %195 : vector<1x256xf32> to vector<2x256xf32>
    %292 = arith.mulf %290, %291 : vector<2x256xf32>
    %293 = vector.broadcast %198 : vector<1x256xf32> to vector<2x256xf32>
    %294 = arith.addf %292, %293 : vector<2x256xf32>
    %295 = vector.extract_strided_slice %294 {offsets = [0, 0], sizes = [2, 64], strides = [1, 1]} : vector<2x256xf32> to vector<2x64xf32>
    %296 = vector.extract_strided_slice %294 {offsets = [0, 64], sizes = [2, 64], strides = [1, 1]} : vector<2x256xf32> to vector<2x64xf32>
    %297 = vector.extract_strided_slice %294 {offsets = [0, 128], sizes = [2, 64], strides = [1, 1]} : vector<2x256xf32> to vector<2x64xf32>
    %298 = vector.extract_strided_slice %294 {offsets = [0, 192], sizes = [2, 64], strides = [1, 1]} : vector<2x256xf32> to vector<2x64xf32>
    %299 = arith.mulf %296, %285 : vector<2x64xf32>
    %300 = arith.mulf %295, %297 : vector<2x64xf32>
    %301 = arith.addf %299, %300 : vector<2x64xf32>
    %302 = math.tanh %301 : vector<2x64xf32>
    %303 = arith.mulf %298, %302 : vector<2x64xf32>
    %c32_i32_59 = arith.constant 32 : i32
    %304 = vector.broadcast %c32_i32_59 : i32 to vector<1x64xi32>
    %305 = arith.cmpi slt, %186, %304 : vector<1x64xi32>
    %c3_i32 = arith.constant 3 : i32
    %c4_i32 = arith.constant 4 : i32
    %306 = vector.broadcast %c3_i32 : i32 to vector<1x64xi32>
    %307 = vector.broadcast %c4_i32 : i32 to vector<1x64xi32>
    %308 = arith.select %305, %306, %307 : vector<1x64xi1>, vector<1x64xi32>
    %309 = vector.broadcast %185 : vector<2x1xi32> to vector<2x64xi32>
    %310 = vector.broadcast %308 : vector<1x64xi32> to vector<2x64xi32>
    %311 = arith.cmpi sgt, %309, %310 : vector<2x64xi32>
    %312 = arith.select %311, %303, %284 : vector<2x64xi1>, vector<2x64xf32>
    %313 = arith.select %311, %301, %285 : vector<2x64xi1>, vector<2x64xf32>
    %cst_60 = arith.constant dense<0.000000e+00> : vector<2x256xf32>
    %314 = tpu.matmul %312, %199, %cst_60 {dimension_numbers = #tpu.dot_dimension_numbers<[1], [0], [0], [1], [0, 0, 1, 1], [], []>} : vector<2x64xf32>, vector<64x256xf32>, vector<2x256xf32> -> vector<2x256xf32>
    %315 = arith.addf %147, %314 : vector<2x256xf32>
    %316 = vector.broadcast %195 : vector<1x256xf32> to vector<2x256xf32>
    %317 = arith.mulf %315, %316 : vector<2x256xf32>
    %318 = math.tanh %317 : vector<2x256xf32>
    %319 = vector.broadcast %195 : vector<1x256xf32> to vector<2x256xf32>
    %320 = arith.mulf %318, %319 : vector<2x256xf32>
    %321 = vector.broadcast %198 : vector<1x256xf32> to vector<2x256xf32>
    %322 = arith.addf %320, %321 : vector<2x256xf32>
    %323 = vector.extract_strided_slice %322 {offsets = [0, 0], sizes = [2, 64], strides = [1, 1]} : vector<2x256xf32> to vector<2x64xf32>
    %324 = vector.extract_strided_slice %322 {offsets = [0, 64], sizes = [2, 64], strides = [1, 1]} : vector<2x256xf32> to vector<2x64xf32>
    %325 = vector.extract_strided_slice %322 {offsets = [0, 128], sizes = [2, 64], strides = [1, 1]} : vector<2x256xf32> to vector<2x64xf32>
    %326 = vector.extract_strided_slice %322 {offsets = [0, 192], sizes = [2, 64], strides = [1, 1]} : vector<2x256xf32> to vector<2x64xf32>
    %327 = arith.mulf %324, %313 : vector<2x64xf32>
    %328 = arith.mulf %323, %325 : vector<2x64xf32>
    %329 = arith.addf %327, %328 : vector<2x64xf32>
    %330 = math.tanh %329 : vector<2x64xf32>
    %331 = arith.mulf %326, %330 : vector<2x64xf32>
    %c32_i32_61 = arith.constant 32 : i32
    %332 = vector.broadcast %c32_i32_61 : i32 to vector<1x64xi32>
    %333 = arith.cmpi slt, %186, %332 : vector<1x64xi32>
    %c4_i32_62 = arith.constant 4 : i32
    %c3_i32_63 = arith.constant 3 : i32
    %334 = vector.broadcast %c4_i32_62 : i32 to vector<1x64xi32>
    %335 = vector.broadcast %c3_i32_63 : i32 to vector<1x64xi32>
    %336 = arith.select %333, %334, %335 : vector<1x64xi1>, vector<1x64xi32>
    %337 = vector.broadcast %185 : vector<2x1xi32> to vector<2x64xi32>
    %338 = vector.broadcast %336 : vector<1x64xi32> to vector<2x64xi32>
    %339 = arith.cmpi sgt, %337, %338 : vector<2x64xi32>
    %340 = arith.select %339, %331, %312 : vector<2x64xi1>, vector<2x64xf32>
    %341 = arith.select %339, %329, %313 : vector<2x64xi1>, vector<2x64xf32>
    %cst_64 = arith.constant dense<0.000000e+00> : vector<2x256xf32>
    %342 = tpu.matmul %340, %199, %cst_64 {dimension_numbers = #tpu.dot_dimension_numbers<[1], [0], [0], [1], [0, 0, 1, 1], [], []>} : vector<2x64xf32>, vector<64x256xf32>, vector<2x256xf32> -> vector<2x256xf32>
    %343 = arith.addf %154, %342 : vector<2x256xf32>
    %344 = vector.broadcast %195 : vector<1x256xf32> to vector<2x256xf32>
    %345 = arith.mulf %343, %344 : vector<2x256xf32>
    %346 = math.tanh %345 : vector<2x256xf32>
    %347 = vector.broadcast %195 : vector<1x256xf32> to vector<2x256xf32>
    %348 = arith.mulf %346, %347 : vector<2x256xf32>
    %349 = vector.broadcast %198 : vector<1x256xf32> to vector<2x256xf32>
    %350 = arith.addf %348, %349 : vector<2x256xf32>
    %351 = vector.extract_strided_slice %350 {offsets = [0, 0], sizes = [2, 64], strides = [1, 1]} : vector<2x256xf32> to vector<2x64xf32>
    %352 = vector.extract_strided_slice %350 {offsets = [0, 64], sizes = [2, 64], strides = [1, 1]} : vector<2x256xf32> to vector<2x64xf32>
    %353 = vector.extract_strided_slice %350 {offsets = [0, 128], sizes = [2, 64], strides = [1, 1]} : vector<2x256xf32> to vector<2x64xf32>
    %354 = vector.extract_strided_slice %350 {offsets = [0, 192], sizes = [2, 64], strides = [1, 1]} : vector<2x256xf32> to vector<2x64xf32>
    %355 = arith.mulf %352, %341 : vector<2x64xf32>
    %356 = arith.mulf %351, %353 : vector<2x64xf32>
    %357 = arith.addf %355, %356 : vector<2x64xf32>
    %358 = math.tanh %357 : vector<2x64xf32>
    %359 = arith.mulf %354, %358 : vector<2x64xf32>
    %c32_i32_65 = arith.constant 32 : i32
    %360 = vector.broadcast %c32_i32_65 : i32 to vector<1x64xi32>
    %361 = arith.cmpi slt, %186, %360 : vector<1x64xi32>
    %c5_i32_66 = arith.constant 5 : i32
    %c2_i32_67 = arith.constant 2 : i32
    %362 = vector.broadcast %c5_i32_66 : i32 to vector<1x64xi32>
    %363 = vector.broadcast %c2_i32_67 : i32 to vector<1x64xi32>
    %364 = arith.select %361, %362, %363 : vector<1x64xi1>, vector<1x64xi32>
    %365 = vector.broadcast %185 : vector<2x1xi32> to vector<2x64xi32>
    %366 = vector.broadcast %364 : vector<1x64xi32> to vector<2x64xi32>
    %367 = arith.cmpi sgt, %365, %366 : vector<2x64xi32>
    %368 = arith.select %367, %359, %340 : vector<2x64xi1>, vector<2x64xf32>
    %369 = arith.select %367, %357, %341 : vector<2x64xi1>, vector<2x64xf32>
    %cst_68 = arith.constant dense<0.000000e+00> : vector<2x256xf32>
    %370 = tpu.matmul %368, %199, %cst_68 {dimension_numbers = #tpu.dot_dimension_numbers<[1], [0], [0], [1], [0, 0, 1, 1], [], []>} : vector<2x64xf32>, vector<64x256xf32>, vector<2x256xf32> -> vector<2x256xf32>
    %371 = arith.addf %161, %370 : vector<2x256xf32>
    %372 = vector.broadcast %195 : vector<1x256xf32> to vector<2x256xf32>
    %373 = arith.mulf %371, %372 : vector<2x256xf32>
    %374 = math.tanh %373 : vector<2x256xf32>
    %375 = vector.broadcast %195 : vector<1x256xf32> to vector<2x256xf32>
    %376 = arith.mulf %374, %375 : vector<2x256xf32>
    %377 = vector.broadcast %198 : vector<1x256xf32> to vector<2x256xf32>
    %378 = arith.addf %376, %377 : vector<2x256xf32>
    %379 = vector.extract_strided_slice %378 {offsets = [0, 0], sizes = [2, 64], strides = [1, 1]} : vector<2x256xf32> to vector<2x64xf32>
    %380 = vector.extract_strided_slice %378 {offsets = [0, 64], sizes = [2, 64], strides = [1, 1]} : vector<2x256xf32> to vector<2x64xf32>
    %381 = vector.extract_strided_slice %378 {offsets = [0, 128], sizes = [2, 64], strides = [1, 1]} : vector<2x256xf32> to vector<2x64xf32>
    %382 = vector.extract_strided_slice %378 {offsets = [0, 192], sizes = [2, 64], strides = [1, 1]} : vector<2x256xf32> to vector<2x64xf32>
    %383 = arith.mulf %380, %369 : vector<2x64xf32>
    %384 = arith.mulf %379, %381 : vector<2x64xf32>
    %385 = arith.addf %383, %384 : vector<2x64xf32>
    %386 = math.tanh %385 : vector<2x64xf32>
    %387 = arith.mulf %382, %386 : vector<2x64xf32>
    %c32_i32_69 = arith.constant 32 : i32
    %388 = vector.broadcast %c32_i32_69 : i32 to vector<1x64xi32>
    %389 = arith.cmpi slt, %186, %388 : vector<1x64xi32>
    %c6_i32_70 = arith.constant 6 : i32
    %c1_i32_71 = arith.constant 1 : i32
    %390 = vector.broadcast %c6_i32_70 : i32 to vector<1x64xi32>
    %391 = vector.broadcast %c1_i32_71 : i32 to vector<1x64xi32>
    %392 = arith.select %389, %390, %391 : vector<1x64xi1>, vector<1x64xi32>
    %393 = vector.broadcast %185 : vector<2x1xi32> to vector<2x64xi32>
    %394 = vector.broadcast %392 : vector<1x64xi32> to vector<2x64xi32>
    %395 = arith.cmpi sgt, %393, %394 : vector<2x64xi32>
    %396 = arith.select %395, %387, %368 : vector<2x64xi1>, vector<2x64xf32>
    %397 = arith.select %395, %385, %369 : vector<2x64xi1>, vector<2x64xf32>
    %cst_72 = arith.constant dense<0.000000e+00> : vector<2x256xf32>
    %398 = tpu.matmul %396, %199, %cst_72 {dimension_numbers = #tpu.dot_dimension_numbers<[1], [0], [0], [1], [0, 0, 1, 1], [], []>} : vector<2x64xf32>, vector<64x256xf32>, vector<2x256xf32> -> vector<2x256xf32>
    %399 = arith.addf %168, %398 : vector<2x256xf32>
    %400 = vector.broadcast %195 : vector<1x256xf32> to vector<2x256xf32>
    %401 = arith.mulf %399, %400 : vector<2x256xf32>
    %402 = math.tanh %401 : vector<2x256xf32>
    %403 = vector.broadcast %195 : vector<1x256xf32> to vector<2x256xf32>
    %404 = arith.mulf %402, %403 : vector<2x256xf32>
    %405 = vector.broadcast %198 : vector<1x256xf32> to vector<2x256xf32>
    %406 = arith.addf %404, %405 : vector<2x256xf32>
    %407 = vector.extract_strided_slice %406 {offsets = [0, 0], sizes = [2, 64], strides = [1, 1]} : vector<2x256xf32> to vector<2x64xf32>
    %408 = vector.extract_strided_slice %406 {offsets = [0, 64], sizes = [2, 64], strides = [1, 1]} : vector<2x256xf32> to vector<2x64xf32>
    %409 = vector.extract_strided_slice %406 {offsets = [0, 128], sizes = [2, 64], strides = [1, 1]} : vector<2x256xf32> to vector<2x64xf32>
    %410 = vector.extract_strided_slice %406 {offsets = [0, 192], sizes = [2, 64], strides = [1, 1]} : vector<2x256xf32> to vector<2x64xf32>
    %411 = arith.mulf %408, %397 : vector<2x64xf32>
    %412 = arith.mulf %407, %409 : vector<2x64xf32>
    %413 = arith.addf %411, %412 : vector<2x64xf32>
    %414 = math.tanh %413 : vector<2x64xf32>
    %415 = arith.mulf %410, %414 : vector<2x64xf32>
    %c32_i32_73 = arith.constant 32 : i32
    %416 = vector.broadcast %c32_i32_73 : i32 to vector<1x64xi32>
    %417 = arith.cmpi slt, %186, %416 : vector<1x64xi32>
    %c7_i32_74 = arith.constant 7 : i32
    %c0_i32_75 = arith.constant 0 : i32
    %418 = vector.broadcast %c7_i32_74 : i32 to vector<1x64xi32>
    %419 = vector.broadcast %c0_i32_75 : i32 to vector<1x64xi32>
    %420 = arith.select %417, %418, %419 : vector<1x64xi1>, vector<1x64xi32>
    %421 = vector.broadcast %185 : vector<2x1xi32> to vector<2x64xi32>
    %422 = vector.broadcast %420 : vector<1x64xi32> to vector<2x64xi32>
    %423 = arith.cmpi sgt, %421, %422 : vector<2x64xi32>
    %424 = arith.select %423, %415, %396 : vector<2x64xi1>, vector<2x64xf32>
    %c0_76 = arith.constant 0 : index
    %c0_77 = arith.constant 0 : index
    %425 = vector.load %arg10[%c0_76, %c0_77] : memref<64x32xf32, #tpu.memory_space<vmem>>, vector<64x32xf32>
    %cst_78 = arith.constant dense<0.000000e+00> : vector<2x32xf32>
    %426 = tpu.matmul %424, %425, %cst_78 {dimension_numbers = #tpu.dot_dimension_numbers<[1], [0], [0], [1], [0, 0, 1, 1], [], []>} : vector<2x64xf32>, vector<64x32xf32>, vector<2x32xf32> -> vector<2x32xf32>
    %c0_79 = arith.constant 0 : index
    %c0_80 = arith.constant 0 : index
    %427 = vector.load %arg11[%c0_79, %c0_80] : memref<1x32xf32, #tpu.memory_space<vmem>>, vector<1x32xf32>
    %428 = vector.broadcast %427 : vector<1x32xf32> to vector<2x32xf32>
    %429 = arith.addf %426, %428 : vector<2x32xf32>
    %430 = vector.extract_strided_slice %429 {offsets = [0, 0], sizes = [1, 32], strides = [1, 1]} : vector<2x32xf32> to vector<1x32xf32>
    %c0_81 = arith.constant 0 : index
    %c0_82 = arith.constant 0 : index
    %c0_83 = arith.constant 0 : index
    %431 = vector.load %arg12[%c0_81, %c0_82, %c0_83] : memref<2x1x32xf32, #tpu.memory_space<vmem>>, vector<1x1x32xf32>
    %432 = vector.shape_cast %431 : vector<1x1x32xf32> to vector<1x32xf32>
    %433 = vector.shape_cast %430 : vector<1x32xf32> to vector<1x1x32xf32>
    tpu.vector_store %arg12[%c0_81, %c0_82, %c0_83], %433 {strides = array<i32>} : memref<2x1x32xf32, #tpu.memory_space<vmem>>, vector<1x1x32xf32>,
    %434 = vector.extract_strided_slice %429 {offsets = [1, 0], sizes = [1, 32], strides = [1, 1]} : vector<2x32xf32> to vector<1x32xf32>
    %c1_84 = arith.constant 1 : index
    %c0_85 = arith.constant 0 : index
    %c0_86 = arith.constant 0 : index
    %435 = vector.load %arg12[%c1_84, %c0_85, %c0_86] : memref<2x1x32xf32, #tpu.memory_space<vmem>>, vector<1x1x32xf32>
    %436 = vector.shape_cast %435 : vector<1x1x32xf32> to vector<1x32xf32>
    %437 = vector.shape_cast %434 : vector<1x32xf32> to vector<1x1x32xf32>
    tpu.vector_store %arg12[%c1_84, %c0_85, %c0_86], %437 {strides = array<i32>} : memref<2x1x32xf32, #tpu.memory_space<vmem>>, vector<1x1x32xf32>,
    return
  }
  func.func @transform_0(%arg0: i32, %arg1: memref<4xi32, #tpu.memory_space<smem>>) -> (i32, i32, i32) {
    %c0_i32 = arith.constant 0 : i32
    %c0_i32_0 = arith.constant 0 : i32
    %c0_i32_1 = arith.constant 0 : i32
    return %arg0, %c0_i32, %c0_i32_0 : i32, i32, i32
  }
  func.func @transform_1(%arg0: i32, %arg1: memref<4xi32, #tpu.memory_space<smem>>) -> (i32, i32) {
    %c0_i32 = arith.constant 0 : i32
    %c0_i32_0 = arith.constant 0 : i32
    %c0_i32_1 = arith.constant 0 : i32
    return %c0_i32, %c0_i32_0 : i32, i32
  }
  func.func @transform_2(%arg0: i32, %arg1: memref<4xi32, #tpu.memory_space<smem>>) -> (i32, i32) {
    %c0_i32 = arith.constant 0 : i32
    %c0_i32_0 = arith.constant 0 : i32
    %c0_i32_1 = arith.constant 0 : i32
    return %c0_i32, %c0_i32_0 : i32, i32
  }
  func.func @transform_3(%arg0: i32, %arg1: memref<4xi32, #tpu.memory_space<smem>>) -> (i32, i32) {
    %c0_i32 = arith.constant 0 : i32
    %c0_i32_0 = arith.constant 0 : i32
    %c0_i32_1 = arith.constant 0 : i32
    return %c0_i32, %c0_i32_0 : i32, i32
  }
  func.func @transform_4(%arg0: i32, %arg1: memref<4xi32, #tpu.memory_space<smem>>) -> (i32, i32) {
    %c0_i32 = arith.constant 0 : i32
    %c0_i32_0 = arith.constant 0 : i32
    %c0_i32_1 = arith.constant 0 : i32
    return %c0_i32, %c0_i32_0 : i32, i32
  }
  func.func @transform_5(%arg0: i32, %arg1: memref<4xi32, #tpu.memory_space<smem>>) -> (i32, i32) {
    %c0_i32 = arith.constant 0 : i32
    %c0_i32_0 = arith.constant 0 : i32
    %c0_i32_1 = arith.constant 0 : i32
    return %c0_i32, %c0_i32_0 : i32, i32
  }
  func.func @transform_6(%arg0: i32, %arg1: memref<4xi32, #tpu.memory_space<smem>>) -> (i32, i32) {
    %c0_i32 = arith.constant 0 : i32
    %c0_i32_0 = arith.constant 0 : i32
    %c0_i32_1 = arith.constant 0 : i32
    return %c0_i32, %c0_i32_0 : i32, i32
  }
  func.func @transform_7(%arg0: i32, %arg1: memref<4xi32, #tpu.memory_space<smem>>) -> (i32, i32) {
    %c0_i32 = arith.constant 0 : i32
    %c0_i32_0 = arith.constant 0 : i32
    %c0_i32_1 = arith.constant 0 : i32
    return %c0_i32, %c0_i32_0 : i32, i32
  }
  func.func @transform_8(%arg0: i32, %arg1: memref<4xi32, #tpu.memory_space<smem>>) -> (i32, i32) {
    %c0_i32 = arith.constant 0 : i32
    %c0_i32_0 = arith.constant 0 : i32
    %c0_i32_1 = arith.constant 0 : i32
    return %c0_i32, %c0_i32_0 : i32, i32
  }
  func.func @transform_9(%arg0: i32, %arg1: memref<4xi32, #tpu.memory_space<smem>>) -> (i32, i32) {
    %c0_i32 = arith.constant 0 : i32
    %c0_i32_0 = arith.constant 0 : i32
    %c0_i32_1 = arith.constant 0 : i32
    return %c0_i32, %c0_i32_0 : i32, i32
  }
  func.func @transform_10(%arg0: i32, %arg1: memref<4xi32, #tpu.memory_space<smem>>) -> (i32, i32, i32) {
    %c0_i32 = arith.constant 0 : i32
    %c0_i32_0 = arith.constant 0 : i32
    %c0_i32_1 = arith.constant 0 : i32
    return %arg0, %c0_i32, %c0_i32_0 : i32, i32, i32
  }
}

</mosaic_0001>

<llo_original>
// kernel: tpu_custom_call.1
$region0: #{tpu_custom_call.1}
  #allocation0 [shape = 'u32[]', space=smem, size = 0x4, offset = 0x4, fixed_abs, tag = 'smem constant byte address 0x4 - core index']
  #allocation1 [shape = 'u32[144,128]{1,0:T(1,128)}', space=vmem, size = 0x12000, scoped, tag = 'internal scratch']
  #allocation2 [shape = 's32[1]{0}', space=sflag, size = 0x4, scoped, tag = 'scoped memory for tpu_custom_call.1']
  #allocation3 [shape = 'u8[512]{0}', space=smem, size = 0x200, scoped, tag = 'prefetched SMEM operand 0']
  %s0 = inlined_call_operand.vmem [shape: s32[4], index: 0, kind: input, shape index: {}]
  %s1 = inlined_call_operand.vmem [shape: s32[4,64,1], index: 1, kind: input, shape index: {}]
  %s2 = inlined_call_operand.vmem [shape: f32[24,32], index: 2, kind: input, shape index: {}]
  %s3 = inlined_call_operand.vmem [shape: f32[416,32], index: 3, kind: input, shape index: {}]
  %s4 = inlined_call_operand.vmem [shape: f32[1,32], index: 4, kind: input, shape index: {}]
  %s5 = inlined_call_operand.vmem [shape: f32[32,256], index: 5, kind: input, shape index: {}]
  %s6 = inlined_call_operand.vmem [shape: f32[32,256], index: 6, kind: input, shape index: {}]
  %s7 = inlined_call_operand.vmem [shape: f32[64,256], index: 7, kind: input, shape index: {}]
  %s8 = inlined_call_operand.vmem [shape: f32[1,256], index: 8, kind: input, shape index: {}]
  %s9 = inlined_call_operand.vmem [shape: f32[64,32], index: 9, kind: input, shape index: {}]
  %s10 = inlined_call_operand.vmem [shape: f32[1,32], index: 10, kind: input, shape index: {}]
  %s11 = inlined_call_operand.hbm [shape: f32[4,1,32], index: 11, kind: output, shape index: {}]
  %s12 = sld [smem:[#allocation0]]
  $region73: #{tpu_custom_call.1} parent=0
    _
  %s14 = ssub.s32 1, %s12
  %s15 = scalar_select 0, %s14, %s12
  %s16 = sshll.u32 %s0, 4
  %s17 = int_to_ptr.vmem [resolvable:$true] %s16
  %19 = dma.vmem_to_smem %s17, 16, [#allocation3], [#allocation2]
  %20 = dma.done [#allocation2], 16
  %21 = sfence
  $region1: #{tpu_custom_call.1} parent=0
    #allocation4 [shape = 'u8[2048]{0}', space=vmem, size = 0x800, scoped, tag = 'output window, operand 0']
    #allocation5 [shape = 's32[2]{0}', space=sflag, size = 0x8, scoped, tag = 'scoped memory for tpu_custom_call.1']
    %22 = vsyncpa [#allocation5], 0
    %s23 = scalar_lea.sflag [#allocation5], 1
    %24 = vsyncpa %s23, 0
    loop: start=0, step=1, limit=4
    $region2: #{tpu_custom_call.1} parent=1 // loop_pre_header
      _
    $region3: #{tpu_custom_call.1} parent=1 // loop_header
      %s26 = sphi 0, %s30
      %p27 = scmp.ge.s32.totalorder %s26, 4
      %s36 = sphi 0, %s38
      %s39 = sphi 0, %s36
      %s40 = sphi 0, %s39
      %s56 = sphi 0, %s40
      %s60 = sphi 0, %s60
      %s62 = sphi 0, %s60
      %s63 = sphi 0, %s62
      %s77 = sphi 0, %s63
      %s81 = sphi 0, %s81
      %s83 = sphi 0, %s81
      %s84 = sphi 0, %s83
      %s98 = sphi 0, %s84
      %s102 = sphi 0, %s102
      %s104 = sphi 0, %s102
      %s105 = sphi 0, %s104
      %s119 = sphi 0, %s105
      %s123 = sphi 0, %s123
      %s125 = sphi 0, %s123
      %s126 = sphi 0, %s125
      %s140 = sphi 0, %s126
      %s144 = sphi 0, %s144
      %s146 = sphi 0, %s144
      %s147 = sphi 0, %s146
      %s161 = sphi 0, %s147
      %s165 = sphi 0, %s165
      %s167 = sphi 0, %s165
      %s168 = sphi 0, %s167
      %s182 = sphi 0, %s168
      %s186 = sphi 0, %s186
      %s188 = sphi 0, %s186
      %s189 = sphi 0, %s188
      %s203 = sphi 0, %s189
      %s207 = sphi 0, %s207
      %s209 = sphi 0, %s207
      %s210 = sphi 0, %s209
      %s224 = sphi 0, %s210
      %s228 = sphi 0, %s228
      %s230 = sphi 0, %s228
      %s231 = sphi 0, %s230
      %s245 = sphi 0, %s231
      %s251 = sphi 0, %s253
      %s254 = sphi 0, %s251
      %s255 = sphi 0, %s254
      %s271 = sphi 0, %s255
    $region4: #{tpu_custom_call.1} parent=1 // loop_header_branch
      %29 = sbr.rel (%p27) target = $region8
    $region5: #{tpu_custom_call.1} parent=1 // loop_body
      %s31 = ssub.s32 %s26, 1
      %s32 = ssub.s32 %s26, 2
      %s33 = sadd.s32 %s26, 1
      %s34 = ssub.s32 %s26, %s33
      %p35 = scmp.eq.s32.totalorder %s34, 0
      %s37 = sadd.s32 %s36, 1
      %s38 = scalar_select %p35, %s36, %s37
      %p41 = pneg %p35
      %p42 = scmp.eq.s32.totalorder %s26, 1
      %p43 = por %p41, %p42
      %p44 = scmp.ne.s32.totalorder %s36, %s39
      %p45 = scmp.eq.s32.totalorder %s26, 0
      %p46 = por %p44, %p45
      %p47 = scmp.ne.s32.totalorder %s36, %s39
      %p48 = scmp.eq.s32.totalorder %s31, 1
      %p49 = por %p47, %p48
      %p50 = scmp.ne.s32.totalorder %s39, %s40
      %p51 = scmp.eq.s32.totalorder %s31, 0
      %p52 = por %p50, %p51
      %p53 = scmp.ne.s32.totalorder %s39, %s40
      %p54 = scmp.eq.s32.totalorder %s32, 1
      %p55 = por %p53, %p54
      %p57 = scmp.ne.s32.totalorder %s40, %s56
      %p58 = scmp.eq.s32.totalorder %s32, 0
      %p59 = por %p57, %p58
      %s61 = sadd.s32 %s60, 1
      %p64 = scmp.eq.s32.totalorder %s26, 1
      %p65 = scmp.ne.s32.totalorder %s60, %s62
      %p66 = scmp.eq.s32.totalorder %s26, 0
      %p67 = por %p65, %p66
      %p68 = scmp.ne.s32.totalorder %s60, %s62
      %p69 = scmp.eq.s32.totalorder %s31, 1
      %p70 = por %p68, %p69
      %p71 = scmp.ne.s32.totalorder %s62, %s63
      %p72 = scmp.eq.s32.totalorder %s31, 0
      %p73 = por %p71, %p72
      %p74 = scmp.ne.s32.totalorder %s62, %s63
      %p75 = scmp.eq.s32.totalorder %s32, 1
      %p76 = por %p74, %p75
      %p78 = scmp.ne.s32.totalorder %s63, %s77
      %p79 = scmp.eq.s32.totalorder %s32, 0
      %p80 = por %p78, %p79
      %s82 = sadd.s32 %s81, 1
      %p85 = scmp.eq.s32.totalorder %s26, 1
      %p86 = scmp.ne.s32.totalorder %s81, %s83
      %p87 = scmp.eq.s32.totalorder %s26, 0
      %p88 = por %p86, %p87
      %p89 = scmp.ne.s32.totalorder %s81, %s83
      %p90 = scmp.eq.s32.totalorder %s31, 1
      %p91 = por %p89, %p90
      %p92 = scmp.ne.s32.totalorder %s83, %s84
      %p93 = scmp.eq.s32.totalorder %s31, 0
      %p94 = por %p92, %p93
      %p95 = scmp.ne.s32.totalorder %s83, %s84
      %p96 = scmp.eq.s32.totalorder %s32, 1
      %p97 = por %p95, %p96
      %p99 = scmp.ne.s32.totalorder %s84, %s98
      %p100 = scmp.eq.s32.totalorder %s32, 0
      %p101 = por %p99, %p100
      %s103 = sadd.s32 %s102, 1
      %p106 = scmp.eq.s32.totalorder %s26, 1
      %p107 = scmp.ne.s32.totalorder %s102, %s104
      %p108 = scmp.eq.s32.totalorder %s26, 0
      %p109 = por %p107, %p108
      %p110 = scmp.ne.s32.totalorder %s102, %s104
      %p111 = scmp.eq.s32.totalorder %s31, 1
      %p112 = por %p110, %p111
      %p113 = scmp.ne.s32.totalorder %s104, %s105
      %p114 = scmp.eq.s32.totalorder %s31, 0
      %p115 = por %p113, %p114
      %p116 = scmp.ne.s32.totalorder %s104, %s105
      %p117 = scmp.eq.s32.totalorder %s32, 1
      %p118 = por %p116, %p117
      %p120 = scmp.ne.s32.totalorder %s105, %s119
      %p121 = scmp.eq.s32.totalorder %s32, 0
      %p122 = por %p120, %p121
      %s124 = sadd.s32 %s123, 1
      %p127 = scmp.eq.s32.totalorder %s26, 1
      %p128 = scmp.ne.s32.totalorder %s123, %s125
      %p129 = scmp.eq.s32.totalorder %s26, 0
      %p130 = por %p128, %p129
      %p131 = scmp.ne.s32.totalorder %s123, %s125
      %p132 = scmp.eq.s32.totalorder %s31, 1
      %p133 = por %p131, %p132
      %p134 = scmp.ne.s32.totalorder %s125, %s126
      %p135 = scmp.eq.s32.totalorder %s31, 0
      %p136 = por %p134, %p135
      %p137 = scmp.ne.s32.totalorder %s125, %s126
      %p138 = scmp.eq.s32.totalorder %s32, 1
      %p139 = por %p137, %p138
      %p141 = scmp.ne.s32.totalorder %s126, %s140
      %p142 = scmp.eq.s32.totalorder %s32, 0
      %p143 = por %p141, %p142
      %s145 = sadd.s32 %s144, 1
      %p148 = scmp.eq.s32.totalorder %s26, 1
      %p149 = scmp.ne.s32.totalorder %s144, %s146
      %p150 = scmp.eq.s32.totalorder %s26, 0
      %p151 = por %p149, %p150
      %p152 = scmp.ne.s32.totalorder %s144, %s146
      %p153 = scmp.eq.s32.totalorder %s31, 1
      %p154 = por %p152, %p153
      %p155 = scmp.ne.s32.totalorder %s146, %s147
      %p156 = scmp.eq.s32.totalorder %s31, 0
      %p157 = por %p155, %p156
      %p158 = scmp.ne.s32.totalorder %s146, %s147
      %p159 = scmp.eq.s32.totalorder %s32, 1
      %p160 = por %p158, %p159
      %p162 = scmp.ne.s32.totalorder %s147, %s161
      %p163 = scmp.eq.s32.totalorder %s32, 0
      %p164 = por %p162, %p163
      %s166 = sadd.s32 %s165, 1
      %p169 = scmp.eq.s32.totalorder %s26, 1
      %p170 = scmp.ne.s32.totalorder %s165, %s167
      %p171 = scmp.eq.s32.totalorder %s26, 0
      %p172 = por %p170, %p171
      %p173 = scmp.ne.s32.totalorder %s165, %s167
      %p174 = scmp.eq.s32.totalorder %s31, 1
      %p175 = por %p173, %p174
      %p176 = scmp.ne.s32.totalorder %s167, %s168
      %p177 = scmp.eq.s32.totalorder %s31, 0
      %p178 = por %p176, %p177
      %p179 = scmp.ne.s32.totalorder %s167, %s168
      %p180 = scmp.eq.s32.totalorder %s32, 1
      %p181 = por %p179, %p180
      %p183 = scmp.ne.s32.totalorder %s168, %s182
      %p184 = scmp.eq.s32.totalorder %s32, 0
      %p185 = por %p183, %p184
      %s187 = sadd.s32 %s186, 1
      %p190 = scmp.eq.s32.totalorder %s26, 1
      %p191 = scmp.ne.s32.totalorder %s186, %s188
      %p192 = scmp.eq.s32.totalorder %s26, 0
      %p193 = por %p191, %p192
      %p194 = scmp.ne.s32.totalorder %s186, %s188
      %p195 = scmp.eq.s32.totalorder %s31, 1
      %p196 = por %p194, %p195
      %p197 = scmp.ne.s32.totalorder %s188, %s189
      %p198 = scmp.eq.s32.totalorder %s31, 0
      %p199 = por %p197, %p198
      %p200 = scmp.ne.s32.totalorder %s188, %s189
      %p201 = scmp.eq.s32.totalorder %s32, 1
      %p202 = por %p200, %p201
      %p204 = scmp.ne.s32.totalorder %s189, %s203
      %p205 = scmp.eq.s32.totalorder %s32, 0
      %p206 = por %p204, %p205
      %s208 = sadd.s32 %s207, 1
      %p211 = scmp.eq.s32.totalorder %s26, 1
      %p212 = scmp.ne.s32.totalorder %s207, %s209
      %p213 = scmp.eq.s32.totalorder %s26, 0
      %p214 = por %p212, %p213
      %p215 = scmp.ne.s32.totalorder %s207, %s209
      %p216 = scmp.eq.s32.totalorder %s31, 1
      %p217 = por %p215, %p216
      %p218 = scmp.ne.s32.totalorder %s209, %s210
      %p219 = scmp.eq.s32.totalorder %s31, 0
      %p220 = por %p218, %p219
      %p221 = scmp.ne.s32.totalorder %s209, %s210
      %p222 = scmp.eq.s32.totalorder %s32, 1
      %p223 = por %p221, %p222
      %p225 = scmp.ne.s32.totalorder %s210, %s224
      %p226 = scmp.eq.s32.totalorder %s32, 0
      %p227 = por %p225, %p226
      %s229 = sadd.s32 %s228, 1
      %p232 = scmp.eq.s32.totalorder %s26, 1
      %p233 = scmp.ne.s32.totalorder %s228, %s230
      %p234 = scmp.eq.s32.totalorder %s26, 0
      %p235 = por %p233, %p234
      %p236 = scmp.ne.s32.totalorder %s228, %s230
      %p237 = scmp.eq.s32.totalorder %s31, 1
      %p238 = por %p236, %p237
      %p239 = scmp.ne.s32.totalorder %s230, %s231
      %p240 = scmp.eq.s32.totalorder %s31, 0
      %p241 = por %p239, %p240
      %p242 = scmp.ne.s32.totalorder %s230, %s231
      %p243 = scmp.eq.s32.totalorder %s32, 1
      %p244 = por %p242, %p243
      %p246 = scmp.ne.s32.totalorder %s231, %s245
      %p247 = scmp.eq.s32.totalorder %s32, 0
      %p248 = por %p246, %p247
      %s249 = ssub.s32 %s26, %s33
      %p250 = scmp.eq.s32.totalorder %s249, 0
      %s252 = sadd.s32 %s251, 1
      %s253 = scalar_select %p250, %s251, %s252
      %p256 = pneg %p250
      %p257 = scmp.eq.s32.totalorder %s26, 1
      %p258 = por %p256, %p257
      %p259 = scmp.ne.s32.totalorder %s251, %s254
      %p260 = scmp.eq.s32.totalorder %s26, 0
      %p261 = por %p259, %p260
      %p262 = scmp.ne.s32.totalorder %s251, %s254
      %p263 = scmp.eq.s32.totalorder %s31, 1
      %p264 = por %p262, %p263
      %p265 = scmp.ne.s32.totalorder %s254, %s255
      %p266 = scmp.eq.s32.totalorder %s31, 0
      %p267 = por %p265, %p266
      %p268 = scmp.ne.s32.totalorder %s254, %s255
      %p269 = scmp.eq.s32.totalorder %s32, 1
      %p270 = por %p268, %p269
      %p272 = scmp.ne.s32.totalorder %s255, %s271
      %p273 = scmp.eq.s32.totalorder %s32, 0
      %p274 = por %p272, %p273
      %p275 = scmp.le.s32.totalorder 1, %s26
      %p276 = scmp.lt.s32.totalorder %s26, 3
      %p277 = pnand %p275, %p276
      %p278 = pneg %p277
      // Predicated region
      $region9: #{tpu_custom_call.1} parent=5 // pred_check
        _
      $region10: #{tpu_custom_call.1} parent=5 // pred_check_branch
        %280 = sbr.rel (%p277) target = $region12
      $region11: #{tpu_custom_call.1} parent=5 // pred_region
        %s281 = ssub.s32 %s26, 1
        // Predicated region
        $region13: #{tpu_custom_call.1} parent=11 // pred_check
          %p282 = pneg %p73
        $region14: #{tpu_custom_call.1} parent=11 // pred_check_branch
          %284 = sbr.rel (%p282) target = $region16
        $region15: #{tpu_custom_call.1} parent=11 // pred_region
          _
        $region16: #{tpu_custom_call.1} parent=11 // pred_fallthru
          _
        // Predicated region
        $region17: #{tpu_custom_call.1} parent=11 // pred_check
          %p285 = pneg %p94
        $region18: #{tpu_custom_call.1} parent=11 // pred_check_branch
          %287 = sbr.rel (%p285) target = $region20
        $region19: #{tpu_custom_call.1} parent=11 // pred_region
          _
        $region20: #{tpu_custom_call.1} parent=11 // pred_fallthru
          _
        // Predicated region
        $region21: #{tpu_custom_call.1} parent=11 // pred_check
          %p288 = pneg %p115
        $region22: #{tpu_custom_call.1} parent=11 // pred_check_branch
          %290 = sbr.rel (%p288) target = $region24
        $region23: #{tpu_custom_call.1} parent=11 // pred_region
          _
        $region24: #{tpu_custom_call.1} parent=11 // pred_fallthru
          _
        // Predicated region
        $region25: #{tpu_custom_call.1} parent=11 // pred_check
          %p291 = pneg %p136
        $region26: #{tpu_custom_call.1} parent=11 // pred_check_branch
          %293 = sbr.rel (%p291) target = $region28
        $region27: #{tpu_custom_call.1} parent=11 // pred_region
          _
        $region28: #{tpu_custom_call.1} parent=11 // pred_fallthru
          _
        // Predicated region
        $region29: #{tpu_custom_call.1} parent=11 // pred_check
          %p294 = pneg %p157
        $region30: #{tpu_custom_call.1} parent=11 // pred_check_branch
          %296 = sbr.rel (%p294) target = $region32
        $region31: #{tpu_custom_call.1} parent=11 // pred_region
          _
        $region32: #{tpu_custom_call.1} parent=11 // pred_fallthru
          _
        // Predicated region
        $region33: #{tpu_custom_call.1} parent=11 // pred_check
          %p297 = pneg %p178
        $region34: #{tpu_custom_call.1} parent=11 // pred_check_branch
          %299 = sbr.rel (%p297) target = $region36
        $region35: #{tpu_custom_call.1} parent=11 // pred_region
          _
        $region36: #{tpu_custom_call.1} parent=11 // pred_fallthru
          _
        // Predicated region
        $region37: #{tpu_custom_call.1} parent=11 // pred_check
          %p300 = pneg %p199
        $region38: #{tpu_custom_call.1} parent=11 // pred_check_branch
          %302 = sbr.rel (%p300) target = $region40
        $region39: #{tpu_custom_call.1} parent=11 // pred_region
          _
        $region40: #{tpu_custom_call.1} parent=11 // pred_fallthru
          _
        // Predicated region
        $region41: #{tpu_custom_call.1} parent=11 // pred_check
          %p303 = pneg %p220
        $region42: #{tpu_custom_call.1} parent=11 // pred_check_branch
          %305 = sbr.rel (%p303) target = $region44
        $region43: #{tpu_custom_call.1} parent=11 // pred_region
          _
        $region44: #{tpu_custom_call.1} parent=11 // pred_fallthru
          _
        // Predicated region
        $region45: #{tpu_custom_call.1} parent=11 // pred_check
          %p306 = pneg %p241
        $region46: #{tpu_custom_call.1} parent=11 // pred_check_branch
          %308 = sbr.rel (%p306) target = $region48
        $region47: #{tpu_custom_call.1} parent=11 // pred_region
          _
        $region48: #{tpu_custom_call.1} parent=11 // pred_fallthru
          _
      $region12: #{tpu_custom_call.1} parent=5 // pred_fallthru
        _
      %p309 = scmp.lt.s32.totalorder %s26, 2
      // Predicated region
      $region49: #{tpu_custom_call.1} parent=5 // pred_check
        %p310 = pneg %p309
      $region50: #{tpu_custom_call.1} parent=5 // pred_check_branch
        %312 = sbr.rel (%p310) target = $region52
      $region51: #{tpu_custom_call.1} parent=5 // pred_region
        // Predicated region
        $region53: #{tpu_custom_call.1} parent=51 // pred_check
          %p313 = pneg %p46
        $region54: #{tpu_custom_call.1} parent=51 // pred_check_branch
          %315 = sbr.rel (%p313) target = $region56
        $region55: #{tpu_custom_call.1} parent=51 // pred_region
          %s316 = smul.u32 2, %s26
          %p317 = scmp.lt.s32.totalorder %s316, 3
          %s318 = scalar_select %p317, %s316, 3
          %s319 = smul.addr %s318, 8
          %s320 = smul.addr %s319, 8
          %s321 = scalar_lea.vmem %s1, %s320
          %s322 = smul.u32 2, %s26
        $region56: #{tpu_custom_call.1} parent=51 // pred_fallthru
          _
      $region52: #{tpu_custom_call.1} parent=5 // pred_fallthru
        _
      %p323 = scmp.le.s32.totalorder 1, %s26
      %p324 = scmp.lt.s32.totalorder %s26, 3
      %p325 = pnand %p323, %p324
      %p326 = pneg %p325
      // Predicated region
      $region57: #{tpu_custom_call.1} parent=5 // pred_check
        _
      $region58: #{tpu_custom_call.1} parent=5 // pred_check_branch
        %328 = sbr.rel (%p325) target = $region60
      $region59: #{tpu_custom_call.1} parent=5 // pred_region
        %s329 = ssub.s32 %s26, 1
        %s330 = smul.u32 2, %s31
        %p331 = scmp.lt.s32.totalorder %s330, 3
        %s332 = scalar_select %p331, %s330, 3
        %s333 = smul.addr %s332, 8
        %s334 = smul.addr %s333, 8
        %s335 = scalar_lea.vmem %s1, %s334
        %p336 = pneg %p52
        %p337 = pneg %p49
        %p338 = pneg %p73
        %p339 = pneg %p70
        %p340 = pneg %p94
        %p341 = pneg %p91
        %p342 = pneg %p115
        %p343 = pneg %p112
        %p344 = pneg %p136
        %p345 = pneg %p133
        %p346 = pneg %p157
        %p347 = pneg %p154
        %p348 = pneg %p178
        %p349 = pneg %p175
        %p350 = pneg %p199
        %p351 = pneg %p196
        %p352 = pneg %p220
        %p353 = pneg %p217
        %p354 = pneg %p241
        %p355 = pneg %p238
        %p356 = pneg %p267
        %p357 = pneg %p264
        %s358 = sand.u32 %s254, 1
        %s359 = scalar_lea.sflag [#allocation5], %s358
        %s360 = sand.u32 %s254, 1
        %s361 = smul.addr %s360, 2
        %s362 = scalar_lea.vmem [#allocation4], %s361
        %s363 = smul.u32 2, %s31
        %p364 = scmp.lt.s32.totalorder %s363, 3
        %s365 = scalar_select %p364, %s363, 3
        %s366 = smul.addr %s365, 8
        %s367 = smul.addr %s366, 8
        %s368 = scalar_lea.vmem %s1, %s367
        %s369 = smul.u32 2, %s31
        %s370 = smul.u32 2, %s31
        %v371 = vld [vmem:[%s2] sm:$0xff]
        %v372 = vld [vmem:[%s2 + $0x8] sm:$0xff]
        %v373 = vld [vmem:[%s2 + $0x10] sm:$0xff]
        %v374 = vld [vmem:[%s3] sm:$0xff]
        %v375 = vld [vmem:[%s3 + $0x8] sm:$0xff]
        %v376 = vld [vmem:[%s3 + $0x10] sm:$0xff]
        %v377 = vld [vmem:[%s3 + $0x18] sm:$0xff]
        %v378 = vld [vmem:[%s3 + $0x20] sm:$0xff]
        %v379 = vld [vmem:[%s3 + $0x28] sm:$0xff]
        %v380 = vld [vmem:[%s3 + $0x30] sm:$0xff]
        %v381 = vld [vmem:[%s3 + $0x38] sm:$0xff]
        %v382 = vld [vmem:[%s3 + $0x40] sm:$0xff]
        %v383 = vld [vmem:[%s3 + $0x48] sm:$0xff]
        %v384 = vld [vmem:[%s3 + $0x50] sm:$0xff]
        %v385 = vld [vmem:[%s3 + $0x58] sm:$0xff]
        %v386 = vld [vmem:[%s3 + $0x60] sm:$0xff]
        %v387 = vld [vmem:[%s3 + $0x68] sm:$0xff]
        %v388 = vld [vmem:[%s3 + $0x70] sm:$0xff]
        %v389 = vld [vmem:[%s3 + $0x78] sm:$0xff]
        %v390 = vld [vmem:[%s3 + $0x80] sm:$0xff]
        %v391 = vld [vmem:[%s3 + $0x88] sm:$0xff]
        %v392 = vld [vmem:[%s3 + $0x90] sm:$0xff]
        %v393 = vld [vmem:[%s3 + $0x98] sm:$0xff]
        %v394 = vld [vmem:[%s3 + $0xa0] sm:$0xff]
        %v395 = vld [vmem:[%s3 + $0xa8] sm:$0xff]
        %v396 = vld [vmem:[%s3 + $0xb0] sm:$0xff]
        %v397 = vld [vmem:[%s3 + $0xb8] sm:$0xff]
        %v398 = vld [vmem:[%s3 + $0xc0] sm:$0xff]
        %v399 = vld [vmem:[%s3 + $0xc8] sm:$0xff]
        %v400 = vld [vmem:[%s3 + $0xd0] sm:$0xff]
        %v401 = vld [vmem:[%s3 + $0xd8] sm:$0xff]
        %v402 = vld [vmem:[%s3 + $0xe0] sm:$0xff]
        %v403 = vld [vmem:[%s3 + $0xe8] sm:$0xff]
        %v404 = vld [vmem:[%s3 + $0xf0] sm:$0xff]
        %v405 = vld [vmem:[%s3 + $0xf8] sm:$0xff]
        %v406 = vld [vmem:[%s3 + $0x100] sm:$0xff]
        %v407 = vld [vmem:[%s3 + $0x108] sm:$0xff]
        %v408 = vld [vmem:[%s3 + $0x110] sm:$0xff]
        %v409 = vld [vmem:[%s3 + $0x118] sm:$0xff]
        %v410 = vld [vmem:[%s3 + $0x120] sm:$0xff]
        %v411 = vld [vmem:[%s3 + $0x128] sm:$0xff]
        %v412 = vld [vmem:[%s3 + $0x130] sm:$0xff]
        %v413 = vld [vmem:[%s3 + $0x138] sm:$0xff]
        %v414 = vld [vmem:[%s3 + $0x140] sm:$0xff]
        %v415 = vld [vmem:[%s3 + $0x148] sm:$0xff]
        %v416 = vld [vmem:[%s3 + $0x150] sm:$0xff]
        %v417 = vld [vmem:[%s3 + $0x158] sm:$0xff]
        %v418 = vld [vmem:[%s3 + $0x160] sm:$0xff]
        %v419 = vld [vmem:[%s3 + $0x168] sm:$0xff]
        %v420 = vld [vmem:[%s3 + $0x170] sm:$0xff]
        %v421 = vld [vmem:[%s3 + $0x178] sm:$0xff]
        %v422 = vld [vmem:[%s3 + $0x180] sm:$0xff]
        %v423 = vld [vmem:[%s3 + $0x188] sm:$0xff]
        %v424 = vld [vmem:[%s3 + $0x190] sm:$0xff]
        %v425 = vld [vmem:[%s3 + $0x198] sm:$0xff]
        %v426 = vld [vmem:[%s4] sm:$0x1]
        %v427 = vld [vmem:[%s5] sm:$0xff]
        %v428 = vld [vmem:[%s5 + $0x8] sm:$0xff]
        %v429 = vld [vmem:[%s5 + $0x10] sm:$0xff]
        %v430 = vld [vmem:[%s5 + $0x18] sm:$0xff]
        %v431 = vld [vmem:[%s5 + $0x20] sm:$0xff]
        %v432 = vld [vmem:[%s5 + $0x28] sm:$0xff]
        %v433 = vld [vmem:[%s5 + $0x30] sm:$0xff]
        %v434 = vld [vmem:[%s5 + $0x38] sm:$0xff]
        %v435 = vld [vmem:[%s6] sm:$0xff]
        %v436 = vld [vmem:[%s6 + $0x8] sm:$0xff]
        %v437 = vld [vmem:[%s6 + $0x10] sm:$0xff]
        %v438 = vld [vmem:[%s6 + $0x18] sm:$0xff]
        %v439 = vld [vmem:[%s6 + $0x20] sm:$0xff]
        %v440 = vld [vmem:[%s6 + $0x28] sm:$0xff]
        %v441 = vld [vmem:[%s6 + $0x30] sm:$0xff]
        %v442 = vld [vmem:[%s6 + $0x38] sm:$0xff]
        %v443 = vld [vmem:[%s8] sm:$0x3]
        %v444 = vlaneseq
        %v445 = vand.u32 %v444, 127
        %v446 = vld [vmem:[%s368] sm:$0xff]
        %v447 = vld [vmem:[%s368 + $0x8] sm:$0xff]
        %v448 = vld [vmem:[%s368 + $0x10] sm:$0xff]
        %v449 = vld [vmem:[%s368 + $0x18] sm:$0xff]
        %v450 = vld [vmem:[%s368 + $0x20] sm:$0xff]
        %v451 = vld [vmem:[%s368 + $0x28] sm:$0xff]
        %v452 = vld [vmem:[%s368 + $0x30] sm:$0xff]
        %v453 = vld [vmem:[%s368 + $0x38] sm:$0xff]
        %454 = vset.pattern.permute.xlu0 0
        %455 = vperm.xlu0 %454, %v446
        %v456 = vpop.permute.xlu0 %455
        %457 = vset.pattern.permute.xlu0 0
        %458 = vperm.xlu0 %457, %v447
        %v459 = vpop.permute.xlu0 %458
        %460 = vset.pattern.permute.xlu0 0
        %461 = vperm.xlu0 %460, %v448
        %v462 = vpop.permute.xlu0 %461
        %463 = vset.pattern.permute.xlu0 0
        %464 = vperm.xlu0 %463, %v449
        %v465 = vpop.permute.xlu0 %464
        %466 = vset.pattern.permute.xlu0 0
        %467 = vperm.xlu0 %466, %v450
        %v468 = vpop.permute.xlu0 %467
        %469 = vset.pattern.permute.xlu0 0
        %470 = vperm.xlu0 %469, %v451
        %v471 = vpop.permute.xlu0 %470
        %472 = vset.pattern.permute.xlu0 0
        %473 = vperm.xlu0 %472, %v452
        %v474 = vpop.permute.xlu0 %473
        %475 = vset.pattern.permute.xlu0 0
        %476 = vperm.xlu0 %475, %v453
        %v477 = vpop.permute.xlu0 %476
        %vm478 = vcmp.eq.s32.totalorder %v445, %v456
        %vm479 = vcmp.eq.s32.totalorder %v445, %v459
        %vm480 = vcmp.eq.s32.totalorder %v445, %v462
        %vm481 = vcmp.eq.s32.totalorder %v445, %v465
        %vm482 = vcmp.eq.s32.totalorder %v445, %v468
        %vm483 = vcmp.eq.s32.totalorder %v445, %v471
        %vm484 = vcmp.eq.s32.totalorder %v445, %v474
        %vm485 = vcmp.eq.s32.totalorder %v445, %v477
        %v486 = vsel %vm478, 1, 0
        %v487 = vsel %vm479, 1, 0
        %v488 = vsel %vm480, 1, 0
        %v489 = vsel %vm481, 1, 0
        %v490 = vsel %vm482, 1, 0
        %v491 = vsel %vm483, 1, 0
        %v492 = vsel %vm484, 1, 0
        %v493 = vsel %vm485, 1, 0
        %v494 = vcvt.s32.f32 %v486
        %v495 = vcvt.s32.f32 %v487
        %v496 = vcvt.s32.f32 %v488
        %v497 = vcvt.s32.f32 %v489
        %v498 = vcvt.s32.f32 %v490
        %v499 = vcvt.s32.f32 %v491
        %v500 = vcvt.s32.f32 %v492
        %v501 = vcvt.s32.f32 %v493
        %vm502 = vcmask 195584
        %v504 = vsel %vm502, %v494, 0
        %v507 = vsel %vm502, %v495, 0
        %v510 = vsel %vm502, %v496, 0
        %v513 = vsel %vm502, %v497, 0
        %v516 = vsel %vm502, %v498, 0
        %v519 = vsel %vm502, %v499, 0
        %v522 = vsel %vm502, %v500, 0
        %v525 = vsel %vm502, %v501, 0
        %527 = vmatprep.subr.mxu0 0.0
        %528 = vmatpush1.msra.mxu0 %v371
        %529 = vmatprep.subr.mxu0 0.0
        %530 = vmatpush1.msra.mxu0 %v372
        %531 = vmatprep.subr.mxu0 0.0
        %532 = vmatpush1.msra.mxu0 %v373
        %533 = vmatprep.subr.mxu0 0.0
        %534 = vmatpush1.msra.mxu0 0.0
        %535 = vmatprep.subr.mxu0 0.0
        %536 = vmatpush1.msra.mxu0 0.0
        %537 = vmatprep.subr.mxu0 0.0
        %538 = vmatpush1.msra.mxu0 0.0
        %539 = vmatprep.subr.mxu0 0.0
        %540 = vmatpush1.msra.mxu0 0.0
        %541 = vmatprep.subr.mxu0 0.0
        %542 = vmatpush1.msra.mxu0 0.0
        %543 = vmatprep.subr.mxu0 0.0
        %544 = vmatpush1.msra.mxu0 0.0
        %545 = vmatprep.subr.mxu0 0.0
        %546 = vmatpush1.msra.mxu0 0.0
        %547 = vmatprep.subr.mxu0 0.0
        %548 = vmatpush1.msra.mxu0 0.0
        %549 = vmatprep.subr.mxu0 0.0
        %550 = vmatpush1.msra.mxu0 0.0
        %551 = vmatprep.subr.mxu0 0.0
        %552 = vmatpush1.msra.mxu0 0.0
        %553 = vmatprep.subr.mxu0 0.0
        %554 = vmatpush1.msra.mxu0 0.0
        %555 = vmatprep.subr.mxu0 0.0
        %556 = vmatpush1.msra.mxu0 0.0
        %557 = vmatprep.subr.mxu0 0.0
        %558 = vmatpush1.msra.mxu0 0.0
        %559 = vmatprep.subr.mxu0 0.0
        %560 = vmatpush1.msra.mxu0 0.0
        %561 = vmatprep.subr.mxu0 0.0
        %562 = vmatpush1.msra.mxu0 0.0
        %563 = vmatprep.subr.mxu0 0.0
        %564 = vmatpush1.msra.mxu0 0.0
        %565 = vmatprep.subr.mxu0 0.0
        %566 = vmatpush1.msra.mxu0 0.0
        %567 = vmatprep.subr.mxu0 0.0
        %568 = vmatpush1.msra.mxu0 0.0
        %569 = vmatprep.subr.mxu0 0.0
        %570 = vmatpush1.msra.mxu0 0.0
        %571 = vmatprep.subr.mxu0 0.0
        %572 = vmatpush1.msra.mxu0 0.0
        %573 = vmatprep.subr.mxu0 0.0
        %574 = vmatpush1.msra.mxu0 0.0
        %575 = vmatprep.subr.mxu0 0.0
        %576 = vmatpush1.msra.mxu0 0.0
        %577 = vmatprep.subr.mxu0 0.0
        %578 = vmatpush1.msra.mxu0 0.0
        %579 = vmatprep.subr.mxu0 0.0
        %580 = vmatpush1.msra.mxu0 0.0
        %581 = vmatprep.subr.mxu0 0.0
        %582 = vmatpush1.msra.mxu0 0.0
        %583 = vmatprep.subr.mxu0 0.0
        %584 = vmatpush1.msra.mxu0 0.0
        %585 = vmatprep.subr.mxu0 0.0
        %586 = vmatpush1.msra.mxu0 0.0
        %587 = vmatprep.subr.mxu0 0.0
        %588 = vmatpush1.msra.mxu0 0.0
        %589 = vmatprep.subr.mxu0 0.0
        %590 = vmatpush1.msra.mxu0 0.0
        %591 = vmatprep.mubr.f32.mxu0 0.0
        %592 = vmatmul.mubr.f32.gmra.mrb[0].mxu0 %v504
        %v593 = vpop.f32.mrb[0].mxu0
        %v594 = vadd.f32 0.0, %v593
        %v595 = vpop.f32.mrb[0].mxu0
        %596 = vmatprep.mubr.f32.mxu0 0.0
        %597 = vmatmul.mubr.f32.gmra.mrb[0].mxu0 %v507
        %v598 = vpop.f32.mrb[0].mxu0
        %v599 = vadd.f32 0.0, %v598
        %v600 = vpop.f32.mrb[0].mxu0
        %601 = vmatprep.mubr.f32.mxu0 0.0
        %602 = vmatmul.mubr.f32.gmra.mrb[0].mxu0 %v510
        %v603 = vpop.f32.mrb[0].mxu0
        %v604 = vadd.f32 0.0, %v603
        %v605 = vpop.f32.mrb[0].mxu0
        %606 = vmatprep.mubr.f32.mxu0 0.0
        %607 = vmatmul.mubr.f32.gmra.mrb[0].mxu0 %v513
        %v608 = vpop.f32.mrb[0].mxu0
        %v609 = vadd.f32 0.0, %v608
        %v610 = vpop.f32.mrb[0].mxu0
        %611 = vmatprep.mubr.f32.mxu0 0.0
        %612 = vmatmul.mubr.f32.gmra.mrb[0].mxu0 %v516
        %v613 = vpop.f32.mrb[0].mxu0
        %v614 = vadd.f32 0.0, %v613
        %v615 = vpop.f32.mrb[0].mxu0
        %616 = vmatprep.mubr.f32.mxu0 0.0
        %617 = vmatmul.mubr.f32.gmra.mrb[0].mxu0 %v519
        %v618 = vpop.f32.mrb[0].mxu0
        %v619 = vadd.f32 0.0, %v618
        %v620 = vpop.f32.mrb[0].mxu0
        %621 = vmatprep.mubr.f32.mxu0 0.0
        %622 = vmatmul.mubr.f32.gmra.mrb[0].mxu0 %v522
        %v623 = vpop.f32.mrb[0].mxu0
        %v624 = vadd.f32 0.0, %v623
        %v625 = vpop.f32.mrb[0].mxu0
        %626 = vmatprep.mubr.f32.mxu0 0.0
        %627 = vmatmul.mubr.f32.gmra.mrb[0].mxu0 %v525
        %v628 = vpop.f32.mrb[0].mxu0
        %v629 = vadd.f32 0.0, %v628
        %v630 = vpop.f32.mrb[0].mxu0
        %631 = vdwg.mxu0
        %vm639 = vcmask 1046528
        %v640 = vrot.slane %v594, 1
        %v641 = vrot.slane %v599, 1
        %v642 = vsel %vm639, %v640, %v641
        %v643 = vrot.slane %v604, 1
        %v644 = vsel %vm639, %v641, %v643
        %v645 = vrot.slane %v609, 1
        %v646 = vsel %vm639, %v643, %v645
        %v647 = vrot.slane %v614, 1
        %v648 = vsel %vm639, %v645, %v647
        %v649 = vrot.slane %v619, 1
        %v650 = vsel %vm639, %v647, %v649
        %v651 = vrot.slane %v624, 1
        %v652 = vsel %vm639, %v649, %v651
        %653 = vrot.lane.b32.xlu0 %v642, 32
        %v654 = vpop.permute.xlu0 %653
        %655 = vrot.lane.b32.xlu0 %v644, 32
        %v656 = vpop.permute.xlu0 %655
        %657 = vrot.lane.b32.xlu0 %v646, 32
        %v658 = vpop.permute.xlu0 %657
        %659 = vrot.lane.b32.xlu0 %v648, 32
        %v660 = vpop.permute.xlu0 %659
        %661 = vrot.lane.b32.xlu0 %v650, 32
        %v662 = vpop.permute.xlu0 %661
        %663 = vrot.lane.b32.xlu0 %v652, 32
        %v664 = vpop.permute.xlu0 %663
        %665 = vrot.lane.b32.xlu0 %v651, 32
        %v666 = vpop.permute.xlu0 %665
        %vm674 = vcmask 1045504
        %v675 = vrot.slane %v594, 2
        %v676 = vrot.slane %v599, 2
        %v677 = vsel %vm674, %v675, %v676
        %v678 = vrot.slane %v604, 2
        %v679 = vsel %vm674, %v676, %v678
        %v680 = vrot.slane %v609, 2
        %v681 = vsel %vm674, %v678, %v680
        %v682 = vrot.slane %v614, 2
        %v683 = vsel %vm674, %v680, %v682
        %v684 = vrot.slane %v619, 2
        %v685 = vsel %vm674, %v682, %v684
        %v686 = vrot.slane %v624, 2
        %v687 = vsel %vm674, %v684, %v686
        %688 = vrot.lane.b32.xlu0 %v677, 64
        %v689 = vpop.permute.xlu0 %688
        %690 = vrot.lane.b32.xlu0 %v679, 64
        %v691 = vpop.permute.xlu0 %690
        %692 = vrot.lane.b32.xlu0 %v681, 64
        %v693 = vpop.permute.xlu0 %692
        %694 = vrot.lane.b32.xlu0 %v683, 64
        %v695 = vpop.permute.xlu0 %694
        %696 = vrot.lane.b32.xlu0 %v685, 64
        %v697 = vpop.permute.xlu0 %696
        %698 = vrot.lane.b32.xlu0 %v687, 64
        %v699 = vpop.permute.xlu0 %698
        %700 = vrot.lane.b32.xlu0 %v686, 64
        %v701 = vpop.permute.xlu0 %700
        %vm709 = vcmask 1044480
        %v710 = vrot.slane %v594, 3
        %v711 = vrot.slane %v599, 3
        %v712 = vsel %vm709, %v710, %v711
        %v713 = vrot.slane %v604, 3
        %v714 = vsel %vm709, %v711, %v713
        %v715 = vrot.slane %v609, 3
        %v716 = vsel %vm709, %v713, %v715
        %v717 = vrot.slane %v614, 3
        %v718 = vsel %vm709, %v715, %v717
        %v719 = vrot.slane %v619, 3
        %v720 = vsel %vm709, %v717, %v719
        %v721 = vrot.slane %v624, 3
        %v722 = vsel %vm709, %v719, %v721
        %723 = vrot.lane.b32.xlu0 %v712, 96
        %v724 = vpop.permute.xlu0 %723
        %725 = vrot.lane.b32.xlu0 %v714, 96
        %v726 = vpop.permute.xlu0 %725
        %727 = vrot.lane.b32.xlu0 %v716, 96
        %v728 = vpop.permute.xlu0 %727
        %729 = vrot.lane.b32.xlu0 %v718, 96
        %v730 = vpop.permute.xlu0 %729
        %731 = vrot.lane.b32.xlu0 %v720, 96
        %v732 = vpop.permute.xlu0 %731
        %733 = vrot.lane.b32.xlu0 %v722, 96
        %v734 = vpop.permute.xlu0 %733
        %735 = vrot.lane.b32.xlu0 %v721, 96
        %v736 = vpop.permute.xlu0 %735
        %vm744 = vcmask 1043456
        %v745 = vrot.slane %v594, 4
        %v746 = vrot.slane %v599, 4
        %v747 = vsel %vm744, %v745, %v746
        %v748 = vrot.slane %v604, 4
        %v749 = vsel %vm744, %v746, %v748
        %v750 = vrot.slane %v609, 4
        %v751 = vsel %vm744, %v748, %v750
        %v752 = vrot.slane %v614, 4
        %v753 = vsel %vm744, %v750, %v752
        %v754 = vrot.slane %v619, 4
        %v755 = vsel %vm744, %v752, %v754
        %v756 = vrot.slane %v624, 4
        %v757 = vsel %vm744, %v754, %v756
        %vm766 = vcmask 1042432
        %v767 = vrot.slane %v594, 5
        %v768 = vrot.slane %v599, 5
        %v769 = vsel %vm766, %v767, %v768
        %v770 = vrot.slane %v604, 5
        %v771 = vsel %vm766, %v768, %v770
        %v772 = vrot.slane %v609, 5
        %v773 = vsel %vm766, %v770, %v772
        %v774 = vrot.slane %v614, 5
        %v775 = vsel %vm766, %v772, %v774
        %v776 = vrot.slane %v619, 5
        %v777 = vsel %vm766, %v774, %v776
        %v778 = vrot.slane %v624, 5
        %v779 = vsel %vm766, %v776, %v778
        %v780 = vrot.slane %v629, 5
        %v781 = vsel %vm766, %v778, %v780
        %782 = vrot.lane.b32.xlu0 %v769, 32
        %v783 = vpop.permute.xlu0 %782
        %784 = vrot.lane.b32.xlu0 %v771, 32
        %v785 = vpop.permute.xlu0 %784
        %786 = vrot.lane.b32.xlu0 %v773, 32
        %v787 = vpop.permute.xlu0 %786
        %788 = vrot.lane.b32.xlu0 %v775, 32
        %v789 = vpop.permute.xlu0 %788
        %790 = vrot.lane.b32.xlu0 %v777, 32
        %v791 = vpop.permute.xlu0 %790
        %792 = vrot.lane.b32.xlu0 %v779, 32
        %v793 = vpop.permute.xlu0 %792
        %794 = vrot.lane.b32.xlu0 %v781, 32
        %v795 = vpop.permute.xlu0 %794
        %vm803 = vcmask 1041408
        %v804 = vrot.slane %v594, 6
        %v805 = vrot.slane %v599, 6
        %v806 = vsel %vm803, %v804, %v805
        %v807 = vrot.slane %v604, 6
        %v808 = vsel %vm803, %v805, %v807
        %v809 = vrot.slane %v609, 6
        %v810 = vsel %vm803, %v807, %v809
        %v811 = vrot.slane %v614, 6
        %v812 = vsel %vm803, %v809, %v811
        %v813 = vrot.slane %v619, 6
        %v814 = vsel %vm803, %v811, %v813
        %v815 = vrot.slane %v624, 6
        %v816 = vsel %vm803, %v813, %v815
        %v817 = vrot.slane %v629, 6
        %v818 = vsel %vm803, %v815, %v817
        %819 = vrot.lane.b32.xlu0 %v806, 64
        %v820 = vpop.permute.xlu0 %819
        %821 = vrot.lane.b32.xlu0 %v808, 64
        %v822 = vpop.permute.xlu0 %821
        %823 = vrot.lane.b32.xlu0 %v810, 64
        %v824 = vpop.permute.xlu0 %823
        %825 = vrot.lane.b32.xlu0 %v812, 64
        %v826 = vpop.permute.xlu0 %825
        %827 = vrot.lane.b32.xlu0 %v814, 64
        %v828 = vpop.permute.xlu0 %827
        %829 = vrot.lane.b32.xlu0 %v816, 64
        %v830 = vpop.permute.xlu0 %829
        %831 = vrot.lane.b32.xlu0 %v818, 64
        %v832 = vpop.permute.xlu0 %831
        %vm840 = vcmask 1040384
        %v841 = vrot.slane %v594, 7
        %v842 = vrot.slane %v599, 7
        %v843 = vsel %vm840, %v841, %v842
        %v844 = vrot.slane %v604, 7
        %v845 = vsel %vm840, %v842, %v844
        %v846 = vrot.slane %v609, 7
        %v847 = vsel %vm840, %v844, %v846
        %v848 = vrot.slane %v614, 7
        %v849 = vsel %vm840, %v846, %v848
        %v850 = vrot.slane %v619, 7
        %v851 = vsel %vm840, %v848, %v850
        %v852 = vrot.slane %v624, 7
        %v853 = vsel %vm840, %v850, %v852
        %v854 = vrot.slane %v629, 7
        %v855 = vsel %vm840, %v852, %v854
        %856 = vrot.lane.b32.xlu0 %v843, 96
        %v857 = vpop.permute.xlu0 %856
        %858 = vrot.lane.b32.xlu0 %v845, 96
        %v859 = vpop.permute.xlu0 %858
        %860 = vrot.lane.b32.xlu0 %v847, 96
        %v861 = vpop.permute.xlu0 %860
        %862 = vrot.lane.b32.xlu0 %v849, 96
        %v863 = vpop.permute.xlu0 %862
        %864 = vrot.lane.b32.xlu0 %v851, 96
        %v865 = vpop.permute.xlu0 %864
        %866 = vrot.lane.b32.xlu0 %v853, 96
        %v867 = vpop.permute.xlu0 %866
        %868 = vrot.lane.b32.xlu0 %v855, 96
        %v869 = vpop.permute.xlu0 %868
        %v877 = vrot.slane %v629, 1
        %v878 = vsel %vm639, %v651, %v877
        %879 = vrot.lane.b32.xlu0 %v878, 32
        %v880 = vpop.permute.xlu0 %879
        %881 = vrot.lane.b32.xlu0 %v877, 32
        %v882 = vpop.permute.xlu0 %881
        %v885 = vrot.slane %v629, 2
        %v886 = vsel %vm674, %v686, %v885
        %887 = vrot.lane.b32.xlu0 %v886, 64
        %v888 = vpop.permute.xlu0 %887
        %889 = vrot.lane.b32.xlu0 %v885, 64
        %v890 = vpop.permute.xlu0 %889
        %v893 = vrot.slane %v629, 3
        %v894 = vsel %vm709, %v721, %v893
        %895 = vrot.lane.b32.xlu0 %v894, 96
        %v896 = vpop.permute.xlu0 %895
        %897 = vrot.lane.b32.xlu0 %v893, 96
        %v898 = vpop.permute.xlu0 %897
        %v901 = vrot.slane %v629, 4
        %v902 = vsel %vm744, %v756, %v901
        %vm903 = vcmask 261120
        %v904 = vsel %vm903, %v594, %v654
        %v905 = vsel %vm903, %v599, %v656
        %v906 = vsel %vm903, %v604, %v658
        %v907 = vsel %vm903, %v609, %v660
        %v908 = vsel %vm903, %v614, %v662
        %v909 = vsel %vm903, %v619, %v664
        %v910 = vsel %vm903, %v624, %v666
        %vm911 = vcmask 523264
        %v912 = vsel %vm911, %v904, %v689
        %v913 = vsel %vm911, %v905, %v691
        %v914 = vsel %vm911, %v906, %v693
        %v915 = vsel %vm911, %v907, %v695
        %v916 = vsel %vm911, %v908, %v697
        %v917 = vsel %vm911, %v909, %v699
        %v918 = vsel %vm911, %v910, %v701
        %vm919 = vcmask 785408
        %v920 = vsel %vm919, %v912, %v724
        %v921 = vsel %vm919, %v913, %v726
        %v922 = vsel %vm919, %v914, %v728
        %v923 = vsel %vm919, %v915, %v730
        %v924 = vsel %vm919, %v916, %v732
        %v925 = vsel %vm919, %v917, %v734
        %v926 = vsel %vm919, %v918, %v736
        %v927 = vsel %vm903, %v747, %v783
        %v928 = vsel %vm903, %v749, %v785
        %v929 = vsel %vm903, %v751, %v787
        %v930 = vsel %vm903, %v753, %v789
        %v931 = vsel %vm903, %v755, %v791
        %v932 = vsel %vm903, %v757, %v793
        %v933 = vsel %vm903, %v756, %v795
        %v934 = vsel %vm911, %v927, %v820
        %v935 = vsel %vm911, %v928, %v822
        %v936 = vsel %vm911, %v929, %v824
        %v937 = vsel %vm911, %v930, %v826
        %v938 = vsel %vm911, %v931, %v828
        %v939 = vsel %vm911, %v932, %v830
        %v940 = vsel %vm911, %v933, %v832
        %v941 = vsel %vm919, %v934, %v857
        %v942 = vsel %vm919, %v935, %v859
        %v943 = vsel %vm919, %v936, %v861
        %v944 = vsel %vm919, %v937, %v863
        %v945 = vsel %vm919, %v938, %v865
        %v946 = vsel %vm919, %v939, %v867
        %v947 = vsel %vm919, %v940, %v869
        %v948 = vsel %vm903, %v624, %v880
        %v949 = vsel %vm903, %v629, %v882
        %v950 = vsel %vm911, %v948, %v888
        %v951 = vsel %vm911, %v949, %v890
        %v952 = vsel %vm919, %v950, %v896
        %v953 = vsel %vm919, %v951, %v898
        %v955 = vlaneseq
        %v956 = vshrl.u32 %v955, 7
        %v957 = vsub.s32 0, %v956
        %v958 = vrot.slane %v426, %v957
        %v960 = vsel %vm903, %v749, 0
        %v962 = vsel %vm903, %v751, 0
        %v964 = vsel %vm903, %v753, 0
        %v966 = vsel %vm903, %v755, 0
        %v968 = vsel %vm903, %v757, 0
        %v970 = vsel %vm903, %v902, 0
        %v972 = vsel %vm903, %v901, 0
        %974 = vmatprep.subr.mxu0 0.0
        %975 = vmatpush1.msra.mxu0 %v374
        %976 = vmatprep.subr.mxu0 0.0
        %977 = vmatpush1.msra.mxu0 %v375
        %978 = vmatprep.subr.mxu0 0.0
        %979 = vmatpush1.msra.mxu0 %v376
        %980 = vmatprep.subr.mxu0 0.0
        %981 = vmatpush1.msra.mxu0 %v377
        %982 = vmatprep.subr.mxu0 0.0
        %983 = vmatpush1.msra.mxu0 %v378
        %984 = vmatprep.subr.mxu0 0.0
        %985 = vmatpush1.msra.mxu0 %v379
        %986 = vmatprep.subr.mxu0 0.0
        %987 = vmatpush1.msra.mxu0 %v380
        %988 = vmatprep.subr.mxu0 0.0
        %989 = vmatpush1.msra.mxu0 %v381
        %990 = vmatprep.subr.mxu0 0.0
        %991 = vmatpush1.msra.mxu0 %v382
        %992 = vmatprep.subr.mxu0 0.0
        %993 = vmatpush1.msra.mxu0 %v383
        %994 = vmatprep.subr.mxu0 0.0
        %995 = vmatpush1.msra.mxu0 %v384
        %996 = vmatprep.subr.mxu0 0.0
        %997 = vmatpush1.msra.mxu0 %v385
        %998 = vmatprep.subr.mxu0 0.0
        %999 = vmatpush1.msra.mxu0 %v386
        %1000 = vmatprep.subr.mxu0 0.0
        %1001 = vmatpush1.msra.mxu0 %v387
        %1002 = vmatprep.subr.mxu0 0.0
        %1003 = vmatpush1.msra.mxu0 %v388
        %1004 = vmatprep.subr.mxu0 0.0
        %1005 = vmatpush1.msra.mxu0 %v389
        %1006 = vmatprep.subr.mxu0 0.0
        %1007 = vmatpush1.msra.mxu0 %v390
        %1008 = vmatprep.subr.mxu0 0.0
        %1009 = vmatpush1.msra.mxu0 %v391
        %1010 = vmatprep.subr.mxu0 0.0
        %1011 = vmatpush1.msra.mxu0 %v392
        %1012 = vmatprep.subr.mxu0 0.0
        %1013 = vmatpush1.msra.mxu0 %v393
        %1014 = vmatprep.subr.mxu0 0.0
        %1015 = vmatpush1.msra.mxu0 %v394
        %1016 = vmatprep.subr.mxu0 0.0
        %1017 = vmatpush1.msra.mxu0 %v395
        %1018 = vmatprep.subr.mxu0 0.0
        %1019 = vmatpush1.msra.mxu0 %v396
        %1020 = vmatprep.subr.mxu0 0.0
        %1021 = vmatpush1.msra.mxu0 %v397
        %1022 = vmatprep.subr.mxu0 0.0
        %1023 = vmatpush1.msra.mxu0 %v398
        %1024 = vmatprep.subr.mxu0 0.0
        %1025 = vmatpush1.msra.mxu0 %v399
        %1026 = vmatprep.subr.mxu0 0.0
        %1027 = vmatpush1.msra.mxu0 %v400
        %1028 = vmatprep.subr.mxu0 0.0
        %1029 = vmatpush1.msra.mxu0 %v401
        %1030 = vmatprep.subr.mxu0 0.0
        %1031 = vmatpush1.msra.mxu0 %v402
        %1032 = vmatprep.subr.mxu0 0.0
        %1033 = vmatpush1.msra.mxu0 %v403
        %1034 = vmatprep.subr.mxu0 0.0
        %1035 = vmatpush1.msra.mxu0 %v404
        %1036 = vmatprep.subr.mxu0 0.0
        %1037 = vmatpush1.msra.mxu0 %v405
        %1038 = vmatprep.mubr.f32.mxu0 %v941
        %1039 = vmatmul.mubr.f32.gmra.mrb[0].mxu0 %v920
        %v1040 = vpop.f32.mrb[0].mxu0
        %v1041 = vadd.f32 %v958, %v1040
        %v1042 = vpop.f32.mrb[0].mxu0
        %1043 = vmatprep.mubr.f32.mxu0 %v942
        %1044 = vmatmul.mubr.f32.gmra.mrb[0].mxu0 %v921
        %v1045 = vpop.f32.mrb[0].mxu0
        %v1046 = vadd.f32 %v958, %v1045
        %v1047 = vpop.f32.mrb[0].mxu0
        %1048 = vmatprep.mubr.f32.mxu0 %v943
        %1049 = vmatmul.mubr.f32.gmra.mrb[0].mxu0 %v922
        %v1050 = vpop.f32.mrb[0].mxu0
        %v1051 = vadd.f32 %v958, %v1050
        %v1052 = vpop.f32.mrb[0].mxu0
        %1053 = vmatprep.mubr.f32.mxu0 %v944
        %1054 = vmatmul.mubr.f32.gmra.mrb[0].mxu0 %v923
        %v1055 = vpop.f32.mrb[0].mxu0
        %v1056 = vadd.f32 %v958, %v1055
        %v1057 = vpop.f32.mrb[0].mxu0
        %1058 = vmatprep.mubr.f32.mxu0 %v945
        %1059 = vmatmul.mubr.f32.gmra.mrb[0].mxu0 %v924
        %v1060 = vpop.f32.mrb[0].mxu0
        %v1061 = vadd.f32 %v958, %v1060
        %v1062 = vpop.f32.mrb[0].mxu0
        %1063 = vmatprep.mubr.f32.mxu0 %v946
        %1064 = vmatmul.mubr.f32.gmra.mrb[0].mxu0 %v925
        %v1065 = vpop.f32.mrb[0].mxu0
        %v1066 = vadd.f32 %v958, %v1065
        %v1067 = vpop.f32.mrb[0].mxu0
        %1068 = vmatprep.mubr.f32.mxu0 %v947
        %1069 = vmatmul.mubr.f32.gmra.mrb[0].mxu0 %v926
        %v1070 = vpop.f32.mrb[0].mxu0
        %v1071 = vpop.f32.mrb[0].mxu0
        %1072 = vdwg.mxu0
        %1073 = vmatprep.subr.mxu0 0.0
        %1074 = vmatpush1.msra.mxu0 %v406
        %1075 = vmatprep.subr.mxu0 0.0
        %1076 = vmatpush1.msra.mxu0 %v407
        %1077 = vmatprep.subr.mxu0 0.0
        %1078 = vmatpush1.msra.mxu0 %v408
        %1079 = vmatprep.subr.mxu0 0.0
        %1080 = vmatpush1.msra.mxu0 %v409
        %1081 = vmatprep.subr.mxu0 0.0
        %1082 = vmatpush1.msra.mxu0 %v410
        %1083 = vmatprep.subr.mxu0 0.0
        %1084 = vmatpush1.msra.mxu0 %v411
        %1085 = vmatprep.subr.mxu0 0.0
        %1086 = vmatpush1.msra.mxu0 %v412
        %1087 = vmatprep.subr.mxu0 0.0
        %1088 = vmatpush1.msra.mxu0 %v413
        %1089 = vmatprep.subr.mxu0 0.0
        %1090 = vmatpush1.msra.mxu0 %v414
        %1091 = vmatprep.subr.mxu0 0.0
        %1092 = vmatpush1.msra.mxu0 %v415
        %1093 = vmatprep.subr.mxu0 0.0
        %1094 = vmatpush1.msra.mxu0 %v416
        %1095 = vmatprep.subr.mxu0 0.0
        %1096 = vmatpush1.msra.mxu0 %v417
        %1097 = vmatprep.subr.mxu0 0.0
        %1098 = vmatpush1.msra.mxu0 %v418
        %1099 = vmatprep.subr.mxu0 0.0
        %1100 = vmatpush1.msra.mxu0 %v419
        %1101 = vmatprep.subr.mxu0 0.0
        %1102 = vmatpush1.msra.mxu0 %v420
        %1103 = vmatprep.subr.mxu0 0.0
        %1104 = vmatpush1.msra.mxu0 %v421
        %1105 = vmatprep.subr.mxu0 0.0
        %1106 = vmatpush1.msra.mxu0 %v422
        %1107 = vmatprep.subr.mxu0 0.0
        %1108 = vmatpush1.msra.mxu0 %v423
        %1109 = vmatprep.subr.mxu0 0.0
        %1110 = vmatpush1.msra.mxu0 %v424
        %1111 = vmatprep.subr.mxu0 0.0
        %1112 = vmatpush1.msra.mxu0 %v425
        %1113 = vmatprep.subr.mxu0 0.0
        %1114 = vmatpush1.msra.mxu0 0.0
        %1115 = vmatprep.subr.mxu0 0.0
        %1116 = vmatpush1.msra.mxu0 0.0
        %1117 = vmatprep.subr.mxu0 0.0
        %1118 = vmatpush1.msra.mxu0 0.0
        %1119 = vmatprep.subr.mxu0 0.0
        %1120 = vmatpush1.msra.mxu0 0.0
        %1121 = vmatprep.subr.mxu0 0.0
        %1122 = vmatpush1.msra.mxu0 0.0
        %1123 = vmatprep.subr.mxu0 0.0
        %1124 = vmatpush1.msra.mxu0 0.0
        %1125 = vmatprep.subr.mxu0 0.0
        %1126 = vmatpush1.msra.mxu0 0.0
        %1127 = vmatprep.subr.mxu0 0.0
        %1128 = vmatpush1.msra.mxu0 0.0
        %1129 = vmatprep.subr.mxu0 0.0
        %1130 = vmatpush1.msra.mxu0 0.0
        %1131 = vmatprep.subr.mxu0 0.0
        %1132 = vmatpush1.msra.mxu0 0.0
        %1133 = vmatprep.subr.mxu0 0.0
        %1134 = vmatpush1.msra.mxu0 0.0
        %1135 = vmatprep.subr.mxu0 0.0
        %1136 = vmatpush1.msra.mxu0 0.0
        %1137 = vmatprep.mubr.f32.mxu0 %v960
        %1138 = vmatmul.mubr.f32.gmra.mrb[0].mxu0 %v921
        %v1139 = vpop.f32.mrb[0].mxu0
        %v1140 = vadd.f32 %v1041, %v1139
        %v1141 = vpop.f32.mrb[0].mxu0
        %1142 = vmatprep.mubr.f32.mxu0 %v962
        %1143 = vmatmul.mubr.f32.gmra.mrb[0].mxu0 %v922
        %v1144 = vpop.f32.mrb[0].mxu0
        %v1145 = vadd.f32 %v1046, %v1144
        %v1146 = vpop.f32.mrb[0].mxu0
        %1147 = vmatprep.mubr.f32.mxu0 %v964
        %1148 = vmatmul.mubr.f32.gmra.mrb[0].mxu0 %v923
        %v1149 = vpop.f32.mrb[0].mxu0
        %v1150 = vadd.f32 %v1051, %v1149
        %v1151 = vpop.f32.mrb[0].mxu0
        %1152 = vmatprep.mubr.f32.mxu0 %v966
        %1153 = vmatmul.mubr.f32.gmra.mrb[0].mxu0 %v924
        %v1154 = vpop.f32.mrb[0].mxu0
        %v1155 = vadd.f32 %v1056, %v1154
        %v1156 = vpop.f32.mrb[0].mxu0
        %1157 = vmatprep.mubr.f32.mxu0 %v968
        %1158 = vmatmul.mubr.f32.gmra.mrb[0].mxu0 %v925
        %v1159 = vpop.f32.mrb[0].mxu0
        %v1160 = vadd.f32 %v1061, %v1159
        %v1161 = vpop.f32.mrb[0].mxu0
        %1162 = vmatprep.mubr.f32.mxu0 %v970
        %1163 = vmatmul.mubr.f32.gmra.mrb[0].mxu0 %v952
        %v1164 = vpop.f32.mrb[0].mxu0
        %v1165 = vadd.f32 %v1066, %v1164
        %v1166 = vpop.f32.mrb[0].mxu0
        %1167 = vmatprep.mubr.f32.mxu0 %v972
        %1168 = vmatmul.mubr.f32.gmra.mrb[0].mxu0 %v953
        %v1169 = vpop.f32.mrb[0].mxu0
        %v1170 = vpop.f32.mrb[0].mxu0
        %1171 = vdwg.mxu0
        %vm1172 = vcmask 259072
        %v1173 = vsel %vm1172, %v1140, -inf
        %v1174 = vrot.slane %v1173, 4
        %v1175 = vmax.f32 %v1173, %v1174
        %v1176 = vrot.slane %v1175, 2
        %v1177 = vmax.f32 %v1175, %v1176
        %v1178 = vrot.slane %v1177, 1
        %v1179 = vmax.f32 %v1177, %v1178
        %vm1180 = vcmask 261126
        %v1181 = vsel %vm1180, %v1140, -inf
        %vm1182 = vcmask 257024
        %v1183 = vsel %vm1182, %v1145, -inf
        %v1184 = vmax.f32 %v1181, %v1183
        %v1185 = vrot.slane %v1184, 4
        %v1186 = vmax.f32 %v1184, %v1185
        %v1187 = vrot.slane %v1186, 2
        %v1188 = vmax.f32 %v1186, %v1187
        %v1189 = vrot.slane %v1188, 1
        %v1190 = vmax.f32 %v1188, %v1189
        %vm1191 = vcmask 261124
        %v1192 = vsel %vm1191, %v1145, -inf
        %vm1193 = vcmask 254976
        %v1194 = vsel %vm1193, %v1150, -inf
        %v1195 = vmax.f32 %v1192, %v1194
        %v1196 = vrot.slane %v1195, 4
        %v1197 = vmax.f32 %v1195, %v1196
        %v1198 = vrot.slane %v1197, 2
        %v1199 = vmax.f32 %v1197, %v1198
        %v1200 = vrot.slane %v1199, 1
        %v1201 = vmax.f32 %v1199, %v1200
        %vm1202 = vcmask 261122
        %v1203 = vsel %vm1202, %v1150, -inf
        %v1204 = vrot.slane %v1203, 4
        %v1205 = vmax.f32 %v1203, %v1204
        %v1206 = vrot.slane %v1205, 2
        %v1207 = vmax.f32 %v1205, %v1206
        %v1208 = vrot.slane %v1207, 1
        %v1209 = vmax.f32 %v1207, %v1208
        %v1210 = vsel %vm1172, %v1155, -inf
        %v1211 = vrot.slane %v1210, 4
        %v1212 = vmax.f32 %v1210, %v1211
        %v1213 = vrot.slane %v1212, 2
        %v1214 = vmax.f32 %v1212, %v1213
        %v1215 = vrot.slane %v1214, 1
        %v1216 = vmax.f32 %v1214, %v1215
        %v1217 = vsel %vm1180, %v1155, -inf
        %v1218 = vsel %vm1182, %v1160, -inf
        %v1219 = vmax.f32 %v1217, %v1218
        %v1220 = vrot.slane %v1219, 4
        %v1221 = vmax.f32 %v1219, %v1220
        %v1222 = vrot.slane %v1221, 2
        %v1223 = vmax.f32 %v1221, %v1222
        %v1224 = vrot.slane %v1223, 1
        %v1225 = vmax.f32 %v1223, %v1224
        %v1226 = vsel %vm1191, %v1160, -inf
        %v1227 = vsel %vm1193, %v1165, -inf
        %v1228 = vmax.f32 %v1226, %v1227
        %v1229 = vrot.slane %v1228, 4
        %v1230 = vmax.f32 %v1228, %v1229
        %v1231 = vrot.slane %v1230, 2
        %v1232 = vmax.f32 %v1230, %v1231
        %v1233 = vrot.slane %v1232, 1
        %v1234 = vmax.f32 %v1232, %v1233
        %v1235 = vsel %vm1202, %v1165, -inf
        %v1236 = vrot.slane %v1235, 4
        %v1237 = vmax.f32 %v1235, %v1236
        %v1238 = vrot.slane %v1237, 2
        %v1239 = vmax.f32 %v1237, %v1238
        %v1240 = vrot.slane %v1239, 1
        %v1241 = vmax.f32 %v1239, %v1240
        %v1242 = vsel %vm840, %v1179, %v1190
        %v1243 = vsel %vm803, %v1242, %v1201
        %v1244 = vsel %vm766, %v1243, %v1209
        %v1245 = vsel %vm744, %v1244, %v1216
        %v1246 = vsel %vm709, %v1245, %v1225
        %v1247 = vsel %vm674, %v1246, %v1234
        %v1248 = vsel %vm639, %v1247, %v1241
        %v1250 = vlaneseq
        %v1251 = vshrl.u32 %v1250, 7
        %v1252 = vsub.s32 0, %v1251
        %v1253 = vrot.slane %v443, %v1252
        %v1254 = vlaneseq
        %v1255 = vshrl.u32 %v1254, 7
        %v1256 = vsub.s32 1, %v1255
        %v1257 = vrot.slane %v443, %v1256
        %v1261 = vsel %vm903, %v1248, 0
        %1263 = vmatprep.subr.mxu0 %v428
        %1264 = vmatpush1.msra.mxu0 %v427
        %1265 = vmatprep.subr.mxu0 %v430
        %1266 = vmatpush1.msra.mxu0 %v429
        %1267 = vmatprep.subr.mxu0 %v432
        %1268 = vmatpush1.msra.mxu0 %v431
        %1269 = vmatprep.subr.mxu0 %v434
        %1270 = vmatpush1.msra.mxu0 %v433
        %1271 = vmatprep.subr.mxu0 0.0
        %1272 = vmatpush1.msra.mxu0 0.0
        %1273 = vmatprep.subr.mxu0 0.0
        %1274 = vmatpush1.msra.mxu0 0.0
        %1275 = vmatprep.subr.mxu0 0.0
        %1276 = vmatpush1.msra.mxu0 0.0
        %1277 = vmatprep.subr.mxu0 0.0
        %1278 = vmatpush1.msra.mxu0 0.0
        %1279 = vmatprep.subr.mxu0 0.0
        %1280 = vmatpush1.msra.mxu0 0.0
        %1281 = vmatprep.subr.mxu0 0.0
        %1282 = vmatpush1.msra.mxu0 0.0
        %1283 = vmatprep.subr.mxu0 0.0
        %1284 = vmatpush1.msra.mxu0 0.0
        %1285 = vmatprep.subr.mxu0 0.0
        %1286 = vmatpush1.msra.mxu0 0.0
        %1287 = vmatprep.subr.mxu0 0.0
        %1288 = vmatpush1.msra.mxu0 0.0
        %1289 = vmatprep.subr.mxu0 0.0
        %1290 = vmatpush1.msra.mxu0 0.0
        %1291 = vmatprep.subr.mxu0 0.0
        %1292 = vmatpush1.msra.mxu0 0.0
        %1293 = vmatprep.subr.mxu0 0.0
        %1294 = vmatpush1.msra.mxu0 0.0
        %1295 = vmatprep.subr.mxu0 0.0
        %1296 = vmatpush1.msra.mxu0 0.0
        %1297 = vmatprep.subr.mxu0 0.0
        %1298 = vmatpush1.msra.mxu0 0.0
        %1299 = vmatprep.subr.mxu0 0.0
        %1300 = vmatpush1.msra.mxu0 0.0
        %1301 = vmatprep.subr.mxu0 0.0
        %1302 = vmatpush1.msra.mxu0 0.0
        %1303 = vmatprep.subr.mxu0 0.0
        %1304 = vmatpush1.msra.mxu0 0.0
        %1305 = vmatprep.subr.mxu0 0.0
        %1306 = vmatpush1.msra.mxu0 0.0
        %1307 = vmatprep.subr.mxu0 0.0
        %1308 = vmatpush1.msra.mxu0 0.0
        %1309 = vmatprep.subr.mxu0 0.0
        %1310 = vmatpush1.msra.mxu0 0.0
        %1311 = vmatprep.subr.mxu0 0.0
        %1312 = vmatpush1.msra.mxu0 0.0
        %1313 = vmatprep.subr.mxu0 0.0
        %1314 = vmatpush1.msra.mxu0 0.0
        %1315 = vmatprep.subr.mxu0 0.0
        %1316 = vmatpush1.msra.mxu0 0.0
        %1317 = vmatprep.subr.mxu0 0.0
        %1318 = vmatpush1.msra.mxu0 0.0
        %1319 = vmatprep.subr.mxu0 0.0
        %1320 = vmatpush1.msra.mxu0 0.0
        %1321 = vmatprep.subr.mxu0 0.0
        %1322 = vmatpush1.msra.mxu0 0.0
        %1323 = vmatprep.subr.mxu0 0.0
        %1324 = vmatpush1.msra.mxu0 0.0
        %1325 = vmatprep.subr.mxu0 0.0
        %1326 = vmatpush1.msra.mxu0 0.0
        %1327 = vmatprep.mubr.f32.mxu0 0.0
        %1328 = vmatmul.mubr.f32.gmra.mrb[0].mxu0 %v1261
        %v1329 = vpop.f32.mrb[0].mxu0
        %v1330 = vadd.f32 %v1253, %v1329
        %v1331 = vpop.f32.mrb[0].mxu0
        %v1332 = vadd.f32 %v1257, %v1331
        %1333 = vdwg.mxu0
        %1334 = vmatprep.subr.mxu0 %v436
        %1335 = vmatpush1.msra.mxu0 %v435
        %1336 = vmatprep.subr.mxu0 %v438
        %1337 = vmatpush1.msra.mxu0 %v437
        %1338 = vmatprep.subr.mxu0 %v440
        %1339 = vmatpush1.msra.mxu0 %v439
        %1340 = vmatprep.subr.mxu0 %v442
        %1341 = vmatpush1.msra.mxu0 %v441
        %1342 = vmatprep.subr.mxu0 0.0
        %1343 = vmatpush1.msra.mxu0 0.0
        %1344 = vmatprep.subr.mxu0 0.0
        %1345 = vmatpush1.msra.mxu0 0.0
        %1346 = vmatprep.subr.mxu0 0.0
        %1347 = vmatpush1.msra.mxu0 0.0
        %1348 = vmatprep.subr.mxu0 0.0
        %1349 = vmatpush1.msra.mxu0 0.0
        %1350 = vmatprep.subr.mxu0 0.0
        %1351 = vmatpush1.msra.mxu0 0.0
        %1352 = vmatprep.subr.mxu0 0.0
        %1353 = vmatpush1.msra.mxu0 0.0
        %1354 = vmatprep.subr.mxu0 0.0
        %1355 = vmatpush1.msra.mxu0 0.0
        %1356 = vmatprep.subr.mxu0 0.0
        %1357 = vmatpush1.msra.mxu0 0.0
        %1358 = vmatprep.subr.mxu0 0.0
        %1359 = vmatpush1.msra.mxu0 0.0
        %1360 = vmatprep.subr.mxu0 0.0
        %1361 = vmatpush1.msra.mxu0 0.0
        %1362 = vmatprep.subr.mxu0 0.0
        %1363 = vmatpush1.msra.mxu0 0.0
        %1364 = vmatprep.subr.mxu0 0.0
        %1365 = vmatpush1.msra.mxu0 0.0
        %1366 = vmatprep.subr.mxu0 0.0
        %1367 = vmatpush1.msra.mxu0 0.0
        %1368 = vmatprep.subr.mxu0 0.0
        %1369 = vmatpush1.msra.mxu0 0.0
        %1370 = vmatprep.subr.mxu0 0.0
        %1371 = vmatpush1.msra.mxu0 0.0
        %1372 = vmatprep.subr.mxu0 0.0
        %1373 = vmatpush1.msra.mxu0 0.0
        %1374 = vmatprep.subr.mxu0 0.0
        %1375 = vmatpush1.msra.mxu0 0.0
        %1376 = vmatprep.subr.mxu0 0.0
        %1377 = vmatpush1.msra.mxu0 0.0
        %1378 = vmatprep.subr.mxu0 0.0
        %1379 = vmatpush1.msra.mxu0 0.0
        %1380 = vmatprep.subr.mxu0 0.0
        %1381 = vmatpush1.msra.mxu0 0.0
        %1382 = vmatprep.subr.mxu0 0.0
        %1383 = vmatpush1.msra.mxu0 0.0
        %1384 = vmatprep.subr.mxu0 0.0
        %1385 = vmatpush1.msra.mxu0 0.0
        %1386 = vmatprep.subr.mxu0 0.0
        %1387 = vmatpush1.msra.mxu0 0.0
        %1388 = vmatprep.subr.mxu0 0.0
        %1389 = vmatpush1.msra.mxu0 0.0
        %1390 = vmatprep.subr.mxu0 0.0
        %1391 = vmatpush1.msra.mxu0 0.0
        %1392 = vmatprep.subr.mxu0 0.0
        %1393 = vmatpush1.msra.mxu0 0.0
        %1394 = vmatprep.subr.mxu0 0.0
        %1395 = vmatpush1.msra.mxu0 0.0
        %1396 = vmatprep.subr.mxu0 0.0
        %1397 = vmatpush1.msra.mxu0 0.0
        %1398 = vmatprep.mubr.f32.mxu0 0.0
        %1399 = vmatmul.mubr.f32.gmra.mrb[0].mxu0 %v1261
        %v1400 = vpop.f32.mrb[0].mxu0
        %v1401 = vadd.f32 0.0, %v1400
        %v1402 = vpop.f32.mrb[0].mxu0
        %v1403 = vadd.f32 0.0, %v1402
        %1404 = vdwg.mxu0
        %s1405 = scalar_lea.vmem %s368, 64
        %v1406 = vld [vmem:[%s1405] sm:$0xff]
        %v1407 = vld [vmem:[%s1405 + $0x8] sm:$0xff]
        %v1408 = vld [vmem:[%s1405 + $0x10] sm:$0xff]
        %v1409 = vld [vmem:[%s1405 + $0x18] sm:$0xff]
        %v1410 = vld [vmem:[%s1405 + $0x20] sm:$0xff]
        %v1411 = vld [vmem:[%s1405 + $0x28] sm:$0xff]
        %v1412 = vld [vmem:[%s1405 + $0x30] sm:$0xff]
        %v1413 = vld [vmem:[%s1405 + $0x38] sm:$0xff]
        %1414 = vset.pattern.permute.xlu0 0
        %1415 = vperm.xlu0 %1414, %v1406
        %v1416 = vpop.permute.xlu0 %1415
        %1417 = vset.pattern.permute.xlu0 0
        %1418 = vperm.xlu0 %1417, %v1407
        %v1419 = vpop.permute.xlu0 %1418
        %1420 = vset.pattern.permute.xlu0 0
        %1421 = vperm.xlu0 %1420, %v1408
        %v1422 = vpop.permute.xlu0 %1421
        %1423 = vset.pattern.permute.xlu0 0
        %1424 = vperm.xlu0 %1423, %v1409
        %v1425 = vpop.permute.xlu0 %1424
        %1426 = vset.pattern.permute.xlu0 0
        %1427 = vperm.xlu0 %1426, %v1410
        %v1428 = vpop.permute.xlu0 %1427
        %1429 = vset.pattern.permute.xlu0 0
        %1430 = vperm.xlu0 %1429, %v1411
        %v1431 = vpop.permute.xlu0 %1430
        %1432 = vset.pattern.permute.xlu0 0
        %1433 = vperm.xlu0 %1432, %v1412
        %v1434 = vpop.permute.xlu0 %1433
        %1435 = vset.pattern.permute.xlu0 0
        %1436 = vperm.xlu0 %1435, %v1413
        %v1437 = vpop.permute.xlu0 %1436
        %vm1438 = vcmp.eq.s32.totalorder %v445, %v1416
        %vm1439 = vcmp.eq.s32.totalorder %v445, %v1419
        %vm1440 = vcmp.eq.s32.totalorder %v445, %v1422
        %vm1441 = vcmp.eq.s32.totalorder %v445, %v1425
        %vm1442 = vcmp.eq.s32.totalorder %v445, %v1428
        %vm1443 = vcmp.eq.s32.totalorder %v445, %v1431
        %vm1444 = vcmp.eq.s32.totalorder %v445, %v1434
        %vm1445 = vcmp.eq.s32.totalorder %v445, %v1437
        %v1446 = vsel %vm1438, 1, 0
        %v1447 = vsel %vm1439, 1, 0
        %v1448 = vsel %vm1440, 1, 0
        %v1449 = vsel %vm1441, 1, 0
        %v1450 = vsel %vm1442, 1, 0
        %v1451 = vsel %vm1443, 1, 0
        %v1452 = vsel %vm1444, 1, 0
        %v1453 = vsel %vm1445, 1, 0
        %v1454 = vcvt.s32.f32 %v1446
        %v1455 = vcvt.s32.f32 %v1447
        %v1456 = vcvt.s32.f32 %v1448
        %v1457 = vcvt.s32.f32 %v1449
        %v1458 = vcvt.s32.f32 %v1450
        %v1459 = vcvt.s32.f32 %v1451
        %v1460 = vcvt.s32.f32 %v1452
        %v1461 = vcvt.s32.f32 %v1453
        %v1463 = vsel %vm502, %v1454, 0
        %v1466 = vsel %vm502, %v1455, 0
        %v1469 = vsel %vm502, %v1456, 0
        %v1472 = vsel %vm502, %v1457, 0
        %v1475 = vsel %vm502, %v1458, 0
        %v1478 = vsel %vm502, %v1459, 0
        %v1481 = vsel %vm502, %v1460, 0
        %v1484 = vsel %vm502, %v1461, 0
        %1486 = vmatprep.subr.mxu0 0.0
        %1487 = vmatpush1.msra.mxu0 %v371
        %1488 = vmatprep.subr.mxu0 0.0
        %1489 = vmatpush1.msra.mxu0 %v372
        %1490 = vmatprep.subr.mxu0 0.0
        %1491 = vmatpush1.msra.mxu0 %v373
        %1492 = vmatprep.subr.mxu0 0.0
        %1493 = vmatpush1.msra.mxu0 0.0
        %1494 = vmatprep.subr.mxu0 0.0
        %1495 = vmatpush1.msra.mxu0 0.0
        %1496 = vmatprep.subr.mxu0 0.0
        %1497 = vmatpush1.msra.mxu0 0.0
        %1498 = vmatprep.subr.mxu0 0.0
        %1499 = vmatpush1.msra.mxu0 0.0
        %1500 = vmatprep.subr.mxu0 0.0
        %1501 = vmatpush1.msra.mxu0 0.0
        %1502 = vmatprep.subr.mxu0 0.0
        %1503 = vmatpush1.msra.mxu0 0.0
        %1504 = vmatprep.subr.mxu0 0.0
        %1505 = vmatpush1.msra.mxu0 0.0
        %1506 = vmatprep.subr.mxu0 0.0
        %1507 = vmatpush1.msra.mxu0 0.0
        %1508 = vmatprep.subr.mxu0 0.0
        %1509 = vmatpush1.msra.mxu0 0.0
        %1510 = vmatprep.subr.mxu0 0.0
        %1511 = vmatpush1.msra.mxu0 0.0
        %1512 = vmatprep.subr.mxu0 0.0
        %1513 = vmatpush1.msra.mxu0 0.0
        %1514 = vmatprep.subr.mxu0 0.0
        %1515 = vmatpush1.msra.mxu0 0.0
        %1516 = vmatprep.subr.mxu0 0.0
        %1517 = vmatpush1.msra.mxu0 0.0
        %1518 = vmatprep.subr.mxu0 0.0
        %1519 = vmatpush1.msra.mxu0 0.0
        %1520 = vmatprep.subr.mxu0 0.0
        %1521 = vmatpush1.msra.mxu0 0.0
        %1522 = vmatprep.subr.mxu0 0.0
        %1523 = vmatpush1.msra.mxu0 0.0
        %1524 = vmatprep.subr.mxu0 0.0
        %1525 = vmatpush1.msra.mxu0 0.0
        %1526 = vmatprep.subr.mxu0 0.0
        %1527 = vmatpush1.msra.mxu0 0.0
        %1528 = vmatprep.subr.mxu0 0.0
        %1529 = vmatpush1.msra.mxu0 0.0
        %1530 = vmatprep.subr.mxu0 0.0
        %1531 = vmatpush1.msra.mxu0 0.0
        %1532 = vmatprep.subr.mxu0 0.0
        %1533 = vmatpush1.msra.mxu0 0.0
        %1534 = vmatprep.subr.mxu0 0.0
        %1535 = vmatpush1.msra.mxu0 0.0
        %1536 = vmatprep.subr.mxu0 0.0
        %1537 = vmatpush1.msra.mxu0 0.0
        %1538 = vmatprep.subr.mxu0 0.0
        %1539 = vmatpush1.msra.mxu0 0.0
        %1540 = vmatprep.subr.mxu0 0.0
        %1541 = vmatpush1.msra.mxu0 0.0
        %1542 = vmatprep.subr.mxu0 0.0
        %1543 = vmatpush1.msra.mxu0 0.0
        %1544 = vmatprep.subr.mxu0 0.0
        %1545 = vmatpush1.msra.mxu0 0.0
        %1546 = vmatprep.subr.mxu0 0.0
        %1547 = vmatpush1.msra.mxu0 0.0
        %1548 = vmatprep.subr.mxu0 0.0
        %1549 = vmatpush1.msra.mxu0 0.0
        %1550 = vmatprep.mubr.f32.mxu0 0.0
        %1551 = vmatmul.mubr.f32.gmra.mrb[0].mxu0 %v1463
        %v1552 = vpop.f32.mrb[0].mxu0
        %v1553 = vadd.f32 0.0, %v1552
        %v1554 = vpop.f32.mrb[0].mxu0
        %1555 = vmatprep.mubr.f32.mxu0 0.0
        %1556 = vmatmul.mubr.f32.gmra.mrb[0].mxu0 %v1466
        %v1557 = vpop.f32.mrb[0].mxu0
        %v1558 = vadd.f32 0.0, %v1557
        %v1559 = vpop.f32.mrb[0].mxu0
        %1560 = vmatprep.mubr.f32.mxu0 0.0
        %1561 = vmatmul.mubr.f32.gmra.mrb[0].mxu0 %v1469
        %v1562 = vpop.f32.mrb[0].mxu0
        %v1563 = vadd.f32 0.0, %v1562
        %v1564 = vpop.f32.mrb[0].mxu0
        %1565 = vmatprep.mubr.f32.mxu0 0.0
        %1566 = vmatmul.mubr.f32.gmra.mrb[0].mxu0 %v1472
        %v1567 = vpop.f32.mrb[0].mxu0
        %v1568 = vadd.f32 0.0, %v1567
        %v1569 = vpop.f32.mrb[0].mxu0
        %1570 = vmatprep.mubr.f32.mxu0 0.0
        %1571 = vmatmul.mubr.f32.gmra.mrb[0].mxu0 %v1475
        %v1572 = vpop.f32.mrb[0].mxu0
        %v1573 = vadd.f32 0.0, %v1572
        %v1574 = vpop.f32.mrb[0].mxu0
        %1575 = vmatprep.mubr.f32.mxu0 0.0
        %1576 = vmatmul.mubr.f32.gmra.mrb[0].mxu0 %v1478
        %v1577 = vpop.f32.mrb[0].mxu0
        %v1578 = vadd.f32 0.0, %v1577
        %v1579 = vpop.f32.mrb[0].mxu0
        %1580 = vmatprep.mubr.f32.mxu0 0.0
        %1581 = vmatmul.mubr.f32.gmra.mrb[0].mxu0 %v1481
        %v1582 = vpop.f32.mrb[0].mxu0
        %v1583 = vadd.f32 0.0, %v1582
        %v1584 = vpop.f32.mrb[0].mxu0
        %1585 = vmatprep.mubr.f32.mxu0 0.0
        %1586 = vmatmul.mubr.f32.gmra.mrb[0].mxu0 %v1484
        %v1587 = vpop.f32.mrb[0].mxu0
        %v1588 = vadd.f32 0.0, %v1587
        %v1589 = vpop.f32.mrb[0].mxu0
        %1590 = vdwg.mxu0
        %v1598 = vrot.slane %v1553, 1
        %v1599 = vrot.slane %v1558, 1
        %v1600 = vsel %vm639, %v1598, %v1599
        %v1601 = vrot.slane %v1563, 1
        %v1602 = vsel %vm639, %v1599, %v1601
        %v1603 = vrot.slane %v1568, 1
        %v1604 = vsel %vm639, %v1601, %v1603
        %v1605 = vrot.slane %v1573, 1
        %v1606 = vsel %vm639, %v1603, %v1605
        %v1607 = vrot.slane %v1578, 1
        %v1608 = vsel %vm639, %v1605, %v1607
        %v1609 = vrot.slane %v1583, 1
        %v1610 = vsel %vm639, %v1607, %v1609
        %1611 = vrot.lane.b32.xlu0 %v1600, 32
        %v1612 = vpop.permute.xlu0 %1611
        %1613 = vrot.lane.b32.xlu0 %v1602, 32
        %v1614 = vpop.permute.xlu0 %1613
        %1615 = vrot.lane.b32.xlu0 %v1604, 32
        %v1616 = vpop.permute.xlu0 %1615
        %1617 = vrot.lane.b32.xlu0 %v1606, 32
        %v1618 = vpop.permute.xlu0 %1617
        %1619 = vrot.lane.b32.xlu0 %v1608, 32
        %v1620 = vpop.permute.xlu0 %1619
        %1621 = vrot.lane.b32.xlu0 %v1610, 32
        %v1622 = vpop.permute.xlu0 %1621
        %1623 = vrot.lane.b32.xlu0 %v1609, 32
        %v1624 = vpop.permute.xlu0 %1623
        %v1632 = vrot.slane %v1553, 2
        %v1633 = vrot.slane %v1558, 2
        %v1634 = vsel %vm674, %v1632, %v1633
        %v1635 = vrot.slane %v1563, 2
        %v1636 = vsel %vm674, %v1633, %v1635
        %v1637 = vrot.slane %v1568, 2
        %v1638 = vsel %vm674, %v1635, %v1637
        %v1639 = vrot.slane %v1573, 2
        %v1640 = vsel %vm674, %v1637, %v1639
        %v1641 = vrot.slane %v1578, 2
        %v1642 = vsel %vm674, %v1639, %v1641
        %v1643 = vrot.slane %v1583, 2
        %v1644 = vsel %vm674, %v1641, %v1643
        %1645 = vrot.lane.b32.xlu0 %v1634, 64
        %v1646 = vpop.permute.xlu0 %1645
        %1647 = vrot.lane.b32.xlu0 %v1636, 64
        %v1648 = vpop.permute.xlu0 %1647
        %1649 = vrot.lane.b32.xlu0 %v1638, 64
        %v1650 = vpop.permute.xlu0 %1649
        %1651 = vrot.lane.b32.xlu0 %v1640, 64
        %v1652 = vpop.permute.xlu0 %1651
        %1653 = vrot.lane.b32.xlu0 %v1642, 64
        %v1654 = vpop.permute.xlu0 %1653
        %1655 = vrot.lane.b32.xlu0 %v1644, 64
        %v1656 = vpop.permute.xlu0 %1655
        %1657 = vrot.lane.b32.xlu0 %v1643, 64
        %v1658 = vpop.permute.xlu0 %1657
        %v1666 = vrot.slane %v1553, 3
        %v1667 = vrot.slane %v1558, 3
        %v1668 = vsel %vm709, %v1666, %v1667
        %v1669 = vrot.slane %v1563, 3
        %v1670 = vsel %vm709, %v1667, %v1669
        %v1671 = vrot.slane %v1568, 3
        %v1672 = vsel %vm709, %v1669, %v1671
        %v1673 = vrot.slane %v1573, 3
        %v1674 = vsel %vm709, %v1671, %v1673
        %v1675 = vrot.slane %v1578, 3
        %v1676 = vsel %vm709, %v1673, %v1675
        %v1677 = vrot.slane %v1583, 3
        %v1678 = vsel %vm709, %v1675, %v1677
        %1679 = vrot.lane.b32.xlu0 %v1668, 96
        %v1680 = vpop.permute.xlu0 %1679
        %1681 = vrot.lane.b32.xlu0 %v1670, 96
        %v1682 = vpop.permute.xlu0 %1681
        %1683 = vrot.lane.b32.xlu0 %v1672, 96
        %v1684 = vpop.permute.xlu0 %1683
        %1685 = vrot.lane.b32.xlu0 %v1674, 96
        %v1686 = vpop.permute.xlu0 %1685
        %1687 = vrot.lane.b32.xlu0 %v1676, 96
        %v1688 = vpop.permute.xlu0 %1687
        %1689 = vrot.lane.b32.xlu0 %v1678, 96
        %v1690 = vpop.permute.xlu0 %1689
        %1691 = vrot.lane.b32.xlu0 %v1677, 96
        %v1692 = vpop.permute.xlu0 %1691
        %v1700 = vrot.slane %v1553, 4
        %v1701 = vrot.slane %v1558, 4
        %v1702 = vsel %vm744, %v1700, %v1701
        %v1703 = vrot.slane %v1563, 4
        %v1704 = vsel %vm744, %v1701, %v1703
        %v1705 = vrot.slane %v1568, 4
        %v1706 = vsel %vm744, %v1703, %v1705
        %v1707 = vrot.slane %v1573, 4
        %v1708 = vsel %vm744, %v1705, %v1707
        %v1709 = vrot.slane %v1578, 4
        %v1710 = vsel %vm744, %v1707, %v1709
        %v1711 = vrot.slane %v1583, 4
        %v1712 = vsel %vm744, %v1709, %v1711
        %v1721 = vrot.slane %v1553, 5
        %v1722 = vrot.slane %v1558, 5
        %v1723 = vsel %vm766, %v1721, %v1722
        %v1724 = vrot.slane %v1563, 5
        %v1725 = vsel %vm766, %v1722, %v1724
        %v1726 = vrot.slane %v1568, 5
        %v1727 = vsel %vm766, %v1724, %v1726
        %v1728 = vrot.slane %v1573, 5
        %v1729 = vsel %vm766, %v1726, %v1728
        %v1730 = vrot.slane %v1578, 5
        %v1731 = vsel %vm766, %v1728, %v1730
        %v1732 = vrot.slane %v1583, 5
        %v1733 = vsel %vm766, %v1730, %v1732
        %v1734 = vrot.slane %v1588, 5
        %v1735 = vsel %vm766, %v1732, %v1734
        %1736 = vrot.lane.b32.xlu0 %v1723, 32
        %v1737 = vpop.permute.xlu0 %1736
        %1738 = vrot.lane.b32.xlu0 %v1725, 32
        %v1739 = vpop.permute.xlu0 %1738
        %1740 = vrot.lane.b32.xlu0 %v1727, 32
        %v1741 = vpop.permute.xlu0 %1740
        %1742 = vrot.lane.b32.xlu0 %v1729, 32
        %v1743 = vpop.permute.xlu0 %1742
        %1744 = vrot.lane.b32.xlu0 %v1731, 32
        %v1745 = vpop.permute.xlu0 %1744
        %1746 = vrot.lane.b32.xlu0 %v1733, 32
        %v1747 = vpop.permute.xlu0 %1746
        %1748 = vrot.lane.b32.xlu0 %v1735, 32
        %v1749 = vpop.permute.xlu0 %1748
        %v1757 = vrot.slane %v1553, 6
        %v1758 = vrot.slane %v1558, 6
        %v1759 = vsel %vm803, %v1757, %v1758
        %v1760 = vrot.slane %v1563, 6
        %v1761 = vsel %vm803, %v1758, %v1760
        %v1762 = vrot.slane %v1568, 6
        %v1763 = vsel %vm803, %v1760, %v1762
        %v1764 = vrot.slane %v1573, 6
        %v1765 = vsel %vm803, %v1762, %v1764
        %v1766 = vrot.slane %v1578, 6
        %v1767 = vsel %vm803, %v1764, %v1766
        %v1768 = vrot.slane %v1583, 6
        %v1769 = vsel %vm803, %v1766, %v1768
        %v1770 = vrot.slane %v1588, 6
        %v1771 = vsel %vm803, %v1768, %v1770
        %1772 = vrot.lane.b32.xlu0 %v1759, 64
        %v1773 = vpop.permute.xlu0 %1772
        %1774 = vrot.lane.b32.xlu0 %v1761, 64
        %v1775 = vpop.permute.xlu0 %1774
        %1776 = vrot.lane.b32.xlu0 %v1763, 64
        %v1777 = vpop.permute.xlu0 %1776
        %1778 = vrot.lane.b32.xlu0 %v1765, 64
        %v1779 = vpop.permute.xlu0 %1778
        %1780 = vrot.lane.b32.xlu0 %v1767, 64
        %v1781 = vpop.permute.xlu0 %1780
        %1782 = vrot.lane.b32.xlu0 %v1769, 64
        %v1783 = vpop.permute.xlu0 %1782
        %1784 = vrot.lane.b32.xlu0 %v1771, 64
        %v1785 = vpop.permute.xlu0 %1784
        %v1793 = vrot.slane %v1553, 7
        %v1794 = vrot.slane %v1558, 7
        %v1795 = vsel %vm840, %v1793, %v1794
        %v1796 = vrot.slane %v1563, 7
        %v1797 = vsel %vm840, %v1794, %v1796
        %v1798 = vrot.slane %v1568, 7
        %v1799 = vsel %vm840, %v1796, %v1798
        %v1800 = vrot.slane %v1573, 7
        %v1801 = vsel %vm840, %v1798, %v1800
        %v1802 = vrot.slane %v1578, 7
        %v1803 = vsel %vm840, %v1800, %v1802
        %v1804 = vrot.slane %v1583, 7
        %v1805 = vsel %vm840, %v1802, %v1804
        %v1806 = vrot.slane %v1588, 7
        %v1807 = vsel %vm840, %v1804, %v1806
        %1808 = vrot.lane.b32.xlu0 %v1795, 96
        %v1809 = vpop.permute.xlu0 %1808
        %1810 = vrot.lane.b32.xlu0 %v1797, 96
        %v1811 = vpop.permute.xlu0 %1810
        %1812 = vrot.lane.b32.xlu0 %v1799, 96
        %v1813 = vpop.permute.xlu0 %1812
        %1814 = vrot.lane.b32.xlu0 %v1801, 96
        %v1815 = vpop.permute.xlu0 %1814
        %1816 = vrot.lane.b32.xlu0 %v1803, 96
        %v1817 = vpop.permute.xlu0 %1816
        %1818 = vrot.lane.b32.xlu0 %v1805, 96
        %v1819 = vpop.permute.xlu0 %1818
        %1820 = vrot.lane.b32.xlu0 %v1807, 96
        %v1821 = vpop.permute.xlu0 %1820
        %v1829 = vrot.slane %v1588, 1
        %v1830 = vsel %vm639, %v1609, %v1829
        %1831 = vrot.lane.b32.xlu0 %v1830, 32
        %v1832 = vpop.permute.xlu0 %1831
        %1833 = vrot.lane.b32.xlu0 %v1829, 32
        %v1834 = vpop.permute.xlu0 %1833
        %v1837 = vrot.slane %v1588, 2
        %v1838 = vsel %vm674, %v1643, %v1837
        %1839 = vrot.lane.b32.xlu0 %v1838, 64
        %v1840 = vpop.permute.xlu0 %1839
        %1841 = vrot.lane.b32.xlu0 %v1837, 64
        %v1842 = vpop.permute.xlu0 %1841
        %v1845 = vrot.slane %v1588, 3
        %v1846 = vsel %vm709, %v1677, %v1845
        %1847 = vrot.lane.b32.xlu0 %v1846, 96
        %v1848 = vpop.permute.xlu0 %1847
        %1849 = vrot.lane.b32.xlu0 %v1845, 96
        %v1850 = vpop.permute.xlu0 %1849
        %v1853 = vrot.slane %v1588, 4
        %v1854 = vsel %vm744, %v1711, %v1853
        %v1855 = vsel %vm903, %v1553, %v1612
        %v1856 = vsel %vm903, %v1558, %v1614
        %v1857 = vsel %vm903, %v1563, %v1616
        %v1858 = vsel %vm903, %v1568, %v1618
        %v1859 = vsel %vm903, %v1573, %v1620
        %v1860 = vsel %vm903, %v1578, %v1622
        %v1861 = vsel %vm903, %v1583, %v1624
        %v1862 = vsel %vm911, %v1855, %v1646
        %v1863 = vsel %vm911, %v1856, %v1648
        %v1864 = vsel %vm911, %v1857, %v1650
        %v1865 = vsel %vm911, %v1858, %v1652
        %v1866 = vsel %vm911, %v1859, %v1654
        %v1867 = vsel %vm911, %v1860, %v1656
        %v1868 = vsel %vm911, %v1861, %v1658
        %v1869 = vsel %vm919, %v1862, %v1680
        %v1870 = vsel %vm919, %v1863, %v1682
        %v1871 = vsel %vm919, %v1864, %v1684
        %v1872 = vsel %vm919, %v1865, %v1686
        %v1873 = vsel %vm919, %v1866, %v1688
        %v1874 = vsel %vm919, %v1867, %v1690
        %v1875 = vsel %vm919, %v1868, %v1692
        %v1876 = vsel %vm903, %v1702, %v1737
        %v1877 = vsel %vm903, %v1704, %v1739
        %v1878 = vsel %vm903, %v1706, %v1741
        %v1879 = vsel %vm903, %v1708, %v1743
        %v1880 = vsel %vm903, %v1710, %v1745
        %v1881 = vsel %vm903, %v1712, %v1747
        %v1882 = vsel %vm903, %v1711, %v1749
        %v1883 = vsel %vm911, %v1876, %v1773
        %v1884 = vsel %vm911, %v1877, %v1775
        %v1885 = vsel %vm911, %v1878, %v1777
        %v1886 = vsel %vm911, %v1879, %v1779
        %v1887 = vsel %vm911, %v1880, %v1781
        %v1888 = vsel %vm911, %v1881, %v1783
        %v1889 = vsel %vm911, %v1882, %v1785
        %v1890 = vsel %vm919, %v1883, %v1809
        %v1891 = vsel %vm919, %v1884, %v1811
        %v1892 = vsel %vm919, %v1885, %v1813
        %v1893 = vsel %vm919, %v1886, %v1815
        %v1894 = vsel %vm919, %v1887, %v1817
        %v1895 = vsel %vm919, %v1888, %v1819
        %v1896 = vsel %vm919, %v1889, %v1821
        %v1897 = vsel %vm903, %v1583, %v1832
        %v1898 = vsel %vm903, %v1588, %v1834
        %v1899 = vsel %vm911, %v1897, %v1840
        %v1900 = vsel %vm911, %v1898, %v1842
        %v1901 = vsel %vm919, %v1899, %v1848
        %v1902 = vsel %vm919, %v1900, %v1850
        %v1903 = vsel %vm903, %v1704, 0
        %v1905 = vsel %vm903, %v1706, 0
        %v1907 = vsel %vm903, %v1708, 0
        %v1909 = vsel %vm903, %v1710, 0
        %v1911 = vsel %vm903, %v1712, 0
        %v1913 = vsel %vm903, %v1854, 0
        %v1915 = vsel %vm903, %v1853, 0
        %1917 = vmatprep.subr.mxu0 0.0
        %1918 = vmatpush1.msra.mxu0 %v374
        %1919 = vmatprep.subr.mxu0 0.0
        %1920 = vmatpush1.msra.mxu0 %v375
        %1921 = vmatprep.subr.mxu0 0.0
        %1922 = vmatpush1.msra.mxu0 %v376
        %1923 = vmatprep.subr.mxu0 0.0
        %1924 = vmatpush1.msra.mxu0 %v377
        %1925 = vmatprep.subr.mxu0 0.0
        %1926 = vmatpush1.msra.mxu0 %v378
        %1927 = vmatprep.subr.mxu0 0.0
        %1928 = vmatpush1.msra.mxu0 %v379
        %1929 = vmatprep.subr.mxu0 0.0
        %1930 = vmatpush1.msra.mxu0 %v380
        %1931 = vmatprep.subr.mxu0 0.0
        %1932 = vmatpush1.msra.mxu0 %v381
        %1933 = vmatprep.subr.mxu0 0.0
        %1934 = vmatpush1.msra.mxu0 %v382
        %1935 = vmatprep.subr.mxu0 0.0
        %1936 = vmatpush1.msra.mxu0 %v383
        %1937 = vmatprep.subr.mxu0 0.0
        %1938 = vmatpush1.msra.mxu0 %v384
        %1939 = vmatprep.subr.mxu0 0.0
        %1940 = vmatpush1.msra.mxu0 %v385
        %1941 = vmatprep.subr.mxu0 0.0
        %1942 = vmatpush1.msra.mxu0 %v386
        %1943 = vmatprep.subr.mxu0 0.0
        %1944 = vmatpush1.msra.mxu0 %v387
        %1945 = vmatprep.subr.mxu0 0.0
        %1946 = vmatpush1.msra.mxu0 %v388
        %1947 = vmatprep.subr.mxu0 0.0
        %1948 = vmatpush1.msra.mxu0 %v389
        %1949 = vmatprep.subr.mxu0 0.0
        %1950 = vmatpush1.msra.mxu0 %v390
        %1951 = vmatprep.subr.mxu0 0.0
        %1952 = vmatpush1.msra.mxu0 %v391
        %1953 = vmatprep.subr.mxu0 0.0
        %1954 = vmatpush1.msra.mxu0 %v392
        %1955 = vmatprep.subr.mxu0 0.0
        %1956 = vmatpush1.msra.mxu0 %v393
        %1957 = vmatprep.subr.mxu0 0.0
        %1958 = vmatpush1.msra.mxu0 %v394
        %1959 = vmatprep.subr.mxu0 0.0
        %1960 = vmatpush1.msra.mxu0 %v395
        %1961 = vmatprep.subr.mxu0 0.0
        %1962 = vmatpush1.msra.mxu0 %v396
        %1963 = vmatprep.subr.mxu0 0.0
        %1964 = vmatpush1.msra.mxu0 %v397
        %1965 = vmatprep.subr.mxu0 0.0
        %1966 = vmatpush1.msra.mxu0 %v398
        %1967 = vmatprep.subr.mxu0 0.0
        %1968 = vmatpush1.msra.mxu0 %v399
        %1969 = vmatprep.subr.mxu0 0.0
        %1970 = vmatpush1.msra.mxu0 %v400
        %1971 = vmatprep.subr.mxu0 0.0
        %1972 = vmatpush1.msra.mxu0 %v401
        %1973 = vmatprep.subr.mxu0 0.0
        %1974 = vmatpush1.msra.mxu0 %v402
        %1975 = vmatprep.subr.mxu0 0.0
        %1976 = vmatpush1.msra.mxu0 %v403
        %1977 = vmatprep.subr.mxu0 0.0
        %1978 = vmatpush1.msra.mxu0 %v404
        %1979 = vmatprep.subr.mxu0 0.0
        %1980 = vmatpush1.msra.mxu0 %v405
        %1981 = vmatprep.mubr.f32.mxu0 %v1890
        %1982 = vmatmul.mubr.f32.gmra.mrb[0].mxu0 %v1869
        %v1983 = vpop.f32.mrb[0].mxu0
        %v1984 = vadd.f32 %v958, %v1983
        %v1985 = vpop.f32.mrb[0].mxu0
        %1986 = vmatprep.mubr.f32.mxu0 %v1891
        %1987 = vmatmul.mubr.f32.gmra.mrb[0].mxu0 %v1870
        %v1988 = vpop.f32.mrb[0].mxu0
        %v1989 = vadd.f32 %v958, %v1988
        %v1990 = vpop.f32.mrb[0].mxu0
        %1991 = vmatprep.mubr.f32.mxu0 %v1892
        %1992 = vmatmul.mubr.f32.gmra.mrb[0].mxu0 %v1871
        %v1993 = vpop.f32.mrb[0].mxu0
        %v1994 = vadd.f32 %v958, %v1993
        %v1995 = vpop.f32.mrb[0].mxu0
        %1996 = vmatprep.mubr.f32.mxu0 %v1893
        %1997 = vmatmul.mubr.f32.gmra.mrb[0].mxu0 %v1872
        %v1998 = vpop.f32.mrb[0].mxu0
        %v1999 = vadd.f32 %v958, %v1998
        %v2000 = vpop.f32.mrb[0].mxu0
        %2001 = vmatprep.mubr.f32.mxu0 %v1894
        %2002 = vmatmul.mubr.f32.gmra.mrb[0].mxu0 %v1873
        %v2003 = vpop.f32.mrb[0].mxu0
        %v2004 = vadd.f32 %v958, %v2003
        %v2005 = vpop.f32.mrb[0].mxu0
        %2006 = vmatprep.mubr.f32.mxu0 %v1895
        %2007 = vmatmul.mubr.f32.gmra.mrb[0].mxu0 %v1874
        %v2008 = vpop.f32.mrb[0].mxu0
        %v2009 = vadd.f32 %v958, %v2008
        %v2010 = vpop.f32.mrb[0].mxu0
        %2011 = vmatprep.mubr.f32.mxu0 %v1896
        %2012 = vmatmul.mubr.f32.gmra.mrb[0].mxu0 %v1875
        %v2013 = vpop.f32.mrb[0].mxu0
        %v2014 = vpop.f32.mrb[0].mxu0
        %2015 = vdwg.mxu0
        %2016 = vmatprep.subr.mxu0 0.0
        %2017 = vmatpush1.msra.mxu0 %v406
        %2018 = vmatprep.subr.mxu0 0.0
        %2019 = vmatpush1.msra.mxu0 %v407
        %2020 = vmatprep.subr.mxu0 0.0
        %2021 = vmatpush1.msra.mxu0 %v408
        %2022 = vmatprep.subr.mxu0 0.0
        %2023 = vmatpush1.msra.mxu0 %v409
        %2024 = vmatprep.subr.mxu0 0.0
        %2025 = vmatpush1.msra.mxu0 %v410
        %2026 = vmatprep.subr.mxu0 0.0
        %2027 = vmatpush1.msra.mxu0 %v411
        %2028 = vmatprep.subr.mxu0 0.0
        %2029 = vmatpush1.msra.mxu0 %v412
        %2030 = vmatprep.subr.mxu0 0.0
        %2031 = vmatpush1.msra.mxu0 %v413
        %2032 = vmatprep.subr.mxu0 0.0
        %2033 = vmatpush1.msra.mxu0 %v414
        %2034 = vmatprep.subr.mxu0 0.0
        %2035 = vmatpush1.msra.mxu0 %v415
        %2036 = vmatprep.subr.mxu0 0.0
        %2037 = vmatpush1.msra.mxu0 %v416
        %2038 = vmatprep.subr.mxu0 0.0
        %2039 = vmatpush1.msra.mxu0 %v417
        %2040 = vmatprep.subr.mxu0 0.0
        %2041 = vmatpush1.msra.mxu0 %v418
        %2042 = vmatprep.subr.mxu0 0.0
        %2043 = vmatpush1.msra.mxu0 %v419
        %2044 = vmatprep.subr.mxu0 0.0
        %2045 = vmatpush1.msra.mxu0 %v420
        %2046 = vmatprep.subr.mxu0 0.0
        %2047 = vmatpush1.msra.mxu0 %v421
        %2048 = vmatprep.subr.mxu0 0.0
        %2049 = vmatpush1.msra.mxu0 %v422
        %2050 = vmatprep.subr.mxu0 0.0
        %2051 = vmatpush1.msra.mxu0 %v423
        %2052 = vmatprep.subr.mxu0 0.0
        %2053 = vmatpush1.msra.mxu0 %v424
        %2054 = vmatprep.subr.mxu0 0.0
        %2055 = vmatpush1.msra.mxu0 %v425
        %2056 = vmatprep.subr.mxu0 0.0
        %2057 = vmatpush1.msra.mxu0 0.0
        %2058 = vmatprep.subr.mxu0 0.0
        %2059 = vmatpush1.msra.mxu0 0.0
        %2060 = vmatprep.subr.mxu0 0.0
        %2061 = vmatpush1.msra.mxu0 0.0
        %2062 = vmatprep.subr.mxu0 0.0
        %2063 = vmatpush1.msra.mxu0 0.0
        %2064 = vmatprep.subr.mxu0 0.0
        %2065 = vmatpush1.msra.mxu0 0.0
        %2066 = vmatprep.subr.mxu0 0.0
        %2067 = vmatpush1.msra.mxu0 0.0
        %2068 = vmatprep.subr.mxu0 0.0
        %2069 = vmatpush1.msra.mxu0 0.0
        %2070 = vmatprep.subr.mxu0 0.0
        %2071 = vmatpush1.msra.mxu0 0.0
        %2072 = vmatprep.subr.mxu0 0.0
        %2073 = vmatpush1.msra.mxu0 0.0
        %2074 = vmatprep.subr.mxu0 0.0
        %2075 = vmatpush1.msra.mxu0 0.0
        %2076 = vmatprep.subr.mxu0 0.0
        %2077 = vmatpush1.msra.mxu0 0.0
        %2078 = vmatprep.subr.mxu0 0.0
        %2079 = vmatpush1.msra.mxu0 0.0
        %2080 = vmatprep.mubr.f32.mxu0 %v1903
        %2081 = vmatmul.mubr.f32.gmra.mrb[0].mxu0 %v1870
        %v2082 = vpop.f32.mrb[0].mxu0
        %v2083 = vadd.f32 %v1984, %v2082
        %v2084 = vpop.f32.mrb[0].mxu0
        %2085 = vmatprep.mubr.f32.mxu0 %v1905
        %2086 = vmatmul.mubr.f32.gmra.mrb[0].mxu0 %v1871
        %v2087 = vpop.f32.mrb[0].mxu0
        %v2088 = vadd.f32 %v1989, %v2087
        %v2089 = vpop.f32.mrb[0].mxu0
        %2090 = vmatprep.mubr.f32.mxu0 %v1907
        %2091 = vmatmul.mubr.f32.gmra.mrb[0].mxu0 %v1872
        %v2092 = vpop.f32.mrb[0].mxu0
        %v2093 = vadd.f32 %v1994, %v2092
        %v2094 = vpop.f32.mrb[0].mxu0
        %2095 = vmatprep.mubr.f32.mxu0 %v1909
        %2096 = vmatmul.mubr.f32.gmra.mrb[0].mxu0 %v1873
        %v2097 = vpop.f32.mrb[0].mxu0
        %v2098 = vadd.f32 %v1999, %v2097
        %v2099 = vpop.f32.mrb[0].mxu0
        %2100 = vmatprep.mubr.f32.mxu0 %v1911
        %2101 = vmatmul.mubr.f32.gmra.mrb[0].mxu0 %v1874
        %v2102 = vpop.f32.mrb[0].mxu0
        %v2103 = vadd.f32 %v2004, %v2102
        %v2104 = vpop.f32.mrb[0].mxu0
        %2105 = vmatprep.mubr.f32.mxu0 %v1913
        %2106 = vmatmul.mubr.f32.gmra.mrb[0].mxu0 %v1901
        %v2107 = vpop.f32.mrb[0].mxu0
        %v2108 = vadd.f32 %v2009, %v2107
        %v2109 = vpop.f32.mrb[0].mxu0
        %2110 = vmatprep.mubr.f32.mxu0 %v1915
        %2111 = vmatmul.mubr.f32.gmra.mrb[0].mxu0 %v1902
        %v2112 = vpop.f32.mrb[0].mxu0
        %v2113 = vpop.f32.mrb[0].mxu0
        %2114 = vdwg.mxu0
        %v2115 = vsel %vm1172, %v2083, -inf
        %v2116 = vrot.slane %v2115, 4
        %v2117 = vmax.f32 %v2115, %v2116
        %v2118 = vrot.slane %v2117, 2
        %v2119 = vmax.f32 %v2117, %v2118
        %v2120 = vrot.slane %v2119, 1
        %v2121 = vmax.f32 %v2119, %v2120
        %v2122 = vsel %vm1180, %v2083, -inf
        %v2123 = vsel %vm1182, %v2088, -inf
        %v2124 = vmax.f32 %v2122, %v2123
        %v2125 = vrot.slane %v2124, 4
        %v2126 = vmax.f32 %v2124, %v2125
        %v2127 = vrot.slane %v2126, 2
        %v2128 = vmax.f32 %v2126, %v2127
        %v2129 = vrot.slane %v2128, 1
        %v2130 = vmax.f32 %v2128, %v2129
        %v2131 = vsel %vm1191, %v2088, -inf
        %v2132 = vsel %vm1193, %v2093, -inf
        %v2133 = vmax.f32 %v2131, %v2132
        %v2134 = vrot.slane %v2133, 4
        %v2135 = vmax.f32 %v2133, %v2134
        %v2136 = vrot.slane %v2135, 2
        %v2137 = vmax.f32 %v2135, %v2136
        %v2138 = vrot.slane %v2137, 1
        %v2139 = vmax.f32 %v2137, %v2138
        %v2140 = vsel %vm1202, %v2093, -inf
        %v2141 = vrot.slane %v2140, 4
        %v2142 = vmax.f32 %v2140, %v2141
        %v2143 = vrot.slane %v2142, 2
        %v2144 = vmax.f32 %v2142, %v2143
        %v2145 = vrot.slane %v2144, 1
        %v2146 = vmax.f32 %v2144, %v2145
        %v2147 = vsel %vm1172, %v2098, -inf
        %v2148 = vrot.slane %v2147, 4
        %v2149 = vmax.f32 %v2147, %v2148
        %v2150 = vrot.slane %v2149, 2
        %v2151 = vmax.f32 %v2149, %v2150
        %v2152 = vrot.slane %v2151, 1
        %v2153 = vmax.f32 %v2151, %v2152
        %v2154 = vsel %vm1180, %v2098, -inf
        %v2155 = vsel %vm1182, %v2103, -inf
        %v2156 = vmax.f32 %v2154, %v2155
        %v2157 = vrot.slane %v2156, 4
        %v2158 = vmax.f32 %v2156, %v2157
        %v2159 = vrot.slane %v2158, 2
        %v2160 = vmax.f32 %v2158, %v2159
        %v2161 = vrot.slane %v2160, 1
        %v2162 = vmax.f32 %v2160, %v2161
        %v2163 = vsel %vm1191, %v2103, -inf
        %v2164 = vsel %vm1193, %v2108, -inf
        %v2165 = vmax.f32 %v2163, %v2164
        %v2166 = vrot.slane %v2165, 4
        %v2167 = vmax.f32 %v2165, %v2166
        %v2168 = vrot.slane %v2167, 2
        %v2169 = vmax.f32 %v2167, %v2168
        %v2170 = vrot.slane %v2169, 1
        %v2171 = vmax.f32 %v2169, %v2170
        %v2172 = vsel %vm1202, %v2108, -inf
        %v2173 = vrot.slane %v2172, 4
        %v2174 = vmax.f32 %v2172, %v2173
        %v2175 = vrot.slane %v2174, 2
        %v2176 = vmax.f32 %v2174, %v2175
        %v2177 = vrot.slane %v2176, 1
        %v2178 = vmax.f32 %v2176, %v2177
        %v2179 = vsel %vm840, %v2121, %v2130
        %v2180 = vsel %vm803, %v2179, %v2139
        %v2181 = vsel %vm766, %v2180, %v2146
        %v2182 = vsel %vm744, %v2181, %v2153
        %v2183 = vsel %vm709, %v2182, %v2162
        %v2184 = vsel %vm674, %v2183, %v2171
        %v2185 = vsel %vm639, %v2184, %v2178
        %v2187 = vsel %vm903, %v2185, 0
        %2189 = vmatprep.subr.mxu0 %v428
        %2190 = vmatpush1.msra.mxu0 %v427
        %2191 = vmatprep.subr.mxu0 %v430
        %2192 = vmatpush1.msra.mxu0 %v429
        %2193 = vmatprep.subr.mxu0 %v432
        %2194 = vmatpush1.msra.mxu0 %v431
        %2195 = vmatprep.subr.mxu0 %v434
        %2196 = vmatpush1.msra.mxu0 %v433
        %2197 = vmatprep.subr.mxu0 0.0
        %2198 = vmatpush1.msra.mxu0 0.0
        %2199 = vmatprep.subr.mxu0 0.0
        %2200 = vmatpush1.msra.mxu0 0.0
        %2201 = vmatprep.subr.mxu0 0.0
        %2202 = vmatpush1.msra.mxu0 0.0
        %2203 = vmatprep.subr.mxu0 0.0
        %2204 = vmatpush1.msra.mxu0 0.0
        %2205 = vmatprep.subr.mxu0 0.0
        %2206 = vmatpush1.msra.mxu0 0.0
        %2207 = vmatprep.subr.mxu0 0.0
        %2208 = vmatpush1.msra.mxu0 0.0
        %2209 = vmatprep.subr.mxu0 0.0
        %2210 = vmatpush1.msra.mxu0 0.0
        %2211 = vmatprep.subr.mxu0 0.0
        %2212 = vmatpush1.msra.mxu0 0.0
        %2213 = vmatprep.subr.mxu0 0.0
        %2214 = vmatpush1.msra.mxu0 0.0
        %2215 = vmatprep.subr.mxu0 0.0
        %2216 = vmatpush1.msra.mxu0 0.0
        %2217 = vmatprep.subr.mxu0 0.0
        %2218 = vmatpush1.msra.mxu0 0.0
        %2219 = vmatprep.subr.mxu0 0.0
        %2220 = vmatpush1.msra.mxu0 0.0
        %2221 = vmatprep.subr.mxu0 0.0
        %2222 = vmatpush1.msra.mxu0 0.0
        %2223 = vmatprep.subr.mxu0 0.0
        %2224 = vmatpush1.msra.mxu0 0.0
        %2225 = vmatprep.subr.mxu0 0.0
        %2226 = vmatpush1.msra.mxu0 0.0
        %2227 = vmatprep.subr.mxu0 0.0
        %2228 = vmatpush1.msra.mxu0 0.0
        %2229 = vmatprep.subr.mxu0 0.0
        %2230 = vmatpush1.msra.mxu0 0.0
        %2231 = vmatprep.subr.mxu0 0.0
        %2232 = vmatpush1.msra.mxu0 0.0
        %2233 = vmatprep.subr.mxu0 0.0
        %2234 = vmatpush1.msra.mxu0 0.0
        %2235 = vmatprep.subr.mxu0 0.0
        %2236 = vmatpush1.msra.mxu0 0.0
        %2237 = vmatprep.subr.mxu0 0.0
        %2238 = vmatpush1.msra.mxu0 0.0
        %2239 = vmatprep.subr.mxu0 0.0
        %2240 = vmatpush1.msra.mxu0 0.0
        %2241 = vmatprep.subr.mxu0 0.0
        %2242 = vmatpush1.msra.mxu0 0.0
        %2243 = vmatprep.subr.mxu0 0.0
        %2244 = vmatpush1.msra.mxu0 0.0
        %2245 = vmatprep.subr.mxu0 0.0
        %2246 = vmatpush1.msra.mxu0 0.0
        %2247 = vmatprep.subr.mxu0 0.0
        %2248 = vmatpush1.msra.mxu0 0.0
        %2249 = vmatprep.subr.mxu0 0.0
        %2250 = vmatpush1.msra.mxu0 0.0
        %2251 = vmatprep.subr.mxu0 0.0
        %2252 = vmatpush1.msra.mxu0 0.0
        %2253 = vmatprep.mubr.f32.mxu0 0.0
        %2254 = vmatmul.mubr.f32.gmra.mrb[0].mxu0 %v2187
        %v2255 = vpop.f32.mrb[0].mxu0
        %v2256 = vadd.f32 %v1253, %v2255
        %v2257 = vpop.f32.mrb[0].mxu0
        %v2258 = vadd.f32 %v1257, %v2257
        %2259 = vdwg.mxu0
        %2260 = vmatprep.subr.mxu0 %v436
        %2261 = vmatpush1.msra.mxu0 %v435
        %2262 = vmatprep.subr.mxu0 %v438
        %2263 = vmatpush1.msra.mxu0 %v437
        %2264 = vmatprep.subr.mxu0 %v440
        %2265 = vmatpush1.msra.mxu0 %v439
        %2266 = vmatprep.subr.mxu0 %v442
        %2267 = vmatpush1.msra.mxu0 %v441
        %2268 = vmatprep.subr.mxu0 0.0
        %2269 = vmatpush1.msra.mxu0 0.0
        %2270 = vmatprep.subr.mxu0 0.0
        %2271 = vmatpush1.msra.mxu0 0.0
        %2272 = vmatprep.subr.mxu0 0.0
        %2273 = vmatpush1.msra.mxu0 0.0
        %2274 = vmatprep.subr.mxu0 0.0
        %2275 = vmatpush1.msra.mxu0 0.0
        %2276 = vmatprep.subr.mxu0 0.0
        %2277 = vmatpush1.msra.mxu0 0.0
        %2278 = vmatprep.subr.mxu0 0.0
        %2279 = vmatpush1.msra.mxu0 0.0
        %2280 = vmatprep.subr.mxu0 0.0
        %2281 = vmatpush1.msra.mxu0 0.0
        %2282 = vmatprep.subr.mxu0 0.0
        %2283 = vmatpush1.msra.mxu0 0.0
        %2284 = vmatprep.subr.mxu0 0.0
        %2285 = vmatpush1.msra.mxu0 0.0
        %2286 = vmatprep.subr.mxu0 0.0
        %2287 = vmatpush1.msra.mxu0 0.0
        %2288 = vmatprep.subr.mxu0 0.0
        %2289 = vmatpush1.msra.mxu0 0.0
        %2290 = vmatprep.subr.mxu0 0.0
        %2291 = vmatpush1.msra.mxu0 0.0
        %2292 = vmatprep.subr.mxu0 0.0
        %2293 = vmatpush1.msra.mxu0 0.0
        %2294 = vmatprep.subr.mxu0 0.0
        %2295 = vmatpush1.msra.mxu0 0.0
        %2296 = vmatprep.subr.mxu0 0.0
        %2297 = vmatpush1.msra.mxu0 0.0
        %2298 = vmatprep.subr.mxu0 0.0
        %2299 = vmatpush1.msra.mxu0 0.0
        %2300 = vmatprep.subr.mxu0 0.0
        %2301 = vmatpush1.msra.mxu0 0.0
        %2302 = vmatprep.subr.mxu0 0.0
        %2303 = vmatpush1.msra.mxu0 0.0
        %2304 = vmatprep.subr.mxu0 0.0
        %2305 = vmatpush1.msra.mxu0 0.0
        %2306 = vmatprep.subr.mxu0 0.0
        %2307 = vmatpush1.msra.mxu0 0.0
        %2308 = vmatprep.subr.mxu0 0.0
        %2309 = vmatpush1.msra.mxu0 0.0
        %2310 = vmatprep.subr.mxu0 0.0
        %2311 = vmatpush1.msra.mxu0 0.0
        %2312 = vmatprep.subr.mxu0 0.0
        %2313 = vmatpush1.msra.mxu0 0.0
        %2314 = vmatprep.subr.mxu0 0.0
        %2315 = vmatpush1.msra.mxu0 0.0
        %2316 = vmatprep.subr.mxu0 0.0
        %2317 = vmatpush1.msra.mxu0 0.0
        %2318 = vmatprep.subr.mxu0 0.0
        %2319 = vmatpush1.msra.mxu0 0.0
        %2320 = vmatprep.subr.mxu0 0.0
        %2321 = vmatpush1.msra.mxu0 0.0
        %2322 = vmatprep.subr.mxu0 0.0
        %2323 = vmatpush1.msra.mxu0 0.0
        %2324 = vmatprep.mubr.f32.mxu0 0.0
        %2325 = vmatmul.mubr.f32.gmra.mrb[0].mxu0 %v2187
        %v2326 = vpop.f32.mrb[0].mxu0
        %v2327 = vadd.f32 0.0, %v2326
        %v2328 = vpop.f32.mrb[0].mxu0
        %v2329 = vadd.f32 0.0, %v2328
        %2330 = vdwg.mxu0
        %v2333 = vrot.slane %v2256, 7
        %v2334 = vrot.slane %v2258, 7
        %v2337 = vsel %vm840, %v1330, %v2333
        %v2338 = vsel %vm840, %v1332, %v2334
        %v2341 = vrot.slane %v1401, 7
        %v2342 = vrot.slane %v1403, 7
        %v2347 = vrot.slane %v2327, 6
        %v2348 = vrot.slane %v2329, 6
        %v2351 = vsel %vm840, %v2341, %v2347
        %v2352 = vsel %vm840, %v2342, %v2348
        %v2353 = vadd.f32 %v2337, %v2351
        %v2354 = vadd.f32 %v2338, %v2352
        %v2357 = vrot.slane %v1330, 1
        %v2358 = vrot.slane %v1332, 1
        %v2361 = vsel %vm840, %v2357, %v2256
        %v2362 = vsel %vm840, %v2358, %v2258
        %v2363 = vrot.slane %v1401, 6
        %v2364 = vrot.slane %v1403, 6
        %v2367 = vrot.slane %v2327, 5
        %v2368 = vrot.slane %v2329, 5
        %v2371 = vsel %vm840, %v2363, %v2367
        %v2372 = vsel %vm840, %v2364, %v2368
        %v2373 = vadd.f32 %v2361, %v2371
        %v2374 = vadd.f32 %v2362, %v2372
        %v2375 = vrot.slane %v1330, 2
        %v2376 = vrot.slane %v1332, 2
        %v2379 = vrot.slane %v2256, 1
        %v2380 = vrot.slane %v2258, 1
        %v2383 = vsel %vm840, %v2375, %v2379
        %v2384 = vsel %vm840, %v2376, %v2380
        %v2385 = vrot.slane %v1401, 5
        %v2386 = vrot.slane %v1403, 5
        %v2389 = vrot.slane %v2327, 4
        %v2390 = vrot.slane %v2329, 4
        %v2393 = vsel %vm840, %v2385, %v2389
        %v2394 = vsel %vm840, %v2386, %v2390
        %v2395 = vadd.f32 %v2383, %v2393
        %v2396 = vadd.f32 %v2384, %v2394
        %v2397 = vrot.slane %v1330, 3
        %v2398 = vrot.slane %v1332, 3
        %v2401 = vrot.slane %v2256, 2
        %v2402 = vrot.slane %v2258, 2
        %v2405 = vsel %vm840, %v2397, %v2401
        %v2406 = vsel %vm840, %v2398, %v2402
        %v2407 = vrot.slane %v1401, 4
        %v2408 = vrot.slane %v1403, 4
        %v2411 = vrot.slane %v2327, 3
        %v2412 = vrot.slane %v2329, 3
        %v2415 = vsel %vm840, %v2407, %v2411
        %v2416 = vsel %vm840, %v2408, %v2412
        %v2417 = vadd.f32 %v2405, %v2415
        %v2418 = vadd.f32 %v2406, %v2416
        %v2419 = vrot.slane %v1330, 4
        %v2420 = vrot.slane %v1332, 4
        %v2423 = vrot.slane %v2256, 3
        %v2424 = vrot.slane %v2258, 3
        %v2427 = vsel %vm840, %v2419, %v2423
        %v2428 = vsel %vm840, %v2420, %v2424
        %v2429 = vrot.slane %v1401, 3
        %v2430 = vrot.slane %v1403, 3
        %v2433 = vrot.slane %v2327, 2
        %v2434 = vrot.slane %v2329, 2
        %v2437 = vsel %vm840, %v2429, %v2433
        %v2438 = vsel %vm840, %v2430, %v2434
        %v2439 = vadd.f32 %v2427, %v2437
        %v2440 = vadd.f32 %v2428, %v2438
        %v2441 = vrot.slane %v1330, 5
        %v2442 = vrot.slane %v1332, 5
        %v2445 = vrot.slane %v2256, 4
        %v2446 = vrot.slane %v2258, 4
        %v2449 = vsel %vm840, %v2441, %v2445
        %v2450 = vsel %vm840, %v2442, %v2446
        %v2451 = vrot.slane %v1401, 2
        %v2452 = vrot.slane %v1403, 2
        %v2455 = vrot.slane %v2327, 1
        %v2456 = vrot.slane %v2329, 1
        %v2459 = vsel %vm840, %v2451, %v2455
        %v2460 = vsel %vm840, %v2452, %v2456
        %v2461 = vadd.f32 %v2449, %v2459
        %v2462 = vadd.f32 %v2450, %v2460
        %v2463 = vrot.slane %v1330, 6
        %v2464 = vrot.slane %v1332, 6
        %v2467 = vrot.slane %v2256, 5
        %v2468 = vrot.slane %v2258, 5
        %v2471 = vsel %vm840, %v2463, %v2467
        %v2472 = vsel %vm840, %v2464, %v2468
        %v2473 = vrot.slane %v1401, 1
        %v2474 = vrot.slane %v1403, 1
        %v2477 = vsel %vm840, %v2473, %v2327
        %v2478 = vsel %vm840, %v2474, %v2329
        %v2479 = vadd.f32 %v2471, %v2477
        %v2480 = vadd.f32 %v2472, %v2478
        %v2481 = vrot.slane %v1330, 7
        %v2482 = vrot.slane %v1332, 7
        %v2485 = vrot.slane %v2256, 6
        %v2486 = vrot.slane %v2258, 6
        %v2489 = vsel %vm840, %v2481, %v2485
        %v2490 = vsel %vm840, %v2482, %v2486
        %v2491 = vrot.slane %v2327, 7
        %v2492 = vrot.slane %v2329, 7
        %v2495 = vsel %vm840, %v1401, %v2491
        %v2496 = vsel %vm840, %v1403, %v2492
        %v2497 = vadd.f32 %v2489, %v2495
        %v2498 = vadd.f32 %v2490, %v2496
        %s2499 = smul.u32 %s31, 2
        %v2500 = vlaneseq
        %v2501 = vshrl.u32 %v2500, 7
        %vm2502 = vcmp.eq.s32.totalorder %v2501, 0
        %s2503 = sld [smem:[#allocation3 + %s2499]]
        %v2504 = vstv %s2503
        %v2505 = vsel %vm2502, %v2504, 0
        %vm2506 = vcmp.eq.s32.totalorder %v2501, 1
        %s2507 = sadd.s32 %s2499, 1
        %s2508 = sld [smem:[#allocation3 + %s2507]]
        %v2509 = vstv %s2508
        %v2510 = vsel %vm2506, %v2509, %v2505
        %v2511 = vadd.s32 %v445, 128
        %vm2512 = vcmp.ge.s32.totalorder %v445, 128
        %vm2513 = vcmp.ge.s32.totalorder %v2511, 128
        %vm2514 = vcmp.lt.s32.totalorder %v445, 192
        %vm2515 = vcmp.lt.s32.totalorder %v2511, 192
        %vm2516 = vmand %vm2512, %vm2514
        %vm2517 = vmand %vm2513, %vm2515
        %v2518 = vsel %vm2516, 1.0, 0.5
        %v2519 = vsel %vm2517, 1.0, 0.5
        %v2520 = vsel %vm2516, 0.0, 0.5
        %v2521 = vsel %vm2517, 0.0, 0.5
        %v2522 = vld [vmem:[%s7] sm:$0xff]
        %v2523 = vld [vmem:[%s7 + $0x8] sm:$0xff]
        %v2524 = vld [vmem:[%s7 + $0x10] sm:$0xff]
        %v2525 = vld [vmem:[%s7 + $0x18] sm:$0xff]
        %v2526 = vld [vmem:[%s7 + $0x20] sm:$0xff]
        %v2527 = vld [vmem:[%s7 + $0x28] sm:$0xff]
        %v2528 = vld [vmem:[%s7 + $0x30] sm:$0xff]
        %v2529 = vld [vmem:[%s7 + $0x38] sm:$0xff]
        %v2530 = vld [vmem:[%s7 + $0x40] sm:$0xff]
        %v2531 = vld [vmem:[%s7 + $0x48] sm:$0xff]
        %v2532 = vld [vmem:[%s7 + $0x50] sm:$0xff]
        %v2533 = vld [vmem:[%s7 + $0x58] sm:$0xff]
        %v2534 = vld [vmem:[%s7 + $0x60] sm:$0xff]
        %v2535 = vld [vmem:[%s7 + $0x68] sm:$0xff]
        %v2536 = vld [vmem:[%s7 + $0x70] sm:$0xff]
        %v2537 = vld [vmem:[%s7 + $0x78] sm:$0xff]
        %v2539 = vsel %vm911, 0.0, 0
        %2541 = vmatprep.subr.mxu0 %v2523
        %2542 = vmatpush1.msra.mxu0 %v2522
        %2543 = vmatprep.subr.mxu0 %v2525
        %2544 = vmatpush1.msra.mxu0 %v2524
        %2545 = vmatprep.subr.mxu0 %v2527
        %2546 = vmatpush1.msra.mxu0 %v2526
        %2547 = vmatprep.subr.mxu0 %v2529
        %2548 = vmatpush1.msra.mxu0 %v2528
        %2549 = vmatprep.subr.mxu0 %v2531
        %2550 = vmatpush1.msra.mxu0 %v2530
        %2551 = vmatprep.subr.mxu0 %v2533
        %2552 = vmatpush1.msra.mxu0 %v2532
        %2553 = vmatprep.subr.mxu0 %v2535
        %2554 = vmatpush1.msra.mxu0 %v2534
        %2555 = vmatprep.subr.mxu0 %v2537
        %2556 = vmatpush1.msra.mxu0 %v2536
        %2557 = vmatprep.subr.mxu0 0.0
        %2558 = vmatpush1.msra.mxu0 0.0
        %2559 = vmatprep.subr.mxu0 0.0
        %2560 = vmatpush1.msra.mxu0 0.0
        %2561 = vmatprep.subr.mxu0 0.0
        %2562 = vmatpush1.msra.mxu0 0.0
        %2563 = vmatprep.subr.mxu0 0.0
        %2564 = vmatpush1.msra.mxu0 0.0
        %2565 = vmatprep.subr.mxu0 0.0
        %2566 = vmatpush1.msra.mxu0 0.0
        %2567 = vmatprep.subr.mxu0 0.0
        %2568 = vmatpush1.msra.mxu0 0.0
        %2569 = vmatprep.subr.mxu0 0.0
        %2570 = vmatpush1.msra.mxu0 0.0
        %2571 = vmatprep.subr.mxu0 0.0
        %2572 = vmatpush1.msra.mxu0 0.0
        %2573 = vmatprep.subr.mxu0 0.0
        %2574 = vmatpush1.msra.mxu0 0.0
        %2575 = vmatprep.subr.mxu0 0.0
        %2576 = vmatpush1.msra.mxu0 0.0
        %2577 = vmatprep.subr.mxu0 0.0
        %2578 = vmatpush1.msra.mxu0 0.0
        %2579 = vmatprep.subr.mxu0 0.0
        %2580 = vmatpush1.msra.mxu0 0.0
        %2581 = vmatprep.subr.mxu0 0.0
        %2582 = vmatpush1.msra.mxu0 0.0
        %2583 = vmatprep.subr.mxu0 0.0
        %2584 = vmatpush1.msra.mxu0 0.0
        %2585 = vmatprep.subr.mxu0 0.0
        %2586 = vmatpush1.msra.mxu0 0.0
        %2587 = vmatprep.subr.mxu0 0.0
        %2588 = vmatpush1.msra.mxu0 0.0
        %2589 = vmatprep.subr.mxu0 0.0
        %2590 = vmatpush1.msra.mxu0 0.0
        %2591 = vmatprep.subr.mxu0 0.0
        %2592 = vmatpush1.msra.mxu0 0.0
        %2593 = vmatprep.subr.mxu0 0.0
        %2594 = vmatpush1.msra.mxu0 0.0
        %2595 = vmatprep.subr.mxu0 0.0
        %2596 = vmatpush1.msra.mxu0 0.0
        %2597 = vmatprep.subr.mxu0 0.0
        %2598 = vmatpush1.msra.mxu0 0.0
        %2599 = vmatprep.subr.mxu0 0.0
        %2600 = vmatpush1.msra.mxu0 0.0
        %2601 = vmatprep.subr.mxu0 0.0
        %2602 = vmatpush1.msra.mxu0 0.0
        %2603 = vmatprep.subr.mxu0 0.0
        %2604 = vmatpush1.msra.mxu0 0.0
        %2605 = vmatprep.mubr.f32.mxu0 0.0
        %2606 = vmatmul.mubr.f32.gmra.mrb[0].mxu0 %v2539
        %v2607 = vpop.f32.mrb[0].mxu0
        %v2608 = vadd.f32 0.0, %v2607
        %v2609 = vpop.f32.mrb[0].mxu0
        %v2610 = vadd.f32 0.0, %v2609
        %2611 = vdwg.mxu0
        %v2612 = vadd.f32 %v2353, %v2608
        %v2613 = vadd.f32 %v2354, %v2610
        %v2614 = vmul.f32 %v2612, %v2518
        %v2615 = vmul.f32 %v2613, %v2519
        %v2616 = vtanh.pop %v2614
        %v2617 = vtanh.pop %v2615
        %v2618 = vmul.f32 %v2616, %v2518
        %v2619 = vmul.f32 %v2617, %v2519
        %v2620 = vadd.f32 %v2618, %v2520
        %v2621 = vadd.f32 %v2619, %v2521
        %v2622 = vmul.f32 %v2620, 0.0
        %v2623 = vmul.f32 %v2620, %v2621
        %2625 = vrot.lane.b32.xlu0 %v2623, 64
        %v2626 = vpop.permute.xlu0 %2625
        %v2628 = vadd.f32 %v2622, %v2626
        %v2629 = vtanh.pop %v2628
        %v2630 = vmul.f32 %v2621, %v2629
        %vm2631 = vcmp.lt.s32.totalorder %v445, 32
        %v2632 = vsel %vm2631, 0, 7
        %vm2633 = vcmp.gt.s32.totalorder %v2510, %v2632
        %2635 = vrot.lane.b32.xlu0 %v2630, 64
        %v2636 = vpop.permute.xlu0 %2635
        %v2638 = vsel %vm2633, %v2636, 0.0
        %2640 = vrot.lane.b32.xlu0 %v2628, 64
        %v2641 = vpop.permute.xlu0 %2640
        %v2643 = vsel %vm2633, %v2641, 0.0
        %v2645 = vsel %vm911, %v2638, 0
        %2647 = vmatprep.subr.mxu0 %v2523
        %2648 = vmatpush1.msra.mxu0 %v2522
        %2649 = vmatprep.subr.mxu0 %v2525
        %2650 = vmatpush1.msra.mxu0 %v2524
        %2651 = vmatprep.subr.mxu0 %v2527
        %2652 = vmatpush1.msra.mxu0 %v2526
        %2653 = vmatprep.subr.mxu0 %v2529
        %2654 = vmatpush1.msra.mxu0 %v2528
        %2655 = vmatprep.subr.mxu0 %v2531
        %2656 = vmatpush1.msra.mxu0 %v2530
        %2657 = vmatprep.subr.mxu0 %v2533
        %2658 = vmatpush1.msra.mxu0 %v2532
        %2659 = vmatprep.subr.mxu0 %v2535
        %2660 = vmatpush1.msra.mxu0 %v2534
        %2661 = vmatprep.subr.mxu0 %v2537
        %2662 = vmatpush1.msra.mxu0 %v2536
        %2663 = vmatprep.subr.mxu0 0.0
        %2664 = vmatpush1.msra.mxu0 0.0
        %2665 = vmatprep.subr.mxu0 0.0
        %2666 = vmatpush1.msra.mxu0 0.0
        %2667 = vmatprep.subr.mxu0 0.0
        %2668 = vmatpush1.msra.mxu0 0.0
        %2669 = vmatprep.subr.mxu0 0.0
        %2670 = vmatpush1.msra.mxu0 0.0
        %2671 = vmatprep.subr.mxu0 0.0
        %2672 = vmatpush1.msra.mxu0 0.0
        %2673 = vmatprep.subr.mxu0 0.0
        %2674 = vmatpush1.msra.mxu0 0.0
        %2675 = vmatprep.subr.mxu0 0.0
        %2676 = vmatpush1.msra.mxu0 0.0
        %2677 = vmatprep.subr.mxu0 0.0
        %2678 = vmatpush1.msra.mxu0 0.0
        %2679 = vmatprep.subr.mxu0 0.0
        %2680 = vmatpush1.msra.mxu0 0.0
        %2681 = vmatprep.subr.mxu0 0.0
        %2682 = vmatpush1.msra.mxu0 0.0
        %2683 = vmatprep.subr.mxu0 0.0
        %2684 = vmatpush1.msra.mxu0 0.0
        %2685 = vmatprep.subr.mxu0 0.0
        %2686 = vmatpush1.msra.mxu0 0.0
        %2687 = vmatprep.subr.mxu0 0.0
        %2688 = vmatpush1.msra.mxu0 0.0
        %2689 = vmatprep.subr.mxu0 0.0
        %2690 = vmatpush1.msra.mxu0 0.0
        %2691 = vmatprep.subr.mxu0 0.0
        %2692 = vmatpush1.msra.mxu0 0.0
        %2693 = vmatprep.subr.mxu0 0.0
        %2694 = vmatpush1.msra.mxu0 0.0
        %2695 = vmatprep.subr.mxu0 0.0
        %2696 = vmatpush1.msra.mxu0 0.0
        %2697 = vmatprep.subr.mxu0 0.0
        %2698 = vmatpush1.msra.mxu0 0.0
        %2699 = vmatprep.subr.mxu0 0.0
        %2700 = vmatpush1.msra.mxu0 0.0
        %2701 = vmatprep.subr.mxu0 0.0
        %2702 = vmatpush1.msra.mxu0 0.0
        %2703 = vmatprep.subr.mxu0 0.0
        %2704 = vmatpush1.msra.mxu0 0.0
        %2705 = vmatprep.subr.mxu0 0.0
        %2706 = vmatpush1.msra.mxu0 0.0
        %2707 = vmatprep.subr.mxu0 0.0
        %2708 = vmatpush1.msra.mxu0 0.0
        %2709 = vmatprep.subr.mxu0 0.0
        %2710 = vmatpush1.msra.mxu0 0.0
        %2711 = vmatprep.mubr.f32.mxu0 0.0
        %2712 = vmatmul.mubr.f32.gmra.mrb[0].mxu0 %v2645
        %v2713 = vpop.f32.mrb[0].mxu0
        %v2714 = vadd.f32 0.0, %v2713
        %v2715 = vpop.f32.mrb[0].mxu0
        %v2716 = vadd.f32 0.0, %v2715
        %2717 = vdwg.mxu0
        %v2718 = vadd.f32 %v2373, %v2714
        %v2719 = vadd.f32 %v2374, %v2716
        %v2720 = vmul.f32 %v2718, %v2518
        %v2721 = vmul.f32 %v2719, %v2519
        %v2722 = vtanh.pop %v2720
        %v2723 = vtanh.pop %v2721
        %v2724 = vmul.f32 %v2722, %v2518
        %v2725 = vmul.f32 %v2723, %v2519
        %v2726 = vadd.f32 %v2724, %v2520
        %v2727 = vadd.f32 %v2725, %v2521
        %2729 = vrot.lane.b32.xlu0 %v2643, 64
        %v2730 = vpop.permute.xlu0 %2729
        %v2732 = vmul.f32 %v2726, %v2730
        %v2733 = vmul.f32 %v2726, %v2727
        %2735 = vrot.lane.b32.xlu0 %v2733, 64
        %v2736 = vpop.permute.xlu0 %2735
        %v2738 = vadd.f32 %v2732, %v2736
        %v2739 = vtanh.pop %v2738
        %v2740 = vmul.f32 %v2727, %v2739
        %v2741 = vsel %vm2631, 1, 6
        %vm2742 = vcmp.gt.s32.totalorder %v2510, %v2741
        %2744 = vrot.lane.b32.xlu0 %v2740, 64
        %v2745 = vpop.permute.xlu0 %2744
        %v2747 = vsel %vm2742, %v2745, %v2638
        %2749 = vrot.lane.b32.xlu0 %v2738, 64
        %v2750 = vpop.permute.xlu0 %2749
        %v2752 = vsel %vm2742, %v2750, %v2643
        %v2754 = vsel %vm911, %v2747, 0
        %2756 = vmatprep.subr.mxu0 %v2523
        %2757 = vmatpush1.msra.mxu0 %v2522
        %2758 = vmatprep.subr.mxu0 %v2525
        %2759 = vmatpush1.msra.mxu0 %v2524
        %2760 = vmatprep.subr.mxu0 %v2527
        %2761 = vmatpush1.msra.mxu0 %v2526
        %2762 = vmatprep.subr.mxu0 %v2529
        %2763 = vmatpush1.msra.mxu0 %v2528
        %2764 = vmatprep.subr.mxu0 %v2531
        %2765 = vmatpush1.msra.mxu0 %v2530
        %2766 = vmatprep.subr.mxu0 %v2533
        %2767 = vmatpush1.msra.mxu0 %v2532
        %2768 = vmatprep.subr.mxu0 %v2535
        %2769 = vmatpush1.msra.mxu0 %v2534
        %2770 = vmatprep.subr.mxu0 %v2537
        %2771 = vmatpush1.msra.mxu0 %v2536
        %2772 = vmatprep.subr.mxu0 0.0
        %2773 = vmatpush1.msra.mxu0 0.0
        %2774 = vmatprep.subr.mxu0 0.0
        %2775 = vmatpush1.msra.mxu0 0.0
        %2776 = vmatprep.subr.mxu0 0.0
        %2777 = vmatpush1.msra.mxu0 0.0
        %2778 = vmatprep.subr.mxu0 0.0
        %2779 = vmatpush1.msra.mxu0 0.0
        %2780 = vmatprep.subr.mxu0 0.0
        %2781 = vmatpush1.msra.mxu0 0.0
        %2782 = vmatprep.subr.mxu0 0.0
        %2783 = vmatpush1.msra.mxu0 0.0
        %2784 = vmatprep.subr.mxu0 0.0
        %2785 = vmatpush1.msra.mxu0 0.0
        %2786 = vmatprep.subr.mxu0 0.0
        %2787 = vmatpush1.msra.mxu0 0.0
        %2788 = vmatprep.subr.mxu0 0.0
        %2789 = vmatpush1.msra.mxu0 0.0
        %2790 = vmatprep.subr.mxu0 0.0
        %2791 = vmatpush1.msra.mxu0 0.0
        %2792 = vmatprep.subr.mxu0 0.0
        %2793 = vmatpush1.msra.mxu0 0.0
        %2794 = vmatprep.subr.mxu0 0.0
        %2795 = vmatpush1.msra.mxu0 0.0
        %2796 = vmatprep.subr.mxu0 0.0
        %2797 = vmatpush1.msra.mxu0 0.0
        %2798 = vmatprep.subr.mxu0 0.0
        %2799 = vmatpush1.msra.mxu0 0.0
        %2800 = vmatprep.subr.mxu0 0.0
        %2801 = vmatpush1.msra.mxu0 0.0
        %2802 = vmatprep.subr.mxu0 0.0
        %2803 = vmatpush1.msra.mxu0 0.0
        %2804 = vmatprep.subr.mxu0 0.0
        %2805 = vmatpush1.msra.mxu0 0.0
        %2806 = vmatprep.subr.mxu0 0.0
        %2807 = vmatpush1.msra.mxu0 0.0
        %2808 = vmatprep.subr.mxu0 0.0
        %2809 = vmatpush1.msra.mxu0 0.0
        %2810 = vmatprep.subr.mxu0 0.0
        %2811 = vmatpush1.msra.mxu0 0.0
        %2812 = vmatprep.subr.mxu0 0.0
        %2813 = vmatpush1.msra.mxu0 0.0
        %2814 = vmatprep.subr.mxu0 0.0
        %2815 = vmatpush1.msra.mxu0 0.0
        %2816 = vmatprep.subr.mxu0 0.0
        %2817 = vmatpush1.msra.mxu0 0.0
        %2818 = vmatprep.subr.mxu0 0.0
        %2819 = vmatpush1.msra.mxu0 0.0
        %2820 = vmatprep.mubr.f32.mxu0 0.0
        %2821 = vmatmul.mubr.f32.gmra.mrb[0].mxu0 %v2754
        %v2822 = vpop.f32.mrb[0].mxu0
        %v2823 = vadd.f32 0.0, %v2822
        %v2824 = vpop.f32.mrb[0].mxu0
        %v2825 = vadd.f32 0.0, %v2824
        %2826 = vdwg.mxu0
        %v2827 = vadd.f32 %v2395, %v2823
        %v2828 = vadd.f32 %v2396, %v2825
        %v2829 = vmul.f32 %v2827, %v2518
        %v2830 = vmul.f32 %v2828, %v2519
        %v2831 = vtanh.pop %v2829
        %v2832 = vtanh.pop %v2830
        %v2833 = vmul.f32 %v2831, %v2518
        %v2834 = vmul.f32 %v2832, %v2519
        %v2835 = vadd.f32 %v2833, %v2520
        %v2836 = vadd.f32 %v2834, %v2521
        %2838 = vrot.lane.b32.xlu0 %v2752, 64
        %v2839 = vpop.permute.xlu0 %2838
        %v2841 = vmul.f32 %v2835, %v2839
        %v2842 = vmul.f32 %v2835, %v2836
        %2844 = vrot.lane.b32.xlu0 %v2842, 64
        %v2845 = vpop.permute.xlu0 %2844
        %v2847 = vadd.f32 %v2841, %v2845
        %v2848 = vtanh.pop %v2847
        %v2849 = vmul.f32 %v2836, %v2848
        %v2850 = vsel %vm2631, 2, 5
        %vm2851 = vcmp.gt.s32.totalorder %v2510, %v2850
        %2853 = vrot.lane.b32.xlu0 %v2849, 64
        %v2854 = vpop.permute.xlu0 %2853
        %v2856 = vsel %vm2851, %v2854, %v2747
        %2858 = vrot.lane.b32.xlu0 %v2847, 64
        %v2859 = vpop.permute.xlu0 %2858
        %v2861 = vsel %vm2851, %v2859, %v2752
        %v2863 = vsel %vm911, %v2856, 0
        %2865 = vmatprep.subr.mxu0 %v2523
        %2866 = vmatpush1.msra.mxu0 %v2522
        %2867 = vmatprep.subr.mxu0 %v2525
        %2868 = vmatpush1.msra.mxu0 %v2524
        %2869 = vmatprep.subr.mxu0 %v2527
        %2870 = vmatpush1.msra.mxu0 %v2526
        %2871 = vmatprep.subr.mxu0 %v2529
        %2872 = vmatpush1.msra.mxu0 %v2528
        %2873 = vmatprep.subr.mxu0 %v2531
        %2874 = vmatpush1.msra.mxu0 %v2530
        %2875 = vmatprep.subr.mxu0 %v2533
        %2876 = vmatpush1.msra.mxu0 %v2532
        %2877 = vmatprep.subr.mxu0 %v2535
        %2878 = vmatpush1.msra.mxu0 %v2534
        %2879 = vmatprep.subr.mxu0 %v2537
        %2880 = vmatpush1.msra.mxu0 %v2536
        %2881 = vmatprep.subr.mxu0 0.0
        %2882 = vmatpush1.msra.mxu0 0.0
        %2883 = vmatprep.subr.mxu0 0.0
        %2884 = vmatpush1.msra.mxu0 0.0
        %2885 = vmatprep.subr.mxu0 0.0
        %2886 = vmatpush1.msra.mxu0 0.0
        %2887 = vmatprep.subr.mxu0 0.0
        %2888 = vmatpush1.msra.mxu0 0.0
        %2889 = vmatprep.subr.mxu0 0.0
        %2890 = vmatpush1.msra.mxu0 0.0
        %2891 = vmatprep.subr.mxu0 0.0
        %2892 = vmatpush1.msra.mxu0 0.0
        %2893 = vmatprep.subr.mxu0 0.0
        %2894 = vmatpush1.msra.mxu0 0.0
        %2895 = vmatprep.subr.mxu0 0.0
        %2896 = vmatpush1.msra.mxu0 0.0
        %2897 = vmatprep.subr.mxu0 0.0
        %2898 = vmatpush1.msra.mxu0 0.0
        %2899 = vmatprep.subr.mxu0 0.0
        %2900 = vmatpush1.msra.mxu0 0.0
        %2901 = vmatprep.subr.mxu0 0.0
        %2902 = vmatpush1.msra.mxu0 0.0
        %2903 = vmatprep.subr.mxu0 0.0
        %2904 = vmatpush1.msra.mxu0 0.0
        %2905 = vmatprep.subr.mxu0 0.0
        %2906 = vmatpush1.msra.mxu0 0.0
        %2907 = vmatprep.subr.mxu0 0.0
        %2908 = vmatpush1.msra.mxu0 0.0
        %2909 = vmatprep.subr.mxu0 0.0
        %2910 = vmatpush1.msra.mxu0 0.0
        %2911 = vmatprep.subr.mxu0 0.0
        %2912 = vmatpush1.msra.mxu0 0.0
        %2913 = vmatprep.subr.mxu0 0.0
        %2914 = vmatpush1.msra.mxu0 0.0
        %2915 = vmatprep.subr.mxu0 0.0
        %2916 = vmatpush1.msra.mxu0 0.0
        %2917 = vmatprep.subr.mxu0 0.0
        %2918 = vmatpush1.msra.mxu0 0.0
        %2919 = vmatprep.subr.mxu0 0.0
        %2920 = vmatpush1.msra.mxu0 0.0
        %2921 = vmatprep.subr.mxu0 0.0
        %2922 = vmatpush1.msra.mxu0 0.0
        %2923 = vmatprep.subr.mxu0 0.0
        %2924 = vmatpush1.msra.mxu0 0.0
        %2925 = vmatprep.subr.mxu0 0.0
        %2926 = vmatpush1.msra.mxu0 0.0
        %2927 = vmatprep.subr.mxu0 0.0
        %2928 = vmatpush1.msra.mxu0 0.0
        %2929 = vmatprep.mubr.f32.mxu0 0.0
        %2930 = vmatmul.mubr.f32.gmra.mrb[0].mxu0 %v2863
        %v2931 = vpop.f32.mrb[0].mxu0
        %v2932 = vadd.f32 0.0, %v2931
        %v2933 = vpop.f32.mrb[0].mxu0
        %v2934 = vadd.f32 0.0, %v2933
        %2935 = vdwg.mxu0
        %v2936 = vadd.f32 %v2417, %v2932
        %v2937 = vadd.f32 %v2418, %v2934
        %v2938 = vmul.f32 %v2936, %v2518
        %v2939 = vmul.f32 %v2937, %v2519
        %v2940 = vtanh.pop %v2938
        %v2941 = vtanh.pop %v2939
        %v2942 = vmul.f32 %v2940, %v2518
        %v2943 = vmul.f32 %v2941, %v2519
        %v2944 = vadd.f32 %v2942, %v2520
        %v2945 = vadd.f32 %v2943, %v2521
        %2947 = vrot.lane.b32.xlu0 %v2861, 64
        %v2948 = vpop.permute.xlu0 %2947
        %v2950 = vmul.f32 %v2944, %v2948
        %v2951 = vmul.f32 %v2944, %v2945
        %2953 = vrot.lane.b32.xlu0 %v2951, 64
        %v2954 = vpop.permute.xlu0 %2953
        %v2956 = vadd.f32 %v2950, %v2954
        %v2957 = vtanh.pop %v2956
        %v2958 = vmul.f32 %v2945, %v2957
        %v2959 = vsel %vm2631, 3, 4
        %vm2960 = vcmp.gt.s32.totalorder %v2510, %v2959
        %2962 = vrot.lane.b32.xlu0 %v2958, 64
        %v2963 = vpop.permute.xlu0 %2962
        %v2965 = vsel %vm2960, %v2963, %v2856
        %2967 = vrot.lane.b32.xlu0 %v2956, 64
        %v2968 = vpop.permute.xlu0 %2967
        %v2970 = vsel %vm2960, %v2968, %v2861
        %v2972 = vsel %vm911, %v2965, 0
        %2974 = vmatprep.subr.mxu0 %v2523
        %2975 = vmatpush1.msra.mxu0 %v2522
        %2976 = vmatprep.subr.mxu0 %v2525
        %2977 = vmatpush1.msra.mxu0 %v2524
        %2978 = vmatprep.subr.mxu0 %v2527
        %2979 = vmatpush1.msra.mxu0 %v2526
        %2980 = vmatprep.subr.mxu0 %v2529
        %2981 = vmatpush1.msra.mxu0 %v2528
        %2982 = vmatprep.subr.mxu0 %v2531
        %2983 = vmatpush1.msra.mxu0 %v2530
        %2984 = vmatprep.subr.mxu0 %v2533
        %2985 = vmatpush1.msra.mxu0 %v2532
        %2986 = vmatprep.subr.mxu0 %v2535
        %2987 = vmatpush1.msra.mxu0 %v2534
        %2988 = vmatprep.subr.mxu0 %v2537
        %2989 = vmatpush1.msra.mxu0 %v2536
        %2990 = vmatprep.subr.mxu0 0.0
        %2991 = vmatpush1.msra.mxu0 0.0
        %2992 = vmatprep.subr.mxu0 0.0
        %2993 = vmatpush1.msra.mxu0 0.0
        %2994 = vmatprep.subr.mxu0 0.0
        %2995 = vmatpush1.msra.mxu0 0.0
        %2996 = vmatprep.subr.mxu0 0.0
        %2997 = vmatpush1.msra.mxu0 0.0
        %2998 = vmatprep.subr.mxu0 0.0
        %2999 = vmatpush1.msra.mxu0 0.0
        %3000 = vmatprep.subr.mxu0 0.0
        %3001 = vmatpush1.msra.mxu0 0.0
        %3002 = vmatprep.subr.mxu0 0.0
        %3003 = vmatpush1.msra.mxu0 0.0
        %3004 = vmatprep.subr.mxu0 0.0
        %3005 = vmatpush1.msra.mxu0 0.0
        %3006 = vmatprep.subr.mxu0 0.0
        %3007 = vmatpush1.msra.mxu0 0.0
        %3008 = vmatprep.subr.mxu0 0.0
        %3009 = vmatpush1.msra.mxu0 0.0
        %3010 = vmatprep.subr.mxu0 0.0
        %3011 = vmatpush1.msra.mxu0 0.0
        %3012 = vmatprep.subr.mxu0 0.0
        %3013 = vmatpush1.msra.mxu0 0.0
        %3014 = vmatprep.subr.mxu0 0.0
        %3015 = vmatpush1.msra.mxu0 0.0
        %3016 = vmatprep.subr.mxu0 0.0
        %3017 = vmatpush1.msra.mxu0 0.0
        %3018 = vmatprep.subr.mxu0 0.0
        %3019 = vmatpush1.msra.mxu0 0.0
        %3020 = vmatprep.subr.mxu0 0.0
        %3021 = vmatpush1.msra.mxu0 0.0
        %3022 = vmatprep.subr.mxu0 0.0
        %3023 = vmatpush1.msra.mxu0 0.0
        %3024 = vmatprep.subr.mxu0 0.0
        %3025 = vmatpush1.msra.mxu0 0.0
        %3026 = vmatprep.subr.mxu0 0.0
        %3027 = vmatpush1.msra.mxu0 0.0
        %3028 = vmatprep.subr.mxu0 0.0
        %3029 = vmatpush1.msra.mxu0 0.0
        %3030 = vmatprep.subr.mxu0 0.0
        %3031 = vmatpush1.msra.mxu0 0.0
        %3032 = vmatprep.subr.mxu0 0.0
        %3033 = vmatpush1.msra.mxu0 0.0
        %3034 = vmatprep.subr.mxu0 0.0
        %3035 = vmatpush1.msra.mxu0 0.0
        %3036 = vmatprep.subr.mxu0 0.0
        %3037 = vmatpush1.msra.mxu0 0.0
        %3038 = vmatprep.mubr.f32.mxu0 0.0
        %3039 = vmatmul.mubr.f32.gmra.mrb[0].mxu0 %v2972
        %v3040 = vpop.f32.mrb[0].mxu0
        %v3041 = vadd.f32 0.0, %v3040
        %v3042 = vpop.f32.mrb[0].mxu0
        %v3043 = vadd.f32 0.0, %v3042
        %3044 = vdwg.mxu0
        %v3045 = vadd.f32 %v2439, %v3041
        %v3046 = vadd.f32 %v2440, %v3043
        %v3047 = vmul.f32 %v3045, %v2518
        %v3048 = vmul.f32 %v3046, %v2519
        %v3049 = vtanh.pop %v3047
        %v3050 = vtanh.pop %v3048
        %v3051 = vmul.f32 %v3049, %v2518
        %v3052 = vmul.f32 %v3050, %v2519
        %v3053 = vadd.f32 %v3051, %v2520
        %v3054 = vadd.f32 %v3052, %v2521
        %3056 = vrot.lane.b32.xlu0 %v2970, 64
        %v3057 = vpop.permute.xlu0 %3056
        %v3059 = vmul.f32 %v3053, %v3057
        %v3060 = vmul.f32 %v3053, %v3054
        %3062 = vrot.lane.b32.xlu0 %v3060, 64
        %v3063 = vpop.permute.xlu0 %3062
        %v3065 = vadd.f32 %v3059, %v3063
        %v3066 = vtanh.pop %v3065
        %v3067 = vmul.f32 %v3054, %v3066
        %v3068 = vsel %vm2631, 4, 3
        %vm3069 = vcmp.gt.s32.totalorder %v2510, %v3068
        %3071 = vrot.lane.b32.xlu0 %v3067, 64
        %v3072 = vpop.permute.xlu0 %3071
        %v3074 = vsel %vm3069, %v3072, %v2965
        %3076 = vrot.lane.b32.xlu0 %v3065, 64
        %v3077 = vpop.permute.xlu0 %3076
        %v3079 = vsel %vm3069, %v3077, %v2970
        %v3081 = vsel %vm911, %v3074, 0
        %3083 = vmatprep.subr.mxu0 %v2523
        %3084 = vmatpush1.msra.mxu0 %v2522
        %3085 = vmatprep.subr.mxu0 %v2525
        %3086 = vmatpush1.msra.mxu0 %v2524
        %3087 = vmatprep.subr.mxu0 %v2527
        %3088 = vmatpush1.msra.mxu0 %v2526
        %3089 = vmatprep.subr.mxu0 %v2529
        %3090 = vmatpush1.msra.mxu0 %v2528
        %3091 = vmatprep.subr.mxu0 %v2531
        %3092 = vmatpush1.msra.mxu0 %v2530
        %3093 = vmatprep.subr.mxu0 %v2533
        %3094 = vmatpush1.msra.mxu0 %v2532
        %3095 = vmatprep.subr.mxu0 %v2535
        %3096 = vmatpush1.msra.mxu0 %v2534
        %3097 = vmatprep.subr.mxu0 %v2537
        %3098 = vmatpush1.msra.mxu0 %v2536
        %3099 = vmatprep.subr.mxu0 0.0
        %3100 = vmatpush1.msra.mxu0 0.0
        %3101 = vmatprep.subr.mxu0 0.0
        %3102 = vmatpush1.msra.mxu0 0.0
        %3103 = vmatprep.subr.mxu0 0.0
        %3104 = vmatpush1.msra.mxu0 0.0
        %3105 = vmatprep.subr.mxu0 0.0
        %3106 = vmatpush1.msra.mxu0 0.0
        %3107 = vmatprep.subr.mxu0 0.0
        %3108 = vmatpush1.msra.mxu0 0.0
        %3109 = vmatprep.subr.mxu0 0.0
        %3110 = vmatpush1.msra.mxu0 0.0
        %3111 = vmatprep.subr.mxu0 0.0
        %3112 = vmatpush1.msra.mxu0 0.0
        %3113 = vmatprep.subr.mxu0 0.0
        %3114 = vmatpush1.msra.mxu0 0.0
        %3115 = vmatprep.subr.mxu0 0.0
        %3116 = vmatpush1.msra.mxu0 0.0
        %3117 = vmatprep.subr.mxu0 0.0
        %3118 = vmatpush1.msra.mxu0 0.0
        %3119 = vmatprep.subr.mxu0 0.0
        %3120 = vmatpush1.msra.mxu0 0.0
        %3121 = vmatprep.subr.mxu0 0.0
        %3122 = vmatpush1.msra.mxu0 0.0
        %3123 = vmatprep.subr.mxu0 0.0
        %3124 = vmatpush1.msra.mxu0 0.0
        %3125 = vmatprep.subr.mxu0 0.0
        %3126 = vmatpush1.msra.mxu0 0.0
        %3127 = vmatprep.subr.mxu0 0.0
        %3128 = vmatpush1.msra.mxu0 0.0
        %3129 = vmatprep.subr.mxu0 0.0
        %3130 = vmatpush1.msra.mxu0 0.0
        %3131 = vmatprep.subr.mxu0 0.0
        %3132 = vmatpush1.msra.mxu0 0.0
        %3133 = vmatprep.subr.mxu0 0.0
        %3134 = vmatpush1.msra.mxu0 0.0
        %3135 = vmatprep.subr.mxu0 0.0
        %3136 = vmatpush1.msra.mxu0 0.0
        %3137 = vmatprep.subr.mxu0 0.0
        %3138 = vmatpush1.msra.mxu0 0.0
        %3139 = vmatprep.subr.mxu0 0.0
        %3140 = vmatpush1.msra.mxu0 0.0
        %3141 = vmatprep.subr.mxu0 0.0
        %3142 = vmatpush1.msra.mxu0 0.0
        %3143 = vmatprep.subr.mxu0 0.0
        %3144 = vmatpush1.msra.mxu0 0.0
        %3145 = vmatprep.subr.mxu0 0.0
        %3146 = vmatpush1.msra.mxu0 0.0
        %3147 = vmatprep.mubr.f32.mxu0 0.0
        %3148 = vmatmul.mubr.f32.gmra.mrb[0].mxu0 %v3081
        %v3149 = vpop.f32.mrb[0].mxu0
        %v3150 = vadd.f32 0.0, %v3149
        %v3151 = vpop.f32.mrb[0].mxu0
        %v3152 = vadd.f32 0.0, %v3151
        %3153 = vdwg.mxu0
        %v3154 = vadd.f32 %v2461, %v3150
        %v3155 = vadd.f32 %v2462, %v3152
        %v3156 = vmul.f32 %v3154, %v2518
        %v3157 = vmul.f32 %v3155, %v2519
        %v3158 = vtanh.pop %v3156
        %v3159 = vtanh.pop %v3157
        %v3160 = vmul.f32 %v3158, %v2518
        %v3161 = vmul.f32 %v3159, %v2519
        %v3162 = vadd.f32 %v3160, %v2520
        %v3163 = vadd.f32 %v3161, %v2521
        %3165 = vrot.lane.b32.xlu0 %v3079, 64
        %v3166 = vpop.permute.xlu0 %3165
        %v3168 = vmul.f32 %v3162, %v3166
        %v3169 = vmul.f32 %v3162, %v3163
        %3171 = vrot.lane.b32.xlu0 %v3169, 64
        %v3172 = vpop.permute.xlu0 %3171
        %v3174 = vadd.f32 %v3168, %v3172
        %v3175 = vtanh.pop %v3174
        %v3176 = vmul.f32 %v3163, %v3175
        %v3177 = vsel %vm2631, 5, 2
        %vm3178 = vcmp.gt.s32.totalorder %v2510, %v3177
        %3180 = vrot.lane.b32.xlu0 %v3176, 64
        %v3181 = vpop.permute.xlu0 %3180
        %v3183 = vsel %vm3178, %v3181, %v3074
        %3185 = vrot.lane.b32.xlu0 %v3174, 64
        %v3186 = vpop.permute.xlu0 %3185
        %v3188 = vsel %vm3178, %v3186, %v3079
        %v3190 = vsel %vm911, %v3183, 0
        %3192 = vmatprep.subr.mxu0 %v2523
        %3193 = vmatpush1.msra.mxu0 %v2522
        %3194 = vmatprep.subr.mxu0 %v2525
        %3195 = vmatpush1.msra.mxu0 %v2524
        %3196 = vmatprep.subr.mxu0 %v2527
        %3197 = vmatpush1.msra.mxu0 %v2526
        %3198 = vmatprep.subr.mxu0 %v2529
        %3199 = vmatpush1.msra.mxu0 %v2528
        %3200 = vmatprep.subr.mxu0 %v2531
        %3201 = vmatpush1.msra.mxu0 %v2530
        %3202 = vmatprep.subr.mxu0 %v2533
        %3203 = vmatpush1.msra.mxu0 %v2532
        %3204 = vmatprep.subr.mxu0 %v2535
        %3205 = vmatpush1.msra.mxu0 %v2534
        %3206 = vmatprep.subr.mxu0 %v2537
        %3207 = vmatpush1.msra.mxu0 %v2536
        %3208 = vmatprep.subr.mxu0 0.0
        %3209 = vmatpush1.msra.mxu0 0.0
        %3210 = vmatprep.subr.mxu0 0.0
        %3211 = vmatpush1.msra.mxu0 0.0
        %3212 = vmatprep.subr.mxu0 0.0
        %3213 = vmatpush1.msra.mxu0 0.0
        %3214 = vmatprep.subr.mxu0 0.0
        %3215 = vmatpush1.msra.mxu0 0.0
        %3216 = vmatprep.subr.mxu0 0.0
        %3217 = vmatpush1.msra.mxu0 0.0
        %3218 = vmatprep.subr.mxu0 0.0
        %3219 = vmatpush1.msra.mxu0 0.0
        %3220 = vmatprep.subr.mxu0 0.0
        %3221 = vmatpush1.msra.mxu0 0.0
        %3222 = vmatprep.subr.mxu0 0.0
        %3223 = vmatpush1.msra.mxu0 0.0
        %3224 = vmatprep.subr.mxu0 0.0
        %3225 = vmatpush1.msra.mxu0 0.0
        %3226 = vmatprep.subr.mxu0 0.0
        %3227 = vmatpush1.msra.mxu0 0.0
        %3228 = vmatprep.subr.mxu0 0.0
        %3229 = vmatpush1.msra.mxu0 0.0
        %3230 = vmatprep.subr.mxu0 0.0
        %3231 = vmatpush1.msra.mxu0 0.0
        %3232 = vmatprep.subr.mxu0 0.0
        %3233 = vmatpush1.msra.mxu0 0.0
        %3234 = vmatprep.subr.mxu0 0.0
        %3235 = vmatpush1.msra.mxu0 0.0
        %3236 = vmatprep.subr.mxu0 0.0
        %3237 = vmatpush1.msra.mxu0 0.0
        %3238 = vmatprep.subr.mxu0 0.0
        %3239 = vmatpush1.msra.mxu0 0.0
        %3240 = vmatprep.subr.mxu0 0.0
        %3241 = vmatpush1.msra.mxu0 0.0
        %3242 = vmatprep.subr.mxu0 0.0
        %3243 = vmatpush1.msra.mxu0 0.0
        %3244 = vmatprep.subr.mxu0 0.0
        %3245 = vmatpush1.msra.mxu0 0.0
        %3246 = vmatprep.subr.mxu0 0.0
        %3247 = vmatpush1.msra.mxu0 0.0
        %3248 = vmatprep.subr.mxu0 0.0
        %3249 = vmatpush1.msra.mxu0 0.0
        %3250 = vmatprep.subr.mxu0 0.0
        %3251 = vmatpush1.msra.mxu0 0.0
        %3252 = vmatprep.subr.mxu0 0.0
        %3253 = vmatpush1.msra.mxu0 0.0
        %3254 = vmatprep.subr.mxu0 0.0
        %3255 = vmatpush1.msra.mxu0 0.0
        %3256 = vmatprep.mubr.f32.mxu0 0.0
        %3257 = vmatmul.mubr.f32.gmra.mrb[0].mxu0 %v3190
        %v3258 = vpop.f32.mrb[0].mxu0
        %v3259 = vadd.f32 0.0, %v3258
        %v3260 = vpop.f32.mrb[0].mxu0
        %v3261 = vadd.f32 0.0, %v3260
        %3262 = vdwg.mxu0
        %v3263 = vadd.f32 %v2479, %v3259
        %v3264 = vadd.f32 %v2480, %v3261
        %v3265 = vmul.f32 %v3263, %v2518
        %v3266 = vmul.f32 %v3264, %v2519
        %v3267 = vtanh.pop %v3265
        %v3268 = vtanh.pop %v3266
        %v3269 = vmul.f32 %v3267, %v2518
        %v3270 = vmul.f32 %v3268, %v2519
        %v3271 = vadd.f32 %v3269, %v2520
        %v3272 = vadd.f32 %v3270, %v2521
        %3274 = vrot.lane.b32.xlu0 %v3188, 64
        %v3275 = vpop.permute.xlu0 %3274
        %v3277 = vmul.f32 %v3271, %v3275
        %v3278 = vmul.f32 %v3271, %v3272
        %3280 = vrot.lane.b32.xlu0 %v3278, 64
        %v3281 = vpop.permute.xlu0 %3280
        %v3283 = vadd.f32 %v3277, %v3281
        %v3284 = vtanh.pop %v3283
        %v3285 = vmul.f32 %v3272, %v3284
        %v3286 = vsel %vm2631, 6, 1
        %vm3287 = vcmp.gt.s32.totalorder %v2510, %v3286
        %3289 = vrot.lane.b32.xlu0 %v3285, 64
        %v3290 = vpop.permute.xlu0 %3289
        %v3292 = vsel %vm3287, %v3290, %v3183
        %3294 = vrot.lane.b32.xlu0 %v3283, 64
        %v3295 = vpop.permute.xlu0 %3294
        %v3297 = vsel %vm3287, %v3295, %v3188
        %v3299 = vsel %vm911, %v3292, 0
        %3301 = vmatprep.subr.mxu0 %v2523
        %3302 = vmatpush1.msra.mxu0 %v2522
        %3303 = vmatprep.subr.mxu0 %v2525
        %3304 = vmatpush1.msra.mxu0 %v2524
        %3305 = vmatprep.subr.mxu0 %v2527
        %3306 = vmatpush1.msra.mxu0 %v2526
        %3307 = vmatprep.subr.mxu0 %v2529
        %3308 = vmatpush1.msra.mxu0 %v2528
        %3309 = vmatprep.subr.mxu0 %v2531
        %3310 = vmatpush1.msra.mxu0 %v2530
        %3311 = vmatprep.subr.mxu0 %v2533
        %3312 = vmatpush1.msra.mxu0 %v2532
        %3313 = vmatprep.subr.mxu0 %v2535
        %3314 = vmatpush1.msra.mxu0 %v2534
        %3315 = vmatprep.subr.mxu0 %v2537
        %3316 = vmatpush1.msra.mxu0 %v2536
        %3317 = vmatprep.subr.mxu0 0.0
        %3318 = vmatpush1.msra.mxu0 0.0
        %3319 = vmatprep.subr.mxu0 0.0
        %3320 = vmatpush1.msra.mxu0 0.0
        %3321 = vmatprep.subr.mxu0 0.0
        %3322 = vmatpush1.msra.mxu0 0.0
        %3323 = vmatprep.subr.mxu0 0.0
        %3324 = vmatpush1.msra.mxu0 0.0
        %3325 = vmatprep.subr.mxu0 0.0
        %3326 = vmatpush1.msra.mxu0 0.0
        %3327 = vmatprep.subr.mxu0 0.0
        %3328 = vmatpush1.msra.mxu0 0.0
        %3329 = vmatprep.subr.mxu0 0.0
        %3330 = vmatpush1.msra.mxu0 0.0
        %3331 = vmatprep.subr.mxu0 0.0
        %3332 = vmatpush1.msra.mxu0 0.0
        %3333 = vmatprep.subr.mxu0 0.0
        %3334 = vmatpush1.msra.mxu0 0.0
        %3335 = vmatprep.subr.mxu0 0.0
        %3336 = vmatpush1.msra.mxu0 0.0
        %3337 = vmatprep.subr.mxu0 0.0
        %3338 = vmatpush1.msra.mxu0 0.0
        %3339 = vmatprep.subr.mxu0 0.0
        %3340 = vmatpush1.msra.mxu0 0.0
        %3341 = vmatprep.subr.mxu0 0.0
        %3342 = vmatpush1.msra.mxu0 0.0
        %3343 = vmatprep.subr.mxu0 0.0
        %3344 = vmatpush1.msra.mxu0 0.0
        %3345 = vmatprep.subr.mxu0 0.0
        %3346 = vmatpush1.msra.mxu0 0.0
        %3347 = vmatprep.subr.mxu0 0.0
        %3348 = vmatpush1.msra.mxu0 0.0
        %3349 = vmatprep.subr.mxu0 0.0
        %3350 = vmatpush1.msra.mxu0 0.0
        %3351 = vmatprep.subr.mxu0 0.0
        %3352 = vmatpush1.msra.mxu0 0.0
        %3353 = vmatprep.subr.mxu0 0.0
        %3354 = vmatpush1.msra.mxu0 0.0
        %3355 = vmatprep.subr.mxu0 0.0
        %3356 = vmatpush1.msra.mxu0 0.0
        %3357 = vmatprep.subr.mxu0 0.0
        %3358 = vmatpush1.msra.mxu0 0.0
        %3359 = vmatprep.subr.mxu0 0.0
        %3360 = vmatpush1.msra.mxu0 0.0
        %3361 = vmatprep.subr.mxu0 0.0
        %3362 = vmatpush1.msra.mxu0 0.0
        %3363 = vmatprep.subr.mxu0 0.0
        %3364 = vmatpush1.msra.mxu0 0.0
        %3365 = vmatprep.mubr.f32.mxu0 0.0
        %3366 = vmatmul.mubr.f32.gmra.mrb[0].mxu0 %v3299
        %v3367 = vpop.f32.mrb[0].mxu0
        %v3368 = vadd.f32 0.0, %v3367
        %v3369 = vpop.f32.mrb[0].mxu0
        %v3370 = vadd.f32 0.0, %v3369
        %3371 = vdwg.mxu0
        %v3372 = vadd.f32 %v2497, %v3368
        %v3373 = vadd.f32 %v2498, %v3370
        %v3374 = vmul.f32 %v3372, %v2518
        %v3375 = vmul.f32 %v3373, %v2519
        %v3376 = vtanh.pop %v3374
        %v3377 = vtanh.pop %v3375
        %v3378 = vmul.f32 %v3376, %v2518
        %v3379 = vmul.f32 %v3377, %v2519
        %v3380 = vadd.f32 %v3378, %v2520
        %v3381 = vadd.f32 %v3379, %v2521
        %3383 = vrot.lane.b32.xlu0 %v3297, 64
        %v3384 = vpop.permute.xlu0 %3383
        %v3386 = vmul.f32 %v3380, %v3384
        %v3387 = vmul.f32 %v3380, %v3381
        %3389 = vrot.lane.b32.xlu0 %v3387, 64
        %v3390 = vpop.permute.xlu0 %3389
        %v3392 = vadd.f32 %v3386, %v3390
        %v3393 = vtanh.pop %v3392
        %v3394 = vmul.f32 %v3381, %v3393
        %v3395 = vsel %vm2631, 7, 0
        %vm3396 = vcmp.gt.s32.totalorder %v2510, %v3395
        %3398 = vrot.lane.b32.xlu0 %v3394, 64
        %v3399 = vpop.permute.xlu0 %3398
        %v3401 = vsel %vm3396, %v3399, %v3292
        %v3402 = vld [vmem:[%s9] sm:$0xff]
        %v3403 = vld [vmem:[%s9 + $0x8] sm:$0xff]
        %v3404 = vld [vmem:[%s9 + $0x10] sm:$0xff]
        %v3405 = vld [vmem:[%s9 + $0x18] sm:$0xff]
        %v3406 = vld [vmem:[%s9 + $0x20] sm:$0xff]
        %v3407 = vld [vmem:[%s9 + $0x28] sm:$0xff]
        %v3408 = vld [vmem:[%s9 + $0x30] sm:$0xff]
        %v3409 = vld [vmem:[%s9 + $0x38] sm:$0xff]
        %v3410 = vld [vmem:[%s10] sm:$0x1]
        %v3412 = vlaneseq
        %v3413 = vshrl.u32 %v3412, 7
        %v3414 = vsub.s32 0, %v3413
        %v3415 = vrot.slane %v3410, %v3414
        %v3418 = vsel %vm911, %v3401, 0
        %3420 = vmatprep.subr.mxu0 0.0
        %3421 = vmatpush1.msra.mxu0 %v3402
        %3422 = vmatprep.subr.mxu0 0.0
        %3423 = vmatpush1.msra.mxu0 %v3403
        %3424 = vmatprep.subr.mxu0 0.0
        %3425 = vmatpush1.msra.mxu0 %v3404
        %3426 = vmatprep.subr.mxu0 0.0
        %3427 = vmatpush1.msra.mxu0 %v3405
        %3428 = vmatprep.subr.mxu0 0.0
        %3429 = vmatpush1.msra.mxu0 %v3406
        %3430 = vmatprep.subr.mxu0 0.0
        %3431 = vmatpush1.msra.mxu0 %v3407
        %3432 = vmatprep.subr.mxu0 0.0
        %3433 = vmatpush1.msra.mxu0 %v3408
        %3434 = vmatprep.subr.mxu0 0.0
        %3435 = vmatpush1.msra.mxu0 %v3409
        %3436 = vmatprep.subr.mxu0 0.0
        %3437 = vmatpush1.msra.mxu0 0.0
        %3438 = vmatprep.subr.mxu0 0.0
        %3439 = vmatpush1.msra.mxu0 0.0
        %3440 = vmatprep.subr.mxu0 0.0
        %3441 = vmatpush1.msra.mxu0 0.0
        %3442 = vmatprep.subr.mxu0 0.0
        %3443 = vmatpush1.msra.mxu0 0.0
        %3444 = vmatprep.subr.mxu0 0.0
        %3445 = vmatpush1.msra.mxu0 0.0
        %3446 = vmatprep.subr.mxu0 0.0
        %3447 = vmatpush1.msra.mxu0 0.0
        %3448 = vmatprep.subr.mxu0 0.0
        %3449 = vmatpush1.msra.mxu0 0.0
        %3450 = vmatprep.subr.mxu0 0.0
        %3451 = vmatpush1.msra.mxu0 0.0
        %3452 = vmatprep.subr.mxu0 0.0
        %3453 = vmatpush1.msra.mxu0 0.0
        %3454 = vmatprep.subr.mxu0 0.0
        %3455 = vmatpush1.msra.mxu0 0.0
        %3456 = vmatprep.subr.mxu0 0.0
        %3457 = vmatpush1.msra.mxu0 0.0
        %3458 = vmatprep.subr.mxu0 0.0
        %3459 = vmatpush1.msra.mxu0 0.0
        %3460 = vmatprep.subr.mxu0 0.0
        %3461 = vmatpush1.msra.mxu0 0.0
        %3462 = vmatprep.subr.mxu0 0.0
        %3463 = vmatpush1.msra.mxu0 0.0
        %3464 = vmatprep.subr.mxu0 0.0
        %3465 = vmatpush1.msra.mxu0 0.0
        %3466 = vmatprep.subr.mxu0 0.0
        %3467 = vmatpush1.msra.mxu0 0.0
        %3468 = vmatprep.subr.mxu0 0.0
        %3469 = vmatpush1.msra.mxu0 0.0
        %3470 = vmatprep.subr.mxu0 0.0
        %3471 = vmatpush1.msra.mxu0 0.0
        %3472 = vmatprep.subr.mxu0 0.0
        %3473 = vmatpush1.msra.mxu0 0.0
        %3474 = vmatprep.subr.mxu0 0.0
        %3475 = vmatpush1.msra.mxu0 0.0
        %3476 = vmatprep.subr.mxu0 0.0
        %3477 = vmatpush1.msra.mxu0 0.0
        %3478 = vmatprep.subr.mxu0 0.0
        %3479 = vmatpush1.msra.mxu0 0.0
        %3480 = vmatprep.subr.mxu0 0.0
        %3481 = vmatpush1.msra.mxu0 0.0
        %3482 = vmatprep.subr.mxu0 0.0
        %3483 = vmatpush1.msra.mxu0 0.0
        %3484 = vmatprep.mubr.f32.mxu0 0.0
        %3485 = vmatmul.mubr.f32.gmra.mrb[0].mxu0 %v3418
        %v3486 = vpop.f32.mrb[0].mxu0
        %v3487 = vadd.f32 %v3415, %v3486
        %v3488 = vpop.f32.mrb[0].mxu0
        %3489 = vdwg.mxu0
        %vm3490 = vcmask 253952
        %3491 = vst.msk [vmem:[%s362] sm:$0x1] %vm3490, %v3487
        %s3492 = scalar_lea.vmem %s362, 1 [#allocation4]
        %vm3493 = vcmask 254977
        %3494 = vst.msk [vmem:[%s3492 - $0x1] sm:$0x2] %vm3493, %v3487
        %s3495 = sand.u32 %s254, 1
        %s3496 = scalar_lea.sflag [#allocation5], %s3495
        %s3497 = sand.u32 %s254, 1
        %s3498 = smul.addr %s3497, 2
        %s3499 = scalar_lea.vmem [#allocation4], %s3498
        // Predicated region
        $region61: #{tpu_custom_call.1} parent=59 // pred_check
          %p3500 = pneg %p264
        $region62: #{tpu_custom_call.1} parent=59 // pred_check_branch
          %3502 = sbr.rel (%p3500) target = $region64
        $region63: #{tpu_custom_call.1} parent=59 // pred_region
          %s3503 = smul.u32 2, %s31
          %s3505 = ssub.s32 32, 32
          %3506 = vsyncadd %s3496, %s3505
          %s3507 = smul.addr %s3503, 16
          %s3508 = scalar_lea.hbm %s11, %s3507
          %s3509 = sshll.u32 %s3499, 4
          %s3510 = int_to_ptr.vmem [resolvable:$true] %s3509
          %3515 = dma.vmem_to_hbm [thread:$0]  %s3510, 32, %s3508, %s3496, 16, 16, 1
        $region64: #{tpu_custom_call.1} parent=59 // pred_fallthru
          _
      $region60: #{tpu_custom_call.1} parent=5 // pred_fallthru
        _
      %p3516 = scmp.le.s32.totalorder 2, %s26
      // Predicated region
      $region65: #{tpu_custom_call.1} parent=5 // pred_check
        %p3517 = pneg %p3516
      $region66: #{tpu_custom_call.1} parent=5 // pred_check_branch
        %3519 = sbr.rel (%p3517) target = $region68
      $region67: #{tpu_custom_call.1} parent=5 // pred_region
        %s3520 = ssub.s32 %s26, 2
        // Predicated region
        $region69: #{tpu_custom_call.1} parent=67 // pred_check
          %p3521 = pneg %p270
        $region70: #{tpu_custom_call.1} parent=67 // pred_check_branch
          %3523 = sbr.rel (%p3521) target = $region72
        $region71: #{tpu_custom_call.1} parent=67 // pred_region
          %s3524 = sand.u32 %s255, 1
          %s3525 = scalar_lea.sflag [#allocation5], %s3524
          %s3526 = sand.u32 %s255, 1
          %s3527 = smul.addr %s3526, 2
          %s3528 = scalar_lea.vmem [#allocation4], %s3527
          %3529 = dma.done %s3525, 32
        $region72: #{tpu_custom_call.1} parent=67 // pred_fallthru
          _
      $region68: #{tpu_custom_call.1} parent=5 // pred_fallthru
        _
    $region6: #{tpu_custom_call.1} parent=1 // loop_footer
      %s30 = sadd.s32 1, %s26
    $region7: #{tpu_custom_call.1} parent=1 // loop_footer_branch
      %25 = sbr.rel target = $region3
    $region8: #{tpu_custom_call.1} parent=1 // loop_exit
      _
    %3530 = vsyncpa [#allocation5], 1
    %s3531 = scalar_lea.sflag [#allocation5], 1
    %3532 = vsyncpa %s3531, 1

</llo_original>
